<compile_context>
chip_gen: v7x
topology: tpu7x:2x2x1
jax: 0.10.0
libtpu: 0.0.40
codegen_flags: <defaults>
</compile_context>

<pallas_src>
import jax
import jax.numpy as jnp
from jax.experimental import pallas as pl
from jax.experimental.pallas import tpu as pltpu


def _make_gather_kernel(tb: int, max_m: int):
    n_slots = 2 * max_m  # e1 slots [0:max_m), e2 slots [max_m:2*max_m)

    def kernel(pos_ref, hs_ref, mask_ref, w1_ref, w2_ref, b_ref, o_ref,
               buf_ref, sem_ref):
        bb = pl.program_id(0)

        # ---- gather: one row DMA per (example-in-block, marker slot) ----------
        # All copies share one DMA semaphore and are issued before any wait so
        # they are in flight concurrently; every copy moves the same number of
        # bytes, so the start/wait counts stay balanced.
        copies = []
        for j in range(tb):                          # static unroll (tb, max_m small)
            slot_base = (bb * tb + j) * n_slots
            for s in range(n_slots):
                p = pos_ref[slot_base + s]           # flat row index into (B*S, H)
                c = pltpu.make_async_copy(hs_ref.at[p], buf_ref.at[j, s],
                                          sem_ref.at[0])
                c.start()
                copies.append(c)
        for c in copies:
            c.wait()

        # ---- masked entity-start pooling (f32 accumulation) -------------------
        g = buf_ref[...].astype(jnp.float32)         # (tb, 2*max_m, H)
        g = g * mask_ref[...]                        # zero padded / invalid slots
        e1 = jnp.sum(g[:, :max_m, :], axis=1)        # (tb, H)
        e2 = jnp.sum(g[:, max_m:, :], axis=1)        # (tb, H)

        # ---- dropout (eval mode -> identity) + classifier ----------------------
        # cat([e1, e2]) @ W.T + b  ==  e1 @ W.T[:H] + e2 @ W.T[H:] + b
        logits = (jnp.dot(e1, w1_ref[...], preferred_element_type=jnp.float32)
                  + jnp.dot(e2, w2_ref[...], preferred_element_type=jnp.float32)
                  + b_ref[...])                      # (1, Lp) broadcast over batch
        o_ref[...] = logits.astype(o_ref.dtype)

    return kernel


def _marker_slots(input_ids, token_id, max_m):
    """First `max_m` positions of `token_id` per row, plus per-slot validity."""
    _, S = input_ids.shape
    hit = input_ids == token_id
    idx = jnp.arange(S, dtype=jnp.int32)[None, :]
    keyed = jnp.where(hit, idx, jnp.int32(S))             # non-matches -> sentinel S
    pos = jnp.sort(keyed, axis=1)[:, :max_m]               # (B, max_m) first matches
    valid = pos < S                                         # (B, max_m) bool
    pos = jnp.minimum(pos, S - 1).astype(jnp.int32)         # clamp sentinel -> valid row
    return pos, valid


def entity_start_forward(
    input_ids,
    hidden_states,
    weight,
    bias,
    e1_start_token_id: int,
    e2_start_token_id: int,
    *,
    max_markers_per_entity: int = 2,
    batch_block: int | None = None,
):
    """weight: (L, 2H) torch nn.Linear layout; bias: (L,). Returns (B, L) f32 logits."""
    B, S = input_ids.shape
    H = hidden_states.shape[-1]
    L = bias.shape[0]
    Lp = ((L + 127) // 128) * 128            # lane-dense matmul N / output dim
    max_m = max_markers_per_entity
    n_slots = 2 * max_m

    input_ids = input_ids.astype(jnp.int32)

    # ---- wrapper pre-pass over input_ids only (cheap: B*S int32) ---------------
    pos1, val1 = _marker_slots(input_ids, e1_start_token_id, max_m)
    pos2, val2 = _marker_slots(input_ids, e2_start_token_id, max_m)
    row_base = (jnp.arange(B, dtype=jnp.int32) * S)[:, None]
    pos = jnp.concatenate([pos1 + row_base, pos2 + row_base], axis=1)   # (B, 2*max_m)
    valid = jnp.concatenate([val1, val2], axis=1)                       # (B, 2*max_m)

    # ---- batch tiling: tB multiple of 8; bigger tB for big B (fewer grid steps),
    # ---- and >= 2 batch blocks when B allows so both v7x TensorCores get work.
    if batch_block is None:
        tb = 16 if B >= 32 else 8
    else:
        tb = batch_block
    Bp = ((B + tb - 1) // tb) * tb
    pad = Bp - B
    pos = jnp.pad(pos, ((0, pad), (0, 0)))       # padded examples gather row 0 (masked)
    valid = jnp.pad(valid, ((0, pad), (0, 0)))
    pos_flat = pos.reshape(-1)                   # 1-D int32 SMEM (avoids 2-D SMEM padding)
    mask = valid.astype(jnp.float32)[:, :, None]  # (Bp, n_slots, 1) tiny VMEM input

    # classifier: split cat([e1,e2]) @ W.T into two (H, Lp) operands; pad label dim
    wT = weight.astype(jnp.float32).T                    # (2H, L)
    w1 = jnp.pad(wT[:H, :], ((0, 0), (0, Lp - L)))       # (H, Lp) multiplies e1_token
    w2 = jnp.pad(wT[H:, :], ((0, 0), (0, Lp - L)))       # (H, Lp) multiplies e2_token
    b2d = jnp.pad(bias.astype(jnp.float32), (0, Lp - L)).reshape(1, Lp)

    # hidden states stay in HBM in their native dtype; the kernel gathers rows.
    hs_flat = hidden_states.reshape(B * S, H)

    itemsize = jnp.dtype(hidden_states.dtype).itemsize
    cost = pl.CostEstimate(
        flops=4 * Bp * H * Lp + 3 * Bp * n_slots * H,
        transcendentals=0,
        bytes_accessed=(Bp * n_slots * H * itemsize      # gathered marker rows only
                        + Bp * n_slots * 4               # positions
                        + Bp * n_slots * 4               # validity mask
                        + 2 * H * Lp * 4 + Lp * 4        # classifier params
                        + Bp * Lp * 4),                  # logits
    )

    kernel = _make_gather_kernel(tb, max_m)

    out_padded = pl.pallas_call(
        kernel,
        out_shape=jax.ShapeDtypeStruct((Bp, Lp), jnp.float32),
        grid_spec=pltpu.PrefetchScalarGridSpec(
            num_scalar_prefetch=1,                                   # flat row indices
            grid=(Bp // tb,),
            in_specs=[
                pl.BlockSpec(memory_space=pl.ANY),                   # hidden rows (HBM)
                pl.BlockSpec((tb, n_slots, 1), lambda b, sref: (b, 0, 0)),  # validity
                pl.BlockSpec((H, Lp), lambda b, sref: (0, 0)),       # w1
                pl.BlockSpec((H, Lp), lambda b, sref: (0, 0)),       # w2
                pl.BlockSpec((1, Lp), lambda b, sref: (0, 0)),       # bias
            ],
            out_specs=pl.BlockSpec((tb, Lp), lambda b, sref: (b, 0)),
            scratch_shapes=[
                pltpu.VMEM((tb, n_slots, H), hidden_states.dtype),   # gather buffer
                pltpu.SemaphoreType.DMA((1,)),                       # shared DMA sem
            ],
        ),
        compiler_params=pltpu.CompilerParams(
            dimension_semantics=("parallel",),        # independent batch blocks
        ),
        cost_estimate=cost,
    )(pos_flat, hs_flat, mask, w1, w2, b2d)

    return out_padded[:B, :L]


def reference_forward(input_ids, hidden_states, weight, bias, e1_id, e2_id):
    hs = hidden_states.astype(jnp.float32)
    e1_mask = (input_ids == e1_id)[:, :, None]
    e2_mask = (input_ids == e2_id)[:, :, None]
    z = jnp.zeros_like(hs)
    e1_tok = jnp.sum(jnp.where(e1_mask, hs, z), axis=1)
    e2_tok = jnp.sum(jnp.where(e2_mask, hs, z), axis=1)
    cat = jnp.concatenate([e1_tok, e2_tok], axis=1)
    return (jnp.dot(cat, weight.astype(jnp.float32).T,
                    precision=jax.lax.Precision.HIGHEST)
            + bias.astype(jnp.float32))


if __name__ == "__main__":
    # Small deterministic example.  Example 0 has TWO e1-start markers (multi-match
    # sum) and one e2-start marker; example 1 has one e1-start marker and ZERO
    # e2-start markers (empty-sum path).  Batch is padded 2 -> 8 internally, which
    # also exercises the padded/masked gather slots.
    B, S, H, L = 2, 256, 128, 4
    VOCAB = 50
    E1_START_TOKEN_ID = 40
    E2_START_TOKEN_ID = 41

    key = jax.random.PRNGKey(0)
    k_ids, k_hs, k_w, k_b = jax.random.split(key, 4)

    input_ids = jax.random.randint(k_ids, (B, S), 0, VOCAB - 10, dtype=jnp.int32)
    input_ids = input_ids.at[0, 3].set(E1_START_TOKEN_ID)
    input_ids = input_ids.at[0, 130].set(E1_START_TOKEN_ID)
    input_ids = input_ids.at[0, 200].set(E2_START_TOKEN_ID)
    input_ids = input_ids.at[1, 7].set(E1_START_TOKEN_ID)

    # Synthetic "BERT output" hidden states (stand-in for BertModel last_hidden_state)
    hidden_states = jax.random.normal(k_hs, (B, S, H), dtype=jnp.float32)

    # Deterministic classifier params: nn.Linear(2H, L)
    weight = jax.random.normal(k_w, (L, 2 * H), dtype=jnp.float32) * 0.02
    bias = jax.random.normal(k_b, (L,), dtype=jnp.float32) * 0.02

    logits = entity_start_forward(
        input_ids, hidden_states, weight, bias,
        E1_START_TOKEN_ID, E2_START_TOKEN_ID,
        max_markers_per_entity=2,
    )
    logits = jax.block_until_ready(logits)

    ref = reference_forward(
        input_ids, hidden_states, weight, bias,
        E1_START_TOKEN_ID, E2_START_TOKEN_ID,
    )
    assert logits.shape == (B, L)
    # Tolerance covers MXU f32-matmul pass rounding in the classifier; the pooling
    # itself is exact (sums of <= 2 rows in f32).
    err = jnp.max(jnp.abs(logits - ref))
    assert jnp.allclose(logits, ref, atol=1e-2, rtol=1e-2), f"max abs err {err}"

    print("KERNEL_OK")
</pallas_src>

<mosaic_0001>
module attributes {stable_mosaic.version = 11 : i64} {
  func.func @kernel(%arg0: i32, %arg1: memref<32xi32, #tpu.memory_space<smem>>, %arg2: memref<512x128xf32, #tpu.memory_space<any>>, %arg3: memref<8x4x1xf32, #tpu.memory_space<vmem>>, %arg4: memref<128x128xf32, #tpu.memory_space<vmem>>, %arg5: memref<128x128xf32, #tpu.memory_space<vmem>>, %arg6: memref<1x128xf32, #tpu.memory_space<vmem>>, %arg7: memref<8x128xf32, #tpu.memory_space<vmem>>, %arg8: memref<8x4x128xf32, #tpu.memory_space<vmem>>, %arg9: memref<1x!tpu.dma_semaphore, #tpu.memory_space<semaphore_mem>>) attributes {dimension_semantics = [#tpu.dimension_semantics<parallel>], iteration_bounds = array<i64: 1>, scalar_prefetch = 1 : i64, scratch_operands = 2 : i64, tpu.core_type = #tpu.core_type<tc>, window_params = [{}, {transform_indices = @transform_1, window_bounds = array<i64: 8, 4, 1>}, {pipeline_mode = #tpu.pipeline_mode<synchronous>, transform_indices = @transform_2, window_bounds = array<i64: 128, 128>}, {pipeline_mode = #tpu.pipeline_mode<synchronous>, transform_indices = @transform_3, window_bounds = array<i64: 128, 128>}, {pipeline_mode = #tpu.pipeline_mode<synchronous>, transform_indices = @transform_4, window_bounds = array<i64: 1, 128>}, {transform_indices = @transform_5, window_bounds = array<i64: 8, 128>}]} {
    %c8_i32 = arith.constant 8 : i32
    %0 = arith.muli %arg0, %c8_i32 : i32
    %c0_i32 = arith.constant 0 : i32
    %1 = arith.addi %0, %c0_i32 : i32
    %c4_i32 = arith.constant 4 : i32
    %2 = arith.muli %1, %c4_i32 : i32
    %c0_i32_0 = arith.constant 0 : i32
    %3 = arith.addi %2, %c0_i32_0 : i32
    %4 = arith.index_cast %3 : i32 to index
    %5 = memref.load %arg1[%4] : memref<32xi32, #tpu.memory_space<smem>>
    %c0_i32_1 = arith.constant 0 : i32
    %c0_i32_2 = arith.constant 0 : i32
    %c0_i32_3 = arith.constant 0 : i32
    %c0_i32_4 = arith.constant 0 : i32
    %6 = tpu.memref_slice %arg2[%5, %c0_i32_4] : memref<512x128xf32, #tpu.memory_space<any>> -> memref<1x128xf32, #tpu.memory_space<any>>
    %7 = tpu.memref_squeeze %6 : memref<1x128xf32, #tpu.memory_space<any>> -> memref<128xf32, #tpu.memory_space<any>>
    %c0_i32_5 = arith.constant 0 : i32
    %8 = tpu.memref_slice %arg8[%c0_i32_1, %c0_i32_2, %c0_i32_5] : memref<8x4x128xf32, #tpu.memory_space<vmem>> -> memref<1x1x128xf32, #tpu.memory_space<vmem>>
    %9 = tpu.memref_squeeze %8 : memref<1x1x128xf32, #tpu.memory_space<vmem>> -> memref<128xf32, #tpu.memory_space<vmem>>
    %10 = tpu.memref_slice %arg9[%c0_i32_3] : memref<1x!tpu.dma_semaphore, #tpu.memory_space<semaphore_mem>> -> memref<1x!tpu.dma_semaphore, #tpu.memory_space<semaphore_mem>>
    %11 = tpu.memref_squeeze %10 : memref<1x!tpu.dma_semaphore, #tpu.memory_space<semaphore_mem>> -> memref<!tpu.dma_semaphore, #tpu.memory_space<semaphore_mem>>
    tpu.enqueue_dma source(%7 : memref<128xf32, #tpu.memory_space<any>>) target(%9 : memref<128xf32, #tpu.memory_space<vmem>>) target_semaphore(%11 : memref<!tpu.dma_semaphore, #tpu.memory_space<semaphore_mem>>)
    %c1_i32 = arith.constant 1 : i32
    %12 = arith.addi %2, %c1_i32 : i32
    %13 = arith.index_cast %12 : i32 to index
    %14 = memref.load %arg1[%13] : memref<32xi32, #tpu.memory_space<smem>>
    %c0_i32_6 = arith.constant 0 : i32
    %c1_i32_7 = arith.constant 1 : i32
    %c0_i32_8 = arith.constant 0 : i32
    %c0_i32_9 = arith.constant 0 : i32
    %15 = tpu.memref_slice %arg2[%14, %c0_i32_9] : memref<512x128xf32, #tpu.memory_space<any>> -> memref<1x128xf32, #tpu.memory_space<any>>
    %16 = tpu.memref_squeeze %15 : memref<1x128xf32, #tpu.memory_space<any>> -> memref<128xf32, #tpu.memory_space<any>>
    %c0_i32_10 = arith.constant 0 : i32
    %17 = tpu.memref_slice %arg8[%c0_i32_6, %c1_i32_7, %c0_i32_10] : memref<8x4x128xf32, #tpu.memory_space<vmem>> -> memref<1x1x128xf32, #tpu.memory_space<vmem>>
    %18 = tpu.memref_squeeze %17 : memref<1x1x128xf32, #tpu.memory_space<vmem>> -> memref<128xf32, #tpu.memory_space<vmem>>
    %19 = tpu.memref_slice %arg9[%c0_i32_8] : memref<1x!tpu.dma_semaphore, #tpu.memory_space<semaphore_mem>> -> memref<1x!tpu.dma_semaphore, #tpu.memory_space<semaphore_mem>>
    %20 = tpu.memref_squeeze %19 : memref<1x!tpu.dma_semaphore, #tpu.memory_space<semaphore_mem>> -> memref<!tpu.dma_semaphore, #tpu.memory_space<semaphore_mem>>
    tpu.enqueue_dma source(%16 : memref<128xf32, #tpu.memory_space<any>>) target(%18 : memref<128xf32, #tpu.memory_space<vmem>>) target_semaphore(%20 : memref<!tpu.dma_semaphore, #tpu.memory_space<semaphore_mem>>)
    %c2_i32 = arith.constant 2 : i32
    %21 = arith.addi %2, %c2_i32 : i32
    %22 = arith.index_cast %21 : i32 to index
    %23 = memref.load %arg1[%22] : memref<32xi32, #tpu.memory_space<smem>>
    %c0_i32_11 = arith.constant 0 : i32
    %c2_i32_12 = arith.constant 2 : i32
    %c0_i32_13 = arith.constant 0 : i32
    %c0_i32_14 = arith.constant 0 : i32
    %24 = tpu.memref_slice %arg2[%23, %c0_i32_14] : memref<512x128xf32, #tpu.memory_space<any>> -> memref<1x128xf32, #tpu.memory_space<any>>
    %25 = tpu.memref_squeeze %24 : memref<1x128xf32, #tpu.memory_space<any>> -> memref<128xf32, #tpu.memory_space<any>>
    %c0_i32_15 = arith.constant 0 : i32
    %26 = tpu.memref_slice %arg8[%c0_i32_11, %c2_i32_12, %c0_i32_15] : memref<8x4x128xf32, #tpu.memory_space<vmem>> -> memref<1x1x128xf32, #tpu.memory_space<vmem>>
    %27 = tpu.memref_squeeze %26 : memref<1x1x128xf32, #tpu.memory_space<vmem>> -> memref<128xf32, #tpu.memory_space<vmem>>
    %28 = tpu.memref_slice %arg9[%c0_i32_13] : memref<1x!tpu.dma_semaphore, #tpu.memory_space<semaphore_mem>> -> memref<1x!tpu.dma_semaphore, #tpu.memory_space<semaphore_mem>>
    %29 = tpu.memref_squeeze %28 : memref<1x!tpu.dma_semaphore, #tpu.memory_space<semaphore_mem>> -> memref<!tpu.dma_semaphore, #tpu.memory_space<semaphore_mem>>
    tpu.enqueue_dma source(%25 : memref<128xf32, #tpu.memory_space<any>>) target(%27 : memref<128xf32, #tpu.memory_space<vmem>>) target_semaphore(%29 : memref<!tpu.dma_semaphore, #tpu.memory_space<semaphore_mem>>)
    %c3_i32 = arith.constant 3 : i32
    %30 = arith.addi %2, %c3_i32 : i32
    %31 = arith.index_cast %30 : i32 to index
    %32 = memref.load %arg1[%31] : memref<32xi32, #tpu.memory_space<smem>>
    %c0_i32_16 = arith.constant 0 : i32
    %c3_i32_17 = arith.constant 3 : i32
    %c0_i32_18 = arith.constant 0 : i32
    %c0_i32_19 = arith.constant 0 : i32
    %33 = tpu.memref_slice %arg2[%32, %c0_i32_19] : memref<512x128xf32, #tpu.memory_space<any>> -> memref<1x128xf32, #tpu.memory_space<any>>
    %34 = tpu.memref_squeeze %33 : memref<1x128xf32, #tpu.memory_space<any>> -> memref<128xf32, #tpu.memory_space<any>>
    %c0_i32_20 = arith.constant 0 : i32
    %35 = tpu.memref_slice %arg8[%c0_i32_16, %c3_i32_17, %c0_i32_20] : memref<8x4x128xf32, #tpu.memory_space<vmem>> -> memref<1x1x128xf32, #tpu.memory_space<vmem>>
    %36 = tpu.memref_squeeze %35 : memref<1x1x128xf32, #tpu.memory_space<vmem>> -> memref<128xf32, #tpu.memory_space<vmem>>
    %37 = tpu.memref_slice %arg9[%c0_i32_18] : memref<1x!tpu.dma_semaphore, #tpu.memory_space<semaphore_mem>> -> memref<1x!tpu.dma_semaphore, #tpu.memory_space<semaphore_mem>>
    %38 = tpu.memref_squeeze %37 : memref<1x!tpu.dma_semaphore, #tpu.memory_space<semaphore_mem>> -> memref<!tpu.dma_semaphore, #tpu.memory_space<semaphore_mem>>
    tpu.enqueue_dma source(%34 : memref<128xf32, #tpu.memory_space<any>>) target(%36 : memref<128xf32, #tpu.memory_space<vmem>>) target_semaphore(%38 : memref<!tpu.dma_semaphore, #tpu.memory_space<semaphore_mem>>)
    %c8_i32_21 = arith.constant 8 : i32
    %39 = arith.muli %arg0, %c8_i32_21 : i32
    %c1_i32_22 = arith.constant 1 : i32
    %40 = arith.addi %39, %c1_i32_22 : i32
    %c4_i32_23 = arith.constant 4 : i32
    %41 = arith.muli %40, %c4_i32_23 : i32
    %c0_i32_24 = arith.constant 0 : i32
    %42 = arith.addi %41, %c0_i32_24 : i32
    %43 = arith.index_cast %42 : i32 to index
    %44 = memref.load %arg1[%43] : memref<32xi32, #tpu.memory_space<smem>>
    %c1_i32_25 = arith.constant 1 : i32
    %c0_i32_26 = arith.constant 0 : i32
    %c0_i32_27 = arith.constant 0 : i32
    %c0_i32_28 = arith.constant 0 : i32
    %45 = tpu.memref_slice %arg2[%44, %c0_i32_28] : memref<512x128xf32, #tpu.memory_space<any>> -> memref<1x128xf32, #tpu.memory_space<any>>
    %46 = tpu.memref_squeeze %45 : memref<1x128xf32, #tpu.memory_space<any>> -> memref<128xf32, #tpu.memory_space<any>>
    %c0_i32_29 = arith.constant 0 : i32
    %47 = tpu.memref_slice %arg8[%c1_i32_25, %c0_i32_26, %c0_i32_29] : memref<8x4x128xf32, #tpu.memory_space<vmem>> -> memref<1x1x128xf32, #tpu.memory_space<vmem>>
    %48 = tpu.memref_squeeze %47 : memref<1x1x128xf32, #tpu.memory_space<vmem>> -> memref<128xf32, #tpu.memory_space<vmem>>
    %49 = tpu.memref_slice %arg9[%c0_i32_27] : memref<1x!tpu.dma_semaphore, #tpu.memory_space<semaphore_mem>> -> memref<1x!tpu.dma_semaphore, #tpu.memory_space<semaphore_mem>>
    %50 = tpu.memref_squeeze %49 : memref<1x!tpu.dma_semaphore, #tpu.memory_space<semaphore_mem>> -> memref<!tpu.dma_semaphore, #tpu.memory_space<semaphore_mem>>
    tpu.enqueue_dma source(%46 : memref<128xf32, #tpu.memory_space<any>>) target(%48 : memref<128xf32, #tpu.memory_space<vmem>>) target_semaphore(%50 : memref<!tpu.dma_semaphore, #tpu.memory_space<semaphore_mem>>)
    %c1_i32_30 = arith.constant 1 : i32
    %51 = arith.addi %41, %c1_i32_30 : i32
    %52 = arith.index_cast %51 : i32 to index
    %53 = memref.load %arg1[%52] : memref<32xi32, #tpu.memory_space<smem>>
    %c1_i32_31 = arith.constant 1 : i32
    %c1_i32_32 = arith.constant 1 : i32
    %c0_i32_33 = arith.constant 0 : i32
    %c0_i32_34 = arith.constant 0 : i32
    %54 = tpu.memref_slice %arg2[%53, %c0_i32_34] : memref<512x128xf32, #tpu.memory_space<any>> -> memref<1x128xf32, #tpu.memory_space<any>>
    %55 = tpu.memref_squeeze %54 : memref<1x128xf32, #tpu.memory_space<any>> -> memref<128xf32, #tpu.memory_space<any>>
    %c0_i32_35 = arith.constant 0 : i32
    %56 = tpu.memref_slice %arg8[%c1_i32_31, %c1_i32_32, %c0_i32_35] : memref<8x4x128xf32, #tpu.memory_space<vmem>> -> memref<1x1x128xf32, #tpu.memory_space<vmem>>
    %57 = tpu.memref_squeeze %56 : memref<1x1x128xf32, #tpu.memory_space<vmem>> -> memref<128xf32, #tpu.memory_space<vmem>>
    %58 = tpu.memref_slice %arg9[%c0_i32_33] : memref<1x!tpu.dma_semaphore, #tpu.memory_space<semaphore_mem>> -> memref<1x!tpu.dma_semaphore, #tpu.memory_space<semaphore_mem>>
    %59 = tpu.memref_squeeze %58 : memref<1x!tpu.dma_semaphore, #tpu.memory_space<semaphore_mem>> -> memref<!tpu.dma_semaphore, #tpu.memory_space<semaphore_mem>>
    tpu.enqueue_dma source(%55 : memref<128xf32, #tpu.memory_space<any>>) target(%57 : memref<128xf32, #tpu.memory_space<vmem>>) target_semaphore(%59 : memref<!tpu.dma_semaphore, #tpu.memory_space<semaphore_mem>>)
    %c2_i32_36 = arith.constant 2 : i32
    %60 = arith.addi %41, %c2_i32_36 : i32
    %61 = arith.index_cast %60 : i32 to index
    %62 = memref.load %arg1[%61] : memref<32xi32, #tpu.memory_space<smem>>
    %c1_i32_37 = arith.constant 1 : i32
    %c2_i32_38 = arith.constant 2 : i32
    %c0_i32_39 = arith.constant 0 : i32
    %c0_i32_40 = arith.constant 0 : i32
    %63 = tpu.memref_slice %arg2[%62, %c0_i32_40] : memref<512x128xf32, #tpu.memory_space<any>> -> memref<1x128xf32, #tpu.memory_space<any>>
    %64 = tpu.memref_squeeze %63 : memref<1x128xf32, #tpu.memory_space<any>> -> memref<128xf32, #tpu.memory_space<any>>
    %c0_i32_41 = arith.constant 0 : i32
    %65 = tpu.memref_slice %arg8[%c1_i32_37, %c2_i32_38, %c0_i32_41] : memref<8x4x128xf32, #tpu.memory_space<vmem>> -> memref<1x1x128xf32, #tpu.memory_space<vmem>>
    %66 = tpu.memref_squeeze %65 : memref<1x1x128xf32, #tpu.memory_space<vmem>> -> memref<128xf32, #tpu.memory_space<vmem>>
    %67 = tpu.memref_slice %arg9[%c0_i32_39] : memref<1x!tpu.dma_semaphore, #tpu.memory_space<semaphore_mem>> -> memref<1x!tpu.dma_semaphore, #tpu.memory_space<semaphore_mem>>
    %68 = tpu.memref_squeeze %67 : memref<1x!tpu.dma_semaphore, #tpu.memory_space<semaphore_mem>> -> memref<!tpu.dma_semaphore, #tpu.memory_space<semaphore_mem>>
    tpu.enqueue_dma source(%64 : memref<128xf32, #tpu.memory_space<any>>) target(%66 : memref<128xf32, #tpu.memory_space<vmem>>) target_semaphore(%68 : memref<!tpu.dma_semaphore, #tpu.memory_space<semaphore_mem>>)
    %c3_i32_42 = arith.constant 3 : i32
    %69 = arith.addi %41, %c3_i32_42 : i32
    %70 = arith.index_cast %69 : i32 to index
    %71 = memref.load %arg1[%70] : memref<32xi32, #tpu.memory_space<smem>>
    %c1_i32_43 = arith.constant 1 : i32
    %c3_i32_44 = arith.constant 3 : i32
    %c0_i32_45 = arith.constant 0 : i32
    %c0_i32_46 = arith.constant 0 : i32
    %72 = tpu.memref_slice %arg2[%71, %c0_i32_46] : memref<512x128xf32, #tpu.memory_space<any>> -> memref<1x128xf32, #tpu.memory_space<any>>
    %73 = tpu.memref_squeeze %72 : memref<1x128xf32, #tpu.memory_space<any>> -> memref<128xf32, #tpu.memory_space<any>>
    %c0_i32_47 = arith.constant 0 : i32
    %74 = tpu.memref_slice %arg8[%c1_i32_43, %c3_i32_44, %c0_i32_47] : memref<8x4x128xf32, #tpu.memory_space<vmem>> -> memref<1x1x128xf32, #tpu.memory_space<vmem>>
    %75 = tpu.memref_squeeze %74 : memref<1x1x128xf32, #tpu.memory_space<vmem>> -> memref<128xf32, #tpu.memory_space<vmem>>
    %76 = tpu.memref_slice %arg9[%c0_i32_45] : memref<1x!tpu.dma_semaphore, #tpu.memory_space<semaphore_mem>> -> memref<1x!tpu.dma_semaphore, #tpu.memory_space<semaphore_mem>>
    %77 = tpu.memref_squeeze %76 : memref<1x!tpu.dma_semaphore, #tpu.memory_space<semaphore_mem>> -> memref<!tpu.dma_semaphore, #tpu.memory_space<semaphore_mem>>
    tpu.enqueue_dma source(%73 : memref<128xf32, #tpu.memory_space<any>>) target(%75 : memref<128xf32, #tpu.memory_space<vmem>>) target_semaphore(%77 : memref<!tpu.dma_semaphore, #tpu.memory_space<semaphore_mem>>)
    %c8_i32_48 = arith.constant 8 : i32
    %78 = arith.muli %arg0, %c8_i32_48 : i32
    %c2_i32_49 = arith.constant 2 : i32
    %79 = arith.addi %78, %c2_i32_49 : i32
    %c4_i32_50 = arith.constant 4 : i32
    %80 = arith.muli %79, %c4_i32_50 : i32
    %c0_i32_51 = arith.constant 0 : i32
    %81 = arith.addi %80, %c0_i32_51 : i32
    %82 = arith.index_cast %81 : i32 to index
    %83 = memref.load %arg1[%82] : memref<32xi32, #tpu.memory_space<smem>>
    %c2_i32_52 = arith.constant 2 : i32
    %c0_i32_53 = arith.constant 0 : i32
    %c0_i32_54 = arith.constant 0 : i32
    %c0_i32_55 = arith.constant 0 : i32
    %84 = tpu.memref_slice %arg2[%83, %c0_i32_55] : memref<512x128xf32, #tpu.memory_space<any>> -> memref<1x128xf32, #tpu.memory_space<any>>
    %85 = tpu.memref_squeeze %84 : memref<1x128xf32, #tpu.memory_space<any>> -> memref<128xf32, #tpu.memory_space<any>>
    %c0_i32_56 = arith.constant 0 : i32
    %86 = tpu.memref_slice %arg8[%c2_i32_52, %c0_i32_53, %c0_i32_56] : memref<8x4x128xf32, #tpu.memory_space<vmem>> -> memref<1x1x128xf32, #tpu.memory_space<vmem>>
    %87 = tpu.memref_squeeze %86 : memref<1x1x128xf32, #tpu.memory_space<vmem>> -> memref<128xf32, #tpu.memory_space<vmem>>
    %88 = tpu.memref_slice %arg9[%c0_i32_54] : memref<1x!tpu.dma_semaphore, #tpu.memory_space<semaphore_mem>> -> memref<1x!tpu.dma_semaphore, #tpu.memory_space<semaphore_mem>>
    %89 = tpu.memref_squeeze %88 : memref<1x!tpu.dma_semaphore, #tpu.memory_space<semaphore_mem>> -> memref<!tpu.dma_semaphore, #tpu.memory_space<semaphore_mem>>
    tpu.enqueue_dma source(%85 : memref<128xf32, #tpu.memory_space<any>>) target(%87 : memref<128xf32, #tpu.memory_space<vmem>>) target_semaphore(%89 : memref<!tpu.dma_semaphore, #tpu.memory_space<semaphore_mem>>)
    %c1_i32_57 = arith.constant 1 : i32
    %90 = arith.addi %80, %c1_i32_57 : i32
    %91 = arith.index_cast %90 : i32 to index
    %92 = memref.load %arg1[%91] : memref<32xi32, #tpu.memory_space<smem>>
    %c2_i32_58 = arith.constant 2 : i32
    %c1_i32_59 = arith.constant 1 : i32
    %c0_i32_60 = arith.constant 0 : i32
    %c0_i32_61 = arith.constant 0 : i32
    %93 = tpu.memref_slice %arg2[%92, %c0_i32_61] : memref<512x128xf32, #tpu.memory_space<any>> -> memref<1x128xf32, #tpu.memory_space<any>>
    %94 = tpu.memref_squeeze %93 : memref<1x128xf32, #tpu.memory_space<any>> -> memref<128xf32, #tpu.memory_space<any>>
    %c0_i32_62 = arith.constant 0 : i32
    %95 = tpu.memref_slice %arg8[%c2_i32_58, %c1_i32_59, %c0_i32_62] : memref<8x4x128xf32, #tpu.memory_space<vmem>> -> memref<1x1x128xf32, #tpu.memory_space<vmem>>
    %96 = tpu.memref_squeeze %95 : memref<1x1x128xf32, #tpu.memory_space<vmem>> -> memref<128xf32, #tpu.memory_space<vmem>>
    %97 = tpu.memref_slice %arg9[%c0_i32_60] : memref<1x!tpu.dma_semaphore, #tpu.memory_space<semaphore_mem>> -> memref<1x!tpu.dma_semaphore, #tpu.memory_space<semaphore_mem>>
    %98 = tpu.memref_squeeze %97 : memref<1x!tpu.dma_semaphore, #tpu.memory_space<semaphore_mem>> -> memref<!tpu.dma_semaphore, #tpu.memory_space<semaphore_mem>>
    tpu.enqueue_dma source(%94 : memref<128xf32, #tpu.memory_space<any>>) target(%96 : memref<128xf32, #tpu.memory_space<vmem>>) target_semaphore(%98 : memref<!tpu.dma_semaphore, #tpu.memory_space<semaphore_mem>>)
    %c2_i32_63 = arith.constant 2 : i32
    %99 = arith.addi %80, %c2_i32_63 : i32
    %100 = arith.index_cast %99 : i32 to index
    %101 = memref.load %arg1[%100] : memref<32xi32, #tpu.memory_space<smem>>
    %c2_i32_64 = arith.constant 2 : i32
    %c2_i32_65 = arith.constant 2 : i32
    %c0_i32_66 = arith.constant 0 : i32
    %c0_i32_67 = arith.constant 0 : i32
    %102 = tpu.memref_slice %arg2[%101, %c0_i32_67] : memref<512x128xf32, #tpu.memory_space<any>> -> memref<1x128xf32, #tpu.memory_space<any>>
    %103 = tpu.memref_squeeze %102 : memref<1x128xf32, #tpu.memory_space<any>> -> memref<128xf32, #tpu.memory_space<any>>
    %c0_i32_68 = arith.constant 0 : i32
    %104 = tpu.memref_slice %arg8[%c2_i32_64, %c2_i32_65, %c0_i32_68] : memref<8x4x128xf32, #tpu.memory_space<vmem>> -> memref<1x1x128xf32, #tpu.memory_space<vmem>>
    %105 = tpu.memref_squeeze %104 : memref<1x1x128xf32, #tpu.memory_space<vmem>> -> memref<128xf32, #tpu.memory_space<vmem>>
    %106 = tpu.memref_slice %arg9[%c0_i32_66] : memref<1x!tpu.dma_semaphore, #tpu.memory_space<semaphore_mem>> -> memref<1x!tpu.dma_semaphore, #tpu.memory_space<semaphore_mem>>
    %107 = tpu.memref_squeeze %106 : memref<1x!tpu.dma_semaphore, #tpu.memory_space<semaphore_mem>> -> memref<!tpu.dma_semaphore, #tpu.memory_space<semaphore_mem>>
    tpu.enqueue_dma source(%103 : memref<128xf32, #tpu.memory_space<any>>) target(%105 : memref<128xf32, #tpu.memory_space<vmem>>) target_semaphore(%107 : memref<!tpu.dma_semaphore, #tpu.memory_space<semaphore_mem>>)
    %c3_i32_69 = arith.constant 3 : i32
    %108 = arith.addi %80, %c3_i32_69 : i32
    %109 = arith.index_cast %108 : i32 to index
    %110 = memref.load %arg1[%109] : memref<32xi32, #tpu.memory_space<smem>>
    %c2_i32_70 = arith.constant 2 : i32
    %c3_i32_71 = arith.constant 3 : i32
    %c0_i32_72 = arith.constant 0 : i32
    %c0_i32_73 = arith.constant 0 : i32
    %111 = tpu.memref_slice %arg2[%110, %c0_i32_73] : memref<512x128xf32, #tpu.memory_space<any>> -> memref<1x128xf32, #tpu.memory_space<any>>
    %112 = tpu.memref_squeeze %111 : memref<1x128xf32, #tpu.memory_space<any>> -> memref<128xf32, #tpu.memory_space<any>>
    %c0_i32_74 = arith.constant 0 : i32
    %113 = tpu.memref_slice %arg8[%c2_i32_70, %c3_i32_71, %c0_i32_74] : memref<8x4x128xf32, #tpu.memory_space<vmem>> -> memref<1x1x128xf32, #tpu.memory_space<vmem>>
    %114 = tpu.memref_squeeze %113 : memref<1x1x128xf32, #tpu.memory_space<vmem>> -> memref<128xf32, #tpu.memory_space<vmem>>
    %115 = tpu.memref_slice %arg9[%c0_i32_72] : memref<1x!tpu.dma_semaphore, #tpu.memory_space<semaphore_mem>> -> memref<1x!tpu.dma_semaphore, #tpu.memory_space<semaphore_mem>>
    %116 = tpu.memref_squeeze %115 : memref<1x!tpu.dma_semaphore, #tpu.memory_space<semaphore_mem>> -> memref<!tpu.dma_semaphore, #tpu.memory_space<semaphore_mem>>
    tpu.enqueue_dma source(%112 : memref<128xf32, #tpu.memory_space<any>>) target(%114 : memref<128xf32, #tpu.memory_space<vmem>>) target_semaphore(%116 : memref<!tpu.dma_semaphore, #tpu.memory_space<semaphore_mem>>)
    %c8_i32_75 = arith.constant 8 : i32
    %117 = arith.muli %arg0, %c8_i32_75 : i32
    %c3_i32_76 = arith.constant 3 : i32
    %118 = arith.addi %117, %c3_i32_76 : i32
    %c4_i32_77 = arith.constant 4 : i32
    %119 = arith.muli %118, %c4_i32_77 : i32
    %c0_i32_78 = arith.constant 0 : i32
    %120 = arith.addi %119, %c0_i32_78 : i32
    %121 = arith.index_cast %120 : i32 to index
    %122 = memref.load %arg1[%121] : memref<32xi32, #tpu.memory_space<smem>>
    %c3_i32_79 = arith.constant 3 : i32
    %c0_i32_80 = arith.constant 0 : i32
    %c0_i32_81 = arith.constant 0 : i32
    %c0_i32_82 = arith.constant 0 : i32
    %123 = tpu.memref_slice %arg2[%122, %c0_i32_82] : memref<512x128xf32, #tpu.memory_space<any>> -> memref<1x128xf32, #tpu.memory_space<any>>
    %124 = tpu.memref_squeeze %123 : memref<1x128xf32, #tpu.memory_space<any>> -> memref<128xf32, #tpu.memory_space<any>>
    %c0_i32_83 = arith.constant 0 : i32
    %125 = tpu.memref_slice %arg8[%c3_i32_79, %c0_i32_80, %c0_i32_83] : memref<8x4x128xf32, #tpu.memory_space<vmem>> -> memref<1x1x128xf32, #tpu.memory_space<vmem>>
    %126 = tpu.memref_squeeze %125 : memref<1x1x128xf32, #tpu.memory_space<vmem>> -> memref<128xf32, #tpu.memory_space<vmem>>
    %127 = tpu.memref_slice %arg9[%c0_i32_81] : memref<1x!tpu.dma_semaphore, #tpu.memory_space<semaphore_mem>> -> memref<1x!tpu.dma_semaphore, #tpu.memory_space<semaphore_mem>>
    %128 = tpu.memref_squeeze %127 : memref<1x!tpu.dma_semaphore, #tpu.memory_space<semaphore_mem>> -> memref<!tpu.dma_semaphore, #tpu.memory_space<semaphore_mem>>
    tpu.enqueue_dma source(%124 : memref<128xf32, #tpu.memory_space<any>>) target(%126 : memref<128xf32, #tpu.memory_space<vmem>>) target_semaphore(%128 : memref<!tpu.dma_semaphore, #tpu.memory_space<semaphore_mem>>)
    %c1_i32_84 = arith.constant 1 : i32
    %129 = arith.addi %119, %c1_i32_84 : i32
    %130 = arith.index_cast %129 : i32 to index
    %131 = memref.load %arg1[%130] : memref<32xi32, #tpu.memory_space<smem>>
    %c3_i32_85 = arith.constant 3 : i32
    %c1_i32_86 = arith.constant 1 : i32
    %c0_i32_87 = arith.constant 0 : i32
    %c0_i32_88 = arith.constant 0 : i32
    %132 = tpu.memref_slice %arg2[%131, %c0_i32_88] : memref<512x128xf32, #tpu.memory_space<any>> -> memref<1x128xf32, #tpu.memory_space<any>>
    %133 = tpu.memref_squeeze %132 : memref<1x128xf32, #tpu.memory_space<any>> -> memref<128xf32, #tpu.memory_space<any>>
    %c0_i32_89 = arith.constant 0 : i32
    %134 = tpu.memref_slice %arg8[%c3_i32_85, %c1_i32_86, %c0_i32_89] : memref<8x4x128xf32, #tpu.memory_space<vmem>> -> memref<1x1x128xf32, #tpu.memory_space<vmem>>
    %135 = tpu.memref_squeeze %134 : memref<1x1x128xf32, #tpu.memory_space<vmem>> -> memref<128xf32, #tpu.memory_space<vmem>>
    %136 = tpu.memref_slice %arg9[%c0_i32_87] : memref<1x!tpu.dma_semaphore, #tpu.memory_space<semaphore_mem>> -> memref<1x!tpu.dma_semaphore, #tpu.memory_space<semaphore_mem>>
    %137 = tpu.memref_squeeze %136 : memref<1x!tpu.dma_semaphore, #tpu.memory_space<semaphore_mem>> -> memref<!tpu.dma_semaphore, #tpu.memory_space<semaphore_mem>>
    tpu.enqueue_dma source(%133 : memref<128xf32, #tpu.memory_space<any>>) target(%135 : memref<128xf32, #tpu.memory_space<vmem>>) target_semaphore(%137 : memref<!tpu.dma_semaphore, #tpu.memory_space<semaphore_mem>>)
    %c2_i32_90 = arith.constant 2 : i32
    %138 = arith.addi %119, %c2_i32_90 : i32
    %139 = arith.index_cast %138 : i32 to index
    %140 = memref.load %arg1[%139] : memref<32xi32, #tpu.memory_space<smem>>
    %c3_i32_91 = arith.constant 3 : i32
    %c2_i32_92 = arith.constant 2 : i32
    %c0_i32_93 = arith.constant 0 : i32
    %c0_i32_94 = arith.constant 0 : i32
    %141 = tpu.memref_slice %arg2[%140, %c0_i32_94] : memref<512x128xf32, #tpu.memory_space<any>> -> memref<1x128xf32, #tpu.memory_space<any>>
    %142 = tpu.memref_squeeze %141 : memref<1x128xf32, #tpu.memory_space<any>> -> memref<128xf32, #tpu.memory_space<any>>
    %c0_i32_95 = arith.constant 0 : i32
    %143 = tpu.memref_slice %arg8[%c3_i32_91, %c2_i32_92, %c0_i32_95] : memref<8x4x128xf32, #tpu.memory_space<vmem>> -> memref<1x1x128xf32, #tpu.memory_space<vmem>>
    %144 = tpu.memref_squeeze %143 : memref<1x1x128xf32, #tpu.memory_space<vmem>> -> memref<128xf32, #tpu.memory_space<vmem>>
    %145 = tpu.memref_slice %arg9[%c0_i32_93] : memref<1x!tpu.dma_semaphore, #tpu.memory_space<semaphore_mem>> -> memref<1x!tpu.dma_semaphore, #tpu.memory_space<semaphore_mem>>
    %146 = tpu.memref_squeeze %145 : memref<1x!tpu.dma_semaphore, #tpu.memory_space<semaphore_mem>> -> memref<!tpu.dma_semaphore, #tpu.memory_space<semaphore_mem>>
    tpu.enqueue_dma source(%142 : memref<128xf32, #tpu.memory_space<any>>) target(%144 : memref<128xf32, #tpu.memory_space<vmem>>) target_semaphore(%146 : memref<!tpu.dma_semaphore, #tpu.memory_space<semaphore_mem>>)
    %c3_i32_96 = arith.constant 3 : i32
    %147 = arith.addi %119, %c3_i32_96 : i32
    %148 = arith.index_cast %147 : i32 to index
    %149 = memref.load %arg1[%148] : memref<32xi32, #tpu.memory_space<smem>>
    %c3_i32_97 = arith.constant 3 : i32
    %c3_i32_98 = arith.constant 3 : i32
    %c0_i32_99 = arith.constant 0 : i32
    %c0_i32_100 = arith.constant 0 : i32
    %150 = tpu.memref_slice %arg2[%149, %c0_i32_100] : memref<512x128xf32, #tpu.memory_space<any>> -> memref<1x128xf32, #tpu.memory_space<any>>
    %151 = tpu.memref_squeeze %150 : memref<1x128xf32, #tpu.memory_space<any>> -> memref<128xf32, #tpu.memory_space<any>>
    %c0_i32_101 = arith.constant 0 : i32
    %152 = tpu.memref_slice %arg8[%c3_i32_97, %c3_i32_98, %c0_i32_101] : memref<8x4x128xf32, #tpu.memory_space<vmem>> -> memref<1x1x128xf32, #tpu.memory_space<vmem>>
    %153 = tpu.memref_squeeze %152 : memref<1x1x128xf32, #tpu.memory_space<vmem>> -> memref<128xf32, #tpu.memory_space<vmem>>
    %154 = tpu.memref_slice %arg9[%c0_i32_99] : memref<1x!tpu.dma_semaphore, #tpu.memory_space<semaphore_mem>> -> memref<1x!tpu.dma_semaphore, #tpu.memory_space<semaphore_mem>>
    %155 = tpu.memref_squeeze %154 : memref<1x!tpu.dma_semaphore, #tpu.memory_space<semaphore_mem>> -> memref<!tpu.dma_semaphore, #tpu.memory_space<semaphore_mem>>
    tpu.enqueue_dma source(%151 : memref<128xf32, #tpu.memory_space<any>>) target(%153 : memref<128xf32, #tpu.memory_space<vmem>>) target_semaphore(%155 : memref<!tpu.dma_semaphore, #tpu.memory_space<semaphore_mem>>)
    %c8_i32_102 = arith.constant 8 : i32
    %156 = arith.muli %arg0, %c8_i32_102 : i32
    %c4_i32_103 = arith.constant 4 : i32
    %157 = arith.addi %156, %c4_i32_103 : i32
    %c4_i32_104 = arith.constant 4 : i32
    %158 = arith.muli %157, %c4_i32_104 : i32
    %c0_i32_105 = arith.constant 0 : i32
    %159 = arith.addi %158, %c0_i32_105 : i32
    %160 = arith.index_cast %159 : i32 to index
    %161 = memref.load %arg1[%160] : memref<32xi32, #tpu.memory_space<smem>>
    %c4_i32_106 = arith.constant 4 : i32
    %c0_i32_107 = arith.constant 0 : i32
    %c0_i32_108 = arith.constant 0 : i32
    %c0_i32_109 = arith.constant 0 : i32
    %162 = tpu.memref_slice %arg2[%161, %c0_i32_109] : memref<512x128xf32, #tpu.memory_space<any>> -> memref<1x128xf32, #tpu.memory_space<any>>
    %163 = tpu.memref_squeeze %162 : memref<1x128xf32, #tpu.memory_space<any>> -> memref<128xf32, #tpu.memory_space<any>>
    %c0_i32_110 = arith.constant 0 : i32
    %164 = tpu.memref_slice %arg8[%c4_i32_106, %c0_i32_107, %c0_i32_110] : memref<8x4x128xf32, #tpu.memory_space<vmem>> -> memref<1x1x128xf32, #tpu.memory_space<vmem>>
    %165 = tpu.memref_squeeze %164 : memref<1x1x128xf32, #tpu.memory_space<vmem>> -> memref<128xf32, #tpu.memory_space<vmem>>
    %166 = tpu.memref_slice %arg9[%c0_i32_108] : memref<1x!tpu.dma_semaphore, #tpu.memory_space<semaphore_mem>> -> memref<1x!tpu.dma_semaphore, #tpu.memory_space<semaphore_mem>>
    %167 = tpu.memref_squeeze %166 : memref<1x!tpu.dma_semaphore, #tpu.memory_space<semaphore_mem>> -> memref<!tpu.dma_semaphore, #tpu.memory_space<semaphore_mem>>
    tpu.enqueue_dma source(%163 : memref<128xf32, #tpu.memory_space<any>>) target(%165 : memref<128xf32, #tpu.memory_space<vmem>>) target_semaphore(%167 : memref<!tpu.dma_semaphore, #tpu.memory_space<semaphore_mem>>)
    %c1_i32_111 = arith.constant 1 : i32
    %168 = arith.addi %158, %c1_i32_111 : i32
    %169 = arith.index_cast %168 : i32 to index
    %170 = memref.load %arg1[%169] : memref<32xi32, #tpu.memory_space<smem>>
    %c4_i32_112 = arith.constant 4 : i32
    %c1_i32_113 = arith.constant 1 : i32
    %c0_i32_114 = arith.constant 0 : i32
    %c0_i32_115 = arith.constant 0 : i32
    %171 = tpu.memref_slice %arg2[%170, %c0_i32_115] : memref<512x128xf32, #tpu.memory_space<any>> -> memref<1x128xf32, #tpu.memory_space<any>>
    %172 = tpu.memref_squeeze %171 : memref<1x128xf32, #tpu.memory_space<any>> -> memref<128xf32, #tpu.memory_space<any>>
    %c0_i32_116 = arith.constant 0 : i32
    %173 = tpu.memref_slice %arg8[%c4_i32_112, %c1_i32_113, %c0_i32_116] : memref<8x4x128xf32, #tpu.memory_space<vmem>> -> memref<1x1x128xf32, #tpu.memory_space<vmem>>
    %174 = tpu.memref_squeeze %173 : memref<1x1x128xf32, #tpu.memory_space<vmem>> -> memref<128xf32, #tpu.memory_space<vmem>>
    %175 = tpu.memref_slice %arg9[%c0_i32_114] : memref<1x!tpu.dma_semaphore, #tpu.memory_space<semaphore_mem>> -> memref<1x!tpu.dma_semaphore, #tpu.memory_space<semaphore_mem>>
    %176 = tpu.memref_squeeze %175 : memref<1x!tpu.dma_semaphore, #tpu.memory_space<semaphore_mem>> -> memref<!tpu.dma_semaphore, #tpu.memory_space<semaphore_mem>>
    tpu.enqueue_dma source(%172 : memref<128xf32, #tpu.memory_space<any>>) target(%174 : memref<128xf32, #tpu.memory_space<vmem>>) target_semaphore(%176 : memref<!tpu.dma_semaphore, #tpu.memory_space<semaphore_mem>>)
    %c2_i32_117 = arith.constant 2 : i32
    %177 = arith.addi %158, %c2_i32_117 : i32
    %178 = arith.index_cast %177 : i32 to index
    %179 = memref.load %arg1[%178] : memref<32xi32, #tpu.memory_space<smem>>
    %c4_i32_118 = arith.constant 4 : i32
    %c2_i32_119 = arith.constant 2 : i32
    %c0_i32_120 = arith.constant 0 : i32
    %c0_i32_121 = arith.constant 0 : i32
    %180 = tpu.memref_slice %arg2[%179, %c0_i32_121] : memref<512x128xf32, #tpu.memory_space<any>> -> memref<1x128xf32, #tpu.memory_space<any>>
    %181 = tpu.memref_squeeze %180 : memref<1x128xf32, #tpu.memory_space<any>> -> memref<128xf32, #tpu.memory_space<any>>
    %c0_i32_122 = arith.constant 0 : i32
    %182 = tpu.memref_slice %arg8[%c4_i32_118, %c2_i32_119, %c0_i32_122] : memref<8x4x128xf32, #tpu.memory_space<vmem>> -> memref<1x1x128xf32, #tpu.memory_space<vmem>>
    %183 = tpu.memref_squeeze %182 : memref<1x1x128xf32, #tpu.memory_space<vmem>> -> memref<128xf32, #tpu.memory_space<vmem>>
    %184 = tpu.memref_slice %arg9[%c0_i32_120] : memref<1x!tpu.dma_semaphore, #tpu.memory_space<semaphore_mem>> -> memref<1x!tpu.dma_semaphore, #tpu.memory_space<semaphore_mem>>
    %185 = tpu.memref_squeeze %184 : memref<1x!tpu.dma_semaphore, #tpu.memory_space<semaphore_mem>> -> memref<!tpu.dma_semaphore, #tpu.memory_space<semaphore_mem>>
    tpu.enqueue_dma source(%181 : memref<128xf32, #tpu.memory_space<any>>) target(%183 : memref<128xf32, #tpu.memory_space<vmem>>) target_semaphore(%185 : memref<!tpu.dma_semaphore, #tpu.memory_space<semaphore_mem>>)
    %c3_i32_123 = arith.constant 3 : i32
    %186 = arith.addi %158, %c3_i32_123 : i32
    %187 = arith.index_cast %186 : i32 to index
    %188 = memref.load %arg1[%187] : memref<32xi32, #tpu.memory_space<smem>>
    %c4_i32_124 = arith.constant 4 : i32
    %c3_i32_125 = arith.constant 3 : i32
    %c0_i32_126 = arith.constant 0 : i32
    %c0_i32_127 = arith.constant 0 : i32
    %189 = tpu.memref_slice %arg2[%188, %c0_i32_127] : memref<512x128xf32, #tpu.memory_space<any>> -> memref<1x128xf32, #tpu.memory_space<any>>
    %190 = tpu.memref_squeeze %189 : memref<1x128xf32, #tpu.memory_space<any>> -> memref<128xf32, #tpu.memory_space<any>>
    %c0_i32_128 = arith.constant 0 : i32
    %191 = tpu.memref_slice %arg8[%c4_i32_124, %c3_i32_125, %c0_i32_128] : memref<8x4x128xf32, #tpu.memory_space<vmem>> -> memref<1x1x128xf32, #tpu.memory_space<vmem>>
    %192 = tpu.memref_squeeze %191 : memref<1x1x128xf32, #tpu.memory_space<vmem>> -> memref<128xf32, #tpu.memory_space<vmem>>
    %193 = tpu.memref_slice %arg9[%c0_i32_126] : memref<1x!tpu.dma_semaphore, #tpu.memory_space<semaphore_mem>> -> memref<1x!tpu.dma_semaphore, #tpu.memory_space<semaphore_mem>>
    %194 = tpu.memref_squeeze %193 : memref<1x!tpu.dma_semaphore, #tpu.memory_space<semaphore_mem>> -> memref<!tpu.dma_semaphore, #tpu.memory_space<semaphore_mem>>
    tpu.enqueue_dma source(%190 : memref<128xf32, #tpu.memory_space<any>>) target(%192 : memref<128xf32, #tpu.memory_space<vmem>>) target_semaphore(%194 : memref<!tpu.dma_semaphore, #tpu.memory_space<semaphore_mem>>)
    %c8_i32_129 = arith.constant 8 : i32
    %195 = arith.muli %arg0, %c8_i32_129 : i32
    %c5_i32 = arith.constant 5 : i32
    %196 = arith.addi %195, %c5_i32 : i32
    %c4_i32_130 = arith.constant 4 : i32
    %197 = arith.muli %196, %c4_i32_130 : i32
    %c0_i32_131 = arith.constant 0 : i32
    %198 = arith.addi %197, %c0_i32_131 : i32
    %199 = arith.index_cast %198 : i32 to index
    %200 = memref.load %arg1[%199] : memref<32xi32, #tpu.memory_space<smem>>
    %c5_i32_132 = arith.constant 5 : i32
    %c0_i32_133 = arith.constant 0 : i32
    %c0_i32_134 = arith.constant 0 : i32
    %c0_i32_135 = arith.constant 0 : i32
    %201 = tpu.memref_slice %arg2[%200, %c0_i32_135] : memref<512x128xf32, #tpu.memory_space<any>> -> memref<1x128xf32, #tpu.memory_space<any>>
    %202 = tpu.memref_squeeze %201 : memref<1x128xf32, #tpu.memory_space<any>> -> memref<128xf32, #tpu.memory_space<any>>
    %c0_i32_136 = arith.constant 0 : i32
    %203 = tpu.memref_slice %arg8[%c5_i32_132, %c0_i32_133, %c0_i32_136] : memref<8x4x128xf32, #tpu.memory_space<vmem>> -> memref<1x1x128xf32, #tpu.memory_space<vmem>>
    %204 = tpu.memref_squeeze %203 : memref<1x1x128xf32, #tpu.memory_space<vmem>> -> memref<128xf32, #tpu.memory_space<vmem>>
    %205 = tpu.memref_slice %arg9[%c0_i32_134] : memref<1x!tpu.dma_semaphore, #tpu.memory_space<semaphore_mem>> -> memref<1x!tpu.dma_semaphore, #tpu.memory_space<semaphore_mem>>
    %206 = tpu.memref_squeeze %205 : memref<1x!tpu.dma_semaphore, #tpu.memory_space<semaphore_mem>> -> memref<!tpu.dma_semaphore, #tpu.memory_space<semaphore_mem>>
    tpu.enqueue_dma source(%202 : memref<128xf32, #tpu.memory_space<any>>) target(%204 : memref<128xf32, #tpu.memory_space<vmem>>) target_semaphore(%206 : memref<!tpu.dma_semaphore, #tpu.memory_space<semaphore_mem>>)
    %c1_i32_137 = arith.constant 1 : i32
    %207 = arith.addi %197, %c1_i32_137 : i32
    %208 = arith.index_cast %207 : i32 to index
    %209 = memref.load %arg1[%208] : memref<32xi32, #tpu.memory_space<smem>>
    %c5_i32_138 = arith.constant 5 : i32
    %c1_i32_139 = arith.constant 1 : i32
    %c0_i32_140 = arith.constant 0 : i32
    %c0_i32_141 = arith.constant 0 : i32
    %210 = tpu.memref_slice %arg2[%209, %c0_i32_141] : memref<512x128xf32, #tpu.memory_space<any>> -> memref<1x128xf32, #tpu.memory_space<any>>
    %211 = tpu.memref_squeeze %210 : memref<1x128xf32, #tpu.memory_space<any>> -> memref<128xf32, #tpu.memory_space<any>>
    %c0_i32_142 = arith.constant 0 : i32
    %212 = tpu.memref_slice %arg8[%c5_i32_138, %c1_i32_139, %c0_i32_142] : memref<8x4x128xf32, #tpu.memory_space<vmem>> -> memref<1x1x128xf32, #tpu.memory_space<vmem>>
    %213 = tpu.memref_squeeze %212 : memref<1x1x128xf32, #tpu.memory_space<vmem>> -> memref<128xf32, #tpu.memory_space<vmem>>
    %214 = tpu.memref_slice %arg9[%c0_i32_140] : memref<1x!tpu.dma_semaphore, #tpu.memory_space<semaphore_mem>> -> memref<1x!tpu.dma_semaphore, #tpu.memory_space<semaphore_mem>>
    %215 = tpu.memref_squeeze %214 : memref<1x!tpu.dma_semaphore, #tpu.memory_space<semaphore_mem>> -> memref<!tpu.dma_semaphore, #tpu.memory_space<semaphore_mem>>
    tpu.enqueue_dma source(%211 : memref<128xf32, #tpu.memory_space<any>>) target(%213 : memref<128xf32, #tpu.memory_space<vmem>>) target_semaphore(%215 : memref<!tpu.dma_semaphore, #tpu.memory_space<semaphore_mem>>)
    %c2_i32_143 = arith.constant 2 : i32
    %216 = arith.addi %197, %c2_i32_143 : i32
    %217 = arith.index_cast %216 : i32 to index
    %218 = memref.load %arg1[%217] : memref<32xi32, #tpu.memory_space<smem>>
    %c5_i32_144 = arith.constant 5 : i32
    %c2_i32_145 = arith.constant 2 : i32
    %c0_i32_146 = arith.constant 0 : i32
    %c0_i32_147 = arith.constant 0 : i32
    %219 = tpu.memref_slice %arg2[%218, %c0_i32_147] : memref<512x128xf32, #tpu.memory_space<any>> -> memref<1x128xf32, #tpu.memory_space<any>>
    %220 = tpu.memref_squeeze %219 : memref<1x128xf32, #tpu.memory_space<any>> -> memref<128xf32, #tpu.memory_space<any>>
    %c0_i32_148 = arith.constant 0 : i32
    %221 = tpu.memref_slice %arg8[%c5_i32_144, %c2_i32_145, %c0_i32_148] : memref<8x4x128xf32, #tpu.memory_space<vmem>> -> memref<1x1x128xf32, #tpu.memory_space<vmem>>
    %222 = tpu.memref_squeeze %221 : memref<1x1x128xf32, #tpu.memory_space<vmem>> -> memref<128xf32, #tpu.memory_space<vmem>>
    %223 = tpu.memref_slice %arg9[%c0_i32_146] : memref<1x!tpu.dma_semaphore, #tpu.memory_space<semaphore_mem>> -> memref<1x!tpu.dma_semaphore, #tpu.memory_space<semaphore_mem>>
    %224 = tpu.memref_squeeze %223 : memref<1x!tpu.dma_semaphore, #tpu.memory_space<semaphore_mem>> -> memref<!tpu.dma_semaphore, #tpu.memory_space<semaphore_mem>>
    tpu.enqueue_dma source(%220 : memref<128xf32, #tpu.memory_space<any>>) target(%222 : memref<128xf32, #tpu.memory_space<vmem>>) target_semaphore(%224 : memref<!tpu.dma_semaphore, #tpu.memory_space<semaphore_mem>>)
    %c3_i32_149 = arith.constant 3 : i32
    %225 = arith.addi %197, %c3_i32_149 : i32
    %226 = arith.index_cast %225 : i32 to index
    %227 = memref.load %arg1[%226] : memref<32xi32, #tpu.memory_space<smem>>
    %c5_i32_150 = arith.constant 5 : i32
    %c3_i32_151 = arith.constant 3 : i32
    %c0_i32_152 = arith.constant 0 : i32
    %c0_i32_153 = arith.constant 0 : i32
    %228 = tpu.memref_slice %arg2[%227, %c0_i32_153] : memref<512x128xf32, #tpu.memory_space<any>> -> memref<1x128xf32, #tpu.memory_space<any>>
    %229 = tpu.memref_squeeze %228 : memref<1x128xf32, #tpu.memory_space<any>> -> memref<128xf32, #tpu.memory_space<any>>
    %c0_i32_154 = arith.constant 0 : i32
    %230 = tpu.memref_slice %arg8[%c5_i32_150, %c3_i32_151, %c0_i32_154] : memref<8x4x128xf32, #tpu.memory_space<vmem>> -> memref<1x1x128xf32, #tpu.memory_space<vmem>>
    %231 = tpu.memref_squeeze %230 : memref<1x1x128xf32, #tpu.memory_space<vmem>> -> memref<128xf32, #tpu.memory_space<vmem>>
    %232 = tpu.memref_slice %arg9[%c0_i32_152] : memref<1x!tpu.dma_semaphore, #tpu.memory_space<semaphore_mem>> -> memref<1x!tpu.dma_semaphore, #tpu.memory_space<semaphore_mem>>
    %233 = tpu.memref_squeeze %232 : memref<1x!tpu.dma_semaphore, #tpu.memory_space<semaphore_mem>> -> memref<!tpu.dma_semaphore, #tpu.memory_space<semaphore_mem>>
    tpu.enqueue_dma source(%229 : memref<128xf32, #tpu.memory_space<any>>) target(%231 : memref<128xf32, #tpu.memory_space<vmem>>) target_semaphore(%233 : memref<!tpu.dma_semaphore, #tpu.memory_space<semaphore_mem>>)
    %c8_i32_155 = arith.constant 8 : i32
    %234 = arith.muli %arg0, %c8_i32_155 : i32
    %c6_i32 = arith.constant 6 : i32
    %235 = arith.addi %234, %c6_i32 : i32
    %c4_i32_156 = arith.constant 4 : i32
    %236 = arith.muli %235, %c4_i32_156 : i32
    %c0_i32_157 = arith.constant 0 : i32
    %237 = arith.addi %236, %c0_i32_157 : i32
    %238 = arith.index_cast %237 : i32 to index
    %239 = memref.load %arg1[%238] : memref<32xi32, #tpu.memory_space<smem>>
    %c6_i32_158 = arith.constant 6 : i32
    %c0_i32_159 = arith.constant 0 : i32
    %c0_i32_160 = arith.constant 0 : i32
    %c0_i32_161 = arith.constant 0 : i32
    %240 = tpu.memref_slice %arg2[%239, %c0_i32_161] : memref<512x128xf32, #tpu.memory_space<any>> -> memref<1x128xf32, #tpu.memory_space<any>>
    %241 = tpu.memref_squeeze %240 : memref<1x128xf32, #tpu.memory_space<any>> -> memref<128xf32, #tpu.memory_space<any>>
    %c0_i32_162 = arith.constant 0 : i32
    %242 = tpu.memref_slice %arg8[%c6_i32_158, %c0_i32_159, %c0_i32_162] : memref<8x4x128xf32, #tpu.memory_space<vmem>> -> memref<1x1x128xf32, #tpu.memory_space<vmem>>
    %243 = tpu.memref_squeeze %242 : memref<1x1x128xf32, #tpu.memory_space<vmem>> -> memref<128xf32, #tpu.memory_space<vmem>>
    %244 = tpu.memref_slice %arg9[%c0_i32_160] : memref<1x!tpu.dma_semaphore, #tpu.memory_space<semaphore_mem>> -> memref<1x!tpu.dma_semaphore, #tpu.memory_space<semaphore_mem>>
    %245 = tpu.memref_squeeze %244 : memref<1x!tpu.dma_semaphore, #tpu.memory_space<semaphore_mem>> -> memref<!tpu.dma_semaphore, #tpu.memory_space<semaphore_mem>>
    tpu.enqueue_dma source(%241 : memref<128xf32, #tpu.memory_space<any>>) target(%243 : memref<128xf32, #tpu.memory_space<vmem>>) target_semaphore(%245 : memref<!tpu.dma_semaphore, #tpu.memory_space<semaphore_mem>>)
    %c1_i32_163 = arith.constant 1 : i32
    %246 = arith.addi %236, %c1_i32_163 : i32
    %247 = arith.index_cast %246 : i32 to index
    %248 = memref.load %arg1[%247] : memref<32xi32, #tpu.memory_space<smem>>
    %c6_i32_164 = arith.constant 6 : i32
    %c1_i32_165 = arith.constant 1 : i32
    %c0_i32_166 = arith.constant 0 : i32
    %c0_i32_167 = arith.constant 0 : i32
    %249 = tpu.memref_slice %arg2[%248, %c0_i32_167] : memref<512x128xf32, #tpu.memory_space<any>> -> memref<1x128xf32, #tpu.memory_space<any>>
    %250 = tpu.memref_squeeze %249 : memref<1x128xf32, #tpu.memory_space<any>> -> memref<128xf32, #tpu.memory_space<any>>
    %c0_i32_168 = arith.constant 0 : i32
    %251 = tpu.memref_slice %arg8[%c6_i32_164, %c1_i32_165, %c0_i32_168] : memref<8x4x128xf32, #tpu.memory_space<vmem>> -> memref<1x1x128xf32, #tpu.memory_space<vmem>>
    %252 = tpu.memref_squeeze %251 : memref<1x1x128xf32, #tpu.memory_space<vmem>> -> memref<128xf32, #tpu.memory_space<vmem>>
    %253 = tpu.memref_slice %arg9[%c0_i32_166] : memref<1x!tpu.dma_semaphore, #tpu.memory_space<semaphore_mem>> -> memref<1x!tpu.dma_semaphore, #tpu.memory_space<semaphore_mem>>
    %254 = tpu.memref_squeeze %253 : memref<1x!tpu.dma_semaphore, #tpu.memory_space<semaphore_mem>> -> memref<!tpu.dma_semaphore, #tpu.memory_space<semaphore_mem>>
    tpu.enqueue_dma source(%250 : memref<128xf32, #tpu.memory_space<any>>) target(%252 : memref<128xf32, #tpu.memory_space<vmem>>) target_semaphore(%254 : memref<!tpu.dma_semaphore, #tpu.memory_space<semaphore_mem>>)
    %c2_i32_169 = arith.constant 2 : i32
    %255 = arith.addi %236, %c2_i32_169 : i32
    %256 = arith.index_cast %255 : i32 to index
    %257 = memref.load %arg1[%256] : memref<32xi32, #tpu.memory_space<smem>>
    %c6_i32_170 = arith.constant 6 : i32
    %c2_i32_171 = arith.constant 2 : i32
    %c0_i32_172 = arith.constant 0 : i32
    %c0_i32_173 = arith.constant 0 : i32
    %258 = tpu.memref_slice %arg2[%257, %c0_i32_173] : memref<512x128xf32, #tpu.memory_space<any>> -> memref<1x128xf32, #tpu.memory_space<any>>
    %259 = tpu.memref_squeeze %258 : memref<1x128xf32, #tpu.memory_space<any>> -> memref<128xf32, #tpu.memory_space<any>>
    %c0_i32_174 = arith.constant 0 : i32
    %260 = tpu.memref_slice %arg8[%c6_i32_170, %c2_i32_171, %c0_i32_174] : memref<8x4x128xf32, #tpu.memory_space<vmem>> -> memref<1x1x128xf32, #tpu.memory_space<vmem>>
    %261 = tpu.memref_squeeze %260 : memref<1x1x128xf32, #tpu.memory_space<vmem>> -> memref<128xf32, #tpu.memory_space<vmem>>
    %262 = tpu.memref_slice %arg9[%c0_i32_172] : memref<1x!tpu.dma_semaphore, #tpu.memory_space<semaphore_mem>> -> memref<1x!tpu.dma_semaphore, #tpu.memory_space<semaphore_mem>>
    %263 = tpu.memref_squeeze %262 : memref<1x!tpu.dma_semaphore, #tpu.memory_space<semaphore_mem>> -> memref<!tpu.dma_semaphore, #tpu.memory_space<semaphore_mem>>
    tpu.enqueue_dma source(%259 : memref<128xf32, #tpu.memory_space<any>>) target(%261 : memref<128xf32, #tpu.memory_space<vmem>>) target_semaphore(%263 : memref<!tpu.dma_semaphore, #tpu.memory_space<semaphore_mem>>)
    %c3_i32_175 = arith.constant 3 : i32
    %264 = arith.addi %236, %c3_i32_175 : i32
    %265 = arith.index_cast %264 : i32 to index
    %266 = memref.load %arg1[%265] : memref<32xi32, #tpu.memory_space<smem>>
    %c6_i32_176 = arith.constant 6 : i32
    %c3_i32_177 = arith.constant 3 : i32
    %c0_i32_178 = arith.constant 0 : i32
    %c0_i32_179 = arith.constant 0 : i32
    %267 = tpu.memref_slice %arg2[%266, %c0_i32_179] : memref<512x128xf32, #tpu.memory_space<any>> -> memref<1x128xf32, #tpu.memory_space<any>>
    %268 = tpu.memref_squeeze %267 : memref<1x128xf32, #tpu.memory_space<any>> -> memref<128xf32, #tpu.memory_space<any>>
    %c0_i32_180 = arith.constant 0 : i32
    %269 = tpu.memref_slice %arg8[%c6_i32_176, %c3_i32_177, %c0_i32_180] : memref<8x4x128xf32, #tpu.memory_space<vmem>> -> memref<1x1x128xf32, #tpu.memory_space<vmem>>
    %270 = tpu.memref_squeeze %269 : memref<1x1x128xf32, #tpu.memory_space<vmem>> -> memref<128xf32, #tpu.memory_space<vmem>>
    %271 = tpu.memref_slice %arg9[%c0_i32_178] : memref<1x!tpu.dma_semaphore, #tpu.memory_space<semaphore_mem>> -> memref<1x!tpu.dma_semaphore, #tpu.memory_space<semaphore_mem>>
    %272 = tpu.memref_squeeze %271 : memref<1x!tpu.dma_semaphore, #tpu.memory_space<semaphore_mem>> -> memref<!tpu.dma_semaphore, #tpu.memory_space<semaphore_mem>>
    tpu.enqueue_dma source(%268 : memref<128xf32, #tpu.memory_space<any>>) target(%270 : memref<128xf32, #tpu.memory_space<vmem>>) target_semaphore(%272 : memref<!tpu.dma_semaphore, #tpu.memory_space<semaphore_mem>>)
    %c8_i32_181 = arith.constant 8 : i32
    %273 = arith.muli %arg0, %c8_i32_181 : i32
    %c7_i32 = arith.constant 7 : i32
    %274 = arith.addi %273, %c7_i32 : i32
    %c4_i32_182 = arith.constant 4 : i32
    %275 = arith.muli %274, %c4_i32_182 : i32
    %c0_i32_183 = arith.constant 0 : i32
    %276 = arith.addi %275, %c0_i32_183 : i32
    %277 = arith.index_cast %276 : i32 to index
    %278 = memref.load %arg1[%277] : memref<32xi32, #tpu.memory_space<smem>>
    %c7_i32_184 = arith.constant 7 : i32
    %c0_i32_185 = arith.constant 0 : i32
    %c0_i32_186 = arith.constant 0 : i32
    %c0_i32_187 = arith.constant 0 : i32
    %279 = tpu.memref_slice %arg2[%278, %c0_i32_187] : memref<512x128xf32, #tpu.memory_space<any>> -> memref<1x128xf32, #tpu.memory_space<any>>
    %280 = tpu.memref_squeeze %279 : memref<1x128xf32, #tpu.memory_space<any>> -> memref<128xf32, #tpu.memory_space<any>>
    %c0_i32_188 = arith.constant 0 : i32
    %281 = tpu.memref_slice %arg8[%c7_i32_184, %c0_i32_185, %c0_i32_188] : memref<8x4x128xf32, #tpu.memory_space<vmem>> -> memref<1x1x128xf32, #tpu.memory_space<vmem>>
    %282 = tpu.memref_squeeze %281 : memref<1x1x128xf32, #tpu.memory_space<vmem>> -> memref<128xf32, #tpu.memory_space<vmem>>
    %283 = tpu.memref_slice %arg9[%c0_i32_186] : memref<1x!tpu.dma_semaphore, #tpu.memory_space<semaphore_mem>> -> memref<1x!tpu.dma_semaphore, #tpu.memory_space<semaphore_mem>>
    %284 = tpu.memref_squeeze %283 : memref<1x!tpu.dma_semaphore, #tpu.memory_space<semaphore_mem>> -> memref<!tpu.dma_semaphore, #tpu.memory_space<semaphore_mem>>
    tpu.enqueue_dma source(%280 : memref<128xf32, #tpu.memory_space<any>>) target(%282 : memref<128xf32, #tpu.memory_space<vmem>>) target_semaphore(%284 : memref<!tpu.dma_semaphore, #tpu.memory_space<semaphore_mem>>)
    %c1_i32_189 = arith.constant 1 : i32
    %285 = arith.addi %275, %c1_i32_189 : i32
    %286 = arith.index_cast %285 : i32 to index
    %287 = memref.load %arg1[%286] : memref<32xi32, #tpu.memory_space<smem>>
    %c7_i32_190 = arith.constant 7 : i32
    %c1_i32_191 = arith.constant 1 : i32
    %c0_i32_192 = arith.constant 0 : i32
    %c0_i32_193 = arith.constant 0 : i32
    %288 = tpu.memref_slice %arg2[%287, %c0_i32_193] : memref<512x128xf32, #tpu.memory_space<any>> -> memref<1x128xf32, #tpu.memory_space<any>>
    %289 = tpu.memref_squeeze %288 : memref<1x128xf32, #tpu.memory_space<any>> -> memref<128xf32, #tpu.memory_space<any>>
    %c0_i32_194 = arith.constant 0 : i32
    %290 = tpu.memref_slice %arg8[%c7_i32_190, %c1_i32_191, %c0_i32_194] : memref<8x4x128xf32, #tpu.memory_space<vmem>> -> memref<1x1x128xf32, #tpu.memory_space<vmem>>
    %291 = tpu.memref_squeeze %290 : memref<1x1x128xf32, #tpu.memory_space<vmem>> -> memref<128xf32, #tpu.memory_space<vmem>>
    %292 = tpu.memref_slice %arg9[%c0_i32_192] : memref<1x!tpu.dma_semaphore, #tpu.memory_space<semaphore_mem>> -> memref<1x!tpu.dma_semaphore, #tpu.memory_space<semaphore_mem>>
    %293 = tpu.memref_squeeze %292 : memref<1x!tpu.dma_semaphore, #tpu.memory_space<semaphore_mem>> -> memref<!tpu.dma_semaphore, #tpu.memory_space<semaphore_mem>>
    tpu.enqueue_dma source(%289 : memref<128xf32, #tpu.memory_space<any>>) target(%291 : memref<128xf32, #tpu.memory_space<vmem>>) target_semaphore(%293 : memref<!tpu.dma_semaphore, #tpu.memory_space<semaphore_mem>>)
    %c2_i32_195 = arith.constant 2 : i32
    %294 = arith.addi %275, %c2_i32_195 : i32
    %295 = arith.index_cast %294 : i32 to index
    %296 = memref.load %arg1[%295] : memref<32xi32, #tpu.memory_space<smem>>
    %c7_i32_196 = arith.constant 7 : i32
    %c2_i32_197 = arith.constant 2 : i32
    %c0_i32_198 = arith.constant 0 : i32
    %c0_i32_199 = arith.constant 0 : i32
    %297 = tpu.memref_slice %arg2[%296, %c0_i32_199] : memref<512x128xf32, #tpu.memory_space<any>> -> memref<1x128xf32, #tpu.memory_space<any>>
    %298 = tpu.memref_squeeze %297 : memref<1x128xf32, #tpu.memory_space<any>> -> memref<128xf32, #tpu.memory_space<any>>
    %c0_i32_200 = arith.constant 0 : i32
    %299 = tpu.memref_slice %arg8[%c7_i32_196, %c2_i32_197, %c0_i32_200] : memref<8x4x128xf32, #tpu.memory_space<vmem>> -> memref<1x1x128xf32, #tpu.memory_space<vmem>>
    %300 = tpu.memref_squeeze %299 : memref<1x1x128xf32, #tpu.memory_space<vmem>> -> memref<128xf32, #tpu.memory_space<vmem>>
    %301 = tpu.memref_slice %arg9[%c0_i32_198] : memref<1x!tpu.dma_semaphore, #tpu.memory_space<semaphore_mem>> -> memref<1x!tpu.dma_semaphore, #tpu.memory_space<semaphore_mem>>
    %302 = tpu.memref_squeeze %301 : memref<1x!tpu.dma_semaphore, #tpu.memory_space<semaphore_mem>> -> memref<!tpu.dma_semaphore, #tpu.memory_space<semaphore_mem>>
    tpu.enqueue_dma source(%298 : memref<128xf32, #tpu.memory_space<any>>) target(%300 : memref<128xf32, #tpu.memory_space<vmem>>) target_semaphore(%302 : memref<!tpu.dma_semaphore, #tpu.memory_space<semaphore_mem>>)
    %c3_i32_201 = arith.constant 3 : i32
    %303 = arith.addi %275, %c3_i32_201 : i32
    %304 = arith.index_cast %303 : i32 to index
    %305 = memref.load %arg1[%304] : memref<32xi32, #tpu.memory_space<smem>>
    %c7_i32_202 = arith.constant 7 : i32
    %c3_i32_203 = arith.constant 3 : i32
    %c0_i32_204 = arith.constant 0 : i32
    %c0_i32_205 = arith.constant 0 : i32
    %306 = tpu.memref_slice %arg2[%305, %c0_i32_205] : memref<512x128xf32, #tpu.memory_space<any>> -> memref<1x128xf32, #tpu.memory_space<any>>
    %307 = tpu.memref_squeeze %306 : memref<1x128xf32, #tpu.memory_space<any>> -> memref<128xf32, #tpu.memory_space<any>>
    %c0_i32_206 = arith.constant 0 : i32
    %308 = tpu.memref_slice %arg8[%c7_i32_202, %c3_i32_203, %c0_i32_206] : memref<8x4x128xf32, #tpu.memory_space<vmem>> -> memref<1x1x128xf32, #tpu.memory_space<vmem>>
    %309 = tpu.memref_squeeze %308 : memref<1x1x128xf32, #tpu.memory_space<vmem>> -> memref<128xf32, #tpu.memory_space<vmem>>
    %310 = tpu.memref_slice %arg9[%c0_i32_204] : memref<1x!tpu.dma_semaphore, #tpu.memory_space<semaphore_mem>> -> memref<1x!tpu.dma_semaphore, #tpu.memory_space<semaphore_mem>>
    %311 = tpu.memref_squeeze %310 : memref<1x!tpu.dma_semaphore, #tpu.memory_space<semaphore_mem>> -> memref<!tpu.dma_semaphore, #tpu.memory_space<semaphore_mem>>
    tpu.enqueue_dma source(%307 : memref<128xf32, #tpu.memory_space<any>>) target(%309 : memref<128xf32, #tpu.memory_space<vmem>>) target_semaphore(%311 : memref<!tpu.dma_semaphore, #tpu.memory_space<semaphore_mem>>)
    %c0_i32_207 = arith.constant 0 : i32
    %c0_i32_208 = arith.constant 0 : i32
    %c0_i32_209 = arith.constant 0 : i32
    %c0_i32_210 = arith.constant 0 : i32
    %312 = tpu.memref_slice %arg2[%5, %c0_i32_210] : memref<512x128xf32, #tpu.memory_space<any>> -> memref<1x128xf32, #tpu.memory_space<any>>
    %313 = tpu.memref_squeeze %312 : memref<1x128xf32, #tpu.memory_space<any>> -> memref<128xf32, #tpu.memory_space<any>>
    %c0_i32_211 = arith.constant 0 : i32
    %314 = tpu.memref_slice %arg8[%c0_i32_207, %c0_i32_208, %c0_i32_211] : memref<8x4x128xf32, #tpu.memory_space<vmem>> -> memref<1x1x128xf32, #tpu.memory_space<vmem>>
    %315 = tpu.memref_squeeze %314 : memref<1x1x128xf32, #tpu.memory_space<vmem>> -> memref<128xf32, #tpu.memory_space<vmem>>
    %316 = tpu.memref_slice %arg9[%c0_i32_209] : memref<1x!tpu.dma_semaphore, #tpu.memory_space<semaphore_mem>> -> memref<1x!tpu.dma_semaphore, #tpu.memory_space<semaphore_mem>>
    %317 = tpu.memref_squeeze %316 : memref<1x!tpu.dma_semaphore, #tpu.memory_space<semaphore_mem>> -> memref<!tpu.dma_semaphore, #tpu.memory_space<semaphore_mem>>
    tpu.wait_dma2 semaphore(%317 : memref<!tpu.dma_semaphore, #tpu.memory_space<semaphore_mem>>) src(%313 : memref<128xf32, #tpu.memory_space<any>>) dst(%315 : memref<128xf32, #tpu.memory_space<vmem>>)
    %c0_i32_212 = arith.constant 0 : i32
    %c1_i32_213 = arith.constant 1 : i32
    %c0_i32_214 = arith.constant 0 : i32
    %c0_i32_215 = arith.constant 0 : i32
    %318 = tpu.memref_slice %arg2[%14, %c0_i32_215] : memref<512x128xf32, #tpu.memory_space<any>> -> memref<1x128xf32, #tpu.memory_space<any>>
    %319 = tpu.memref_squeeze %318 : memref<1x128xf32, #tpu.memory_space<any>> -> memref<128xf32, #tpu.memory_space<any>>
    %c0_i32_216 = arith.constant 0 : i32
    %320 = tpu.memref_slice %arg8[%c0_i32_212, %c1_i32_213, %c0_i32_216] : memref<8x4x128xf32, #tpu.memory_space<vmem>> -> memref<1x1x128xf32, #tpu.memory_space<vmem>>
    %321 = tpu.memref_squeeze %320 : memref<1x1x128xf32, #tpu.memory_space<vmem>> -> memref<128xf32, #tpu.memory_space<vmem>>
    %322 = tpu.memref_slice %arg9[%c0_i32_214] : memref<1x!tpu.dma_semaphore, #tpu.memory_space<semaphore_mem>> -> memref<1x!tpu.dma_semaphore, #tpu.memory_space<semaphore_mem>>
    %323 = tpu.memref_squeeze %322 : memref<1x!tpu.dma_semaphore, #tpu.memory_space<semaphore_mem>> -> memref<!tpu.dma_semaphore, #tpu.memory_space<semaphore_mem>>
    tpu.wait_dma2 semaphore(%323 : memref<!tpu.dma_semaphore, #tpu.memory_space<semaphore_mem>>) src(%319 : memref<128xf32, #tpu.memory_space<any>>) dst(%321 : memref<128xf32, #tpu.memory_space<vmem>>)
    %c0_i32_217 = arith.constant 0 : i32
    %c2_i32_218 = arith.constant 2 : i32
    %c0_i32_219 = arith.constant 0 : i32
    %c0_i32_220 = arith.constant 0 : i32
    %324 = tpu.memref_slice %arg2[%23, %c0_i32_220] : memref<512x128xf32, #tpu.memory_space<any>> -> memref<1x128xf32, #tpu.memory_space<any>>
    %325 = tpu.memref_squeeze %324 : memref<1x128xf32, #tpu.memory_space<any>> -> memref<128xf32, #tpu.memory_space<any>>
    %c0_i32_221 = arith.constant 0 : i32
    %326 = tpu.memref_slice %arg8[%c0_i32_217, %c2_i32_218, %c0_i32_221] : memref<8x4x128xf32, #tpu.memory_space<vmem>> -> memref<1x1x128xf32, #tpu.memory_space<vmem>>
    %327 = tpu.memref_squeeze %326 : memref<1x1x128xf32, #tpu.memory_space<vmem>> -> memref<128xf32, #tpu.memory_space<vmem>>
    %328 = tpu.memref_slice %arg9[%c0_i32_219] : memref<1x!tpu.dma_semaphore, #tpu.memory_space<semaphore_mem>> -> memref<1x!tpu.dma_semaphore, #tpu.memory_space<semaphore_mem>>
    %329 = tpu.memref_squeeze %328 : memref<1x!tpu.dma_semaphore, #tpu.memory_space<semaphore_mem>> -> memref<!tpu.dma_semaphore, #tpu.memory_space<semaphore_mem>>
    tpu.wait_dma2 semaphore(%329 : memref<!tpu.dma_semaphore, #tpu.memory_space<semaphore_mem>>) src(%325 : memref<128xf32, #tpu.memory_space<any>>) dst(%327 : memref<128xf32, #tpu.memory_space<vmem>>)
    %c0_i32_222 = arith.constant 0 : i32
    %c3_i32_223 = arith.constant 3 : i32
    %c0_i32_224 = arith.constant 0 : i32
    %c0_i32_225 = arith.constant 0 : i32
    %330 = tpu.memref_slice %arg2[%32, %c0_i32_225] : memref<512x128xf32, #tpu.memory_space<any>> -> memref<1x128xf32, #tpu.memory_space<any>>
    %331 = tpu.memref_squeeze %330 : memref<1x128xf32, #tpu.memory_space<any>> -> memref<128xf32, #tpu.memory_space<any>>
    %c0_i32_226 = arith.constant 0 : i32
    %332 = tpu.memref_slice %arg8[%c0_i32_222, %c3_i32_223, %c0_i32_226] : memref<8x4x128xf32, #tpu.memory_space<vmem>> -> memref<1x1x128xf32, #tpu.memory_space<vmem>>
    %333 = tpu.memref_squeeze %332 : memref<1x1x128xf32, #tpu.memory_space<vmem>> -> memref<128xf32, #tpu.memory_space<vmem>>
    %334 = tpu.memref_slice %arg9[%c0_i32_224] : memref<1x!tpu.dma_semaphore, #tpu.memory_space<semaphore_mem>> -> memref<1x!tpu.dma_semaphore, #tpu.memory_space<semaphore_mem>>
    %335 = tpu.memref_squeeze %334 : memref<1x!tpu.dma_semaphore, #tpu.memory_space<semaphore_mem>> -> memref<!tpu.dma_semaphore, #tpu.memory_space<semaphore_mem>>
    tpu.wait_dma2 semaphore(%335 : memref<!tpu.dma_semaphore, #tpu.memory_space<semaphore_mem>>) src(%331 : memref<128xf32, #tpu.memory_space<any>>) dst(%333 : memref<128xf32, #tpu.memory_space<vmem>>)
    %c1_i32_227 = arith.constant 1 : i32
    %c0_i32_228 = arith.constant 0 : i32
    %c0_i32_229 = arith.constant 0 : i32
    %c0_i32_230 = arith.constant 0 : i32
    %336 = tpu.memref_slice %arg2[%44, %c0_i32_230] : memref<512x128xf32, #tpu.memory_space<any>> -> memref<1x128xf32, #tpu.memory_space<any>>
    %337 = tpu.memref_squeeze %336 : memref<1x128xf32, #tpu.memory_space<any>> -> memref<128xf32, #tpu.memory_space<any>>
    %c0_i32_231 = arith.constant 0 : i32
    %338 = tpu.memref_slice %arg8[%c1_i32_227, %c0_i32_228, %c0_i32_231] : memref<8x4x128xf32, #tpu.memory_space<vmem>> -> memref<1x1x128xf32, #tpu.memory_space<vmem>>
    %339 = tpu.memref_squeeze %338 : memref<1x1x128xf32, #tpu.memory_space<vmem>> -> memref<128xf32, #tpu.memory_space<vmem>>
    %340 = tpu.memref_slice %arg9[%c0_i32_229] : memref<1x!tpu.dma_semaphore, #tpu.memory_space<semaphore_mem>> -> memref<1x!tpu.dma_semaphore, #tpu.memory_space<semaphore_mem>>
    %341 = tpu.memref_squeeze %340 : memref<1x!tpu.dma_semaphore, #tpu.memory_space<semaphore_mem>> -> memref<!tpu.dma_semaphore, #tpu.memory_space<semaphore_mem>>
    tpu.wait_dma2 semaphore(%341 : memref<!tpu.dma_semaphore, #tpu.memory_space<semaphore_mem>>) src(%337 : memref<128xf32, #tpu.memory_space<any>>) dst(%339 : memref<128xf32, #tpu.memory_space<vmem>>)
    %c1_i32_232 = arith.constant 1 : i32
    %c1_i32_233 = arith.constant 1 : i32
    %c0_i32_234 = arith.constant 0 : i32
    %c0_i32_235 = arith.constant 0 : i32
    %342 = tpu.memref_slice %arg2[%53, %c0_i32_235] : memref<512x128xf32, #tpu.memory_space<any>> -> memref<1x128xf32, #tpu.memory_space<any>>
    %343 = tpu.memref_squeeze %342 : memref<1x128xf32, #tpu.memory_space<any>> -> memref<128xf32, #tpu.memory_space<any>>
    %c0_i32_236 = arith.constant 0 : i32
    %344 = tpu.memref_slice %arg8[%c1_i32_232, %c1_i32_233, %c0_i32_236] : memref<8x4x128xf32, #tpu.memory_space<vmem>> -> memref<1x1x128xf32, #tpu.memory_space<vmem>>
    %345 = tpu.memref_squeeze %344 : memref<1x1x128xf32, #tpu.memory_space<vmem>> -> memref<128xf32, #tpu.memory_space<vmem>>
    %346 = tpu.memref_slice %arg9[%c0_i32_234] : memref<1x!tpu.dma_semaphore, #tpu.memory_space<semaphore_mem>> -> memref<1x!tpu.dma_semaphore, #tpu.memory_space<semaphore_mem>>
    %347 = tpu.memref_squeeze %346 : memref<1x!tpu.dma_semaphore, #tpu.memory_space<semaphore_mem>> -> memref<!tpu.dma_semaphore, #tpu.memory_space<semaphore_mem>>
    tpu.wait_dma2 semaphore(%347 : memref<!tpu.dma_semaphore, #tpu.memory_space<semaphore_mem>>) src(%343 : memref<128xf32, #tpu.memory_space<any>>) dst(%345 : memref<128xf32, #tpu.memory_space<vmem>>)
    %c1_i32_237 = arith.constant 1 : i32
    %c2_i32_238 = arith.constant 2 : i32
    %c0_i32_239 = arith.constant 0 : i32
    %c0_i32_240 = arith.constant 0 : i32
    %348 = tpu.memref_slice %arg2[%62, %c0_i32_240] : memref<512x128xf32, #tpu.memory_space<any>> -> memref<1x128xf32, #tpu.memory_space<any>>
    %349 = tpu.memref_squeeze %348 : memref<1x128xf32, #tpu.memory_space<any>> -> memref<128xf32, #tpu.memory_space<any>>
    %c0_i32_241 = arith.constant 0 : i32
    %350 = tpu.memref_slice %arg8[%c1_i32_237, %c2_i32_238, %c0_i32_241] : memref<8x4x128xf32, #tpu.memory_space<vmem>> -> memref<1x1x128xf32, #tpu.memory_space<vmem>>
    %351 = tpu.memref_squeeze %350 : memref<1x1x128xf32, #tpu.memory_space<vmem>> -> memref<128xf32, #tpu.memory_space<vmem>>
    %352 = tpu.memref_slice %arg9[%c0_i32_239] : memref<1x!tpu.dma_semaphore, #tpu.memory_space<semaphore_mem>> -> memref<1x!tpu.dma_semaphore, #tpu.memory_space<semaphore_mem>>
    %353 = tpu.memref_squeeze %352 : memref<1x!tpu.dma_semaphore, #tpu.memory_space<semaphore_mem>> -> memref<!tpu.dma_semaphore, #tpu.memory_space<semaphore_mem>>
    tpu.wait_dma2 semaphore(%353 : memref<!tpu.dma_semaphore, #tpu.memory_space<semaphore_mem>>) src(%349 : memref<128xf32, #tpu.memory_space<any>>) dst(%351 : memref<128xf32, #tpu.memory_space<vmem>>)
    %c1_i32_242 = arith.constant 1 : i32
    %c3_i32_243 = arith.constant 3 : i32
    %c0_i32_244 = arith.constant 0 : i32
    %c0_i32_245 = arith.constant 0 : i32
    %354 = tpu.memref_slice %arg2[%71, %c0_i32_245] : memref<512x128xf32, #tpu.memory_space<any>> -> memref<1x128xf32, #tpu.memory_space<any>>
    %355 = tpu.memref_squeeze %354 : memref<1x128xf32, #tpu.memory_space<any>> -> memref<128xf32, #tpu.memory_space<any>>
    %c0_i32_246 = arith.constant 0 : i32
    %356 = tpu.memref_slice %arg8[%c1_i32_242, %c3_i32_243, %c0_i32_246] : memref<8x4x128xf32, #tpu.memory_space<vmem>> -> memref<1x1x128xf32, #tpu.memory_space<vmem>>
    %357 = tpu.memref_squeeze %356 : memref<1x1x128xf32, #tpu.memory_space<vmem>> -> memref<128xf32, #tpu.memory_space<vmem>>
    %358 = tpu.memref_slice %arg9[%c0_i32_244] : memref<1x!tpu.dma_semaphore, #tpu.memory_space<semaphore_mem>> -> memref<1x!tpu.dma_semaphore, #tpu.memory_space<semaphore_mem>>
    %359 = tpu.memref_squeeze %358 : memref<1x!tpu.dma_semaphore, #tpu.memory_space<semaphore_mem>> -> memref<!tpu.dma_semaphore, #tpu.memory_space<semaphore_mem>>
    tpu.wait_dma2 semaphore(%359 : memref<!tpu.dma_semaphore, #tpu.memory_space<semaphore_mem>>) src(%355 : memref<128xf32, #tpu.memory_space<any>>) dst(%357 : memref<128xf32, #tpu.memory_space<vmem>>)
    %c2_i32_247 = arith.constant 2 : i32
    %c0_i32_248 = arith.constant 0 : i32
    %c0_i32_249 = arith.constant 0 : i32
    %c0_i32_250 = arith.constant 0 : i32
    %360 = tpu.memref_slice %arg2[%83, %c0_i32_250] : memref<512x128xf32, #tpu.memory_space<any>> -> memref<1x128xf32, #tpu.memory_space<any>>
    %361 = tpu.memref_squeeze %360 : memref<1x128xf32, #tpu.memory_space<any>> -> memref<128xf32, #tpu.memory_space<any>>
    %c0_i32_251 = arith.constant 0 : i32
    %362 = tpu.memref_slice %arg8[%c2_i32_247, %c0_i32_248, %c0_i32_251] : memref<8x4x128xf32, #tpu.memory_space<vmem>> -> memref<1x1x128xf32, #tpu.memory_space<vmem>>
    %363 = tpu.memref_squeeze %362 : memref<1x1x128xf32, #tpu.memory_space<vmem>> -> memref<128xf32, #tpu.memory_space<vmem>>
    %364 = tpu.memref_slice %arg9[%c0_i32_249] : memref<1x!tpu.dma_semaphore, #tpu.memory_space<semaphore_mem>> -> memref<1x!tpu.dma_semaphore, #tpu.memory_space<semaphore_mem>>
    %365 = tpu.memref_squeeze %364 : memref<1x!tpu.dma_semaphore, #tpu.memory_space<semaphore_mem>> -> memref<!tpu.dma_semaphore, #tpu.memory_space<semaphore_mem>>
    tpu.wait_dma2 semaphore(%365 : memref<!tpu.dma_semaphore, #tpu.memory_space<semaphore_mem>>) src(%361 : memref<128xf32, #tpu.memory_space<any>>) dst(%363 : memref<128xf32, #tpu.memory_space<vmem>>)
    %c2_i32_252 = arith.constant 2 : i32
    %c1_i32_253 = arith.constant 1 : i32
    %c0_i32_254 = arith.constant 0 : i32
    %c0_i32_255 = arith.constant 0 : i32
    %366 = tpu.memref_slice %arg2[%92, %c0_i32_255] : memref<512x128xf32, #tpu.memory_space<any>> -> memref<1x128xf32, #tpu.memory_space<any>>
    %367 = tpu.memref_squeeze %366 : memref<1x128xf32, #tpu.memory_space<any>> -> memref<128xf32, #tpu.memory_space<any>>
    %c0_i32_256 = arith.constant 0 : i32
    %368 = tpu.memref_slice %arg8[%c2_i32_252, %c1_i32_253, %c0_i32_256] : memref<8x4x128xf32, #tpu.memory_space<vmem>> -> memref<1x1x128xf32, #tpu.memory_space<vmem>>
    %369 = tpu.memref_squeeze %368 : memref<1x1x128xf32, #tpu.memory_space<vmem>> -> memref<128xf32, #tpu.memory_space<vmem>>
    %370 = tpu.memref_slice %arg9[%c0_i32_254] : memref<1x!tpu.dma_semaphore, #tpu.memory_space<semaphore_mem>> -> memref<1x!tpu.dma_semaphore, #tpu.memory_space<semaphore_mem>>
    %371 = tpu.memref_squeeze %370 : memref<1x!tpu.dma_semaphore, #tpu.memory_space<semaphore_mem>> -> memref<!tpu.dma_semaphore, #tpu.memory_space<semaphore_mem>>
    tpu.wait_dma2 semaphore(%371 : memref<!tpu.dma_semaphore, #tpu.memory_space<semaphore_mem>>) src(%367 : memref<128xf32, #tpu.memory_space<any>>) dst(%369 : memref<128xf32, #tpu.memory_space<vmem>>)
    %c2_i32_257 = arith.constant 2 : i32
    %c2_i32_258 = arith.constant 2 : i32
    %c0_i32_259 = arith.constant 0 : i32
    %c0_i32_260 = arith.constant 0 : i32
    %372 = tpu.memref_slice %arg2[%101, %c0_i32_260] : memref<512x128xf32, #tpu.memory_space<any>> -> memref<1x128xf32, #tpu.memory_space<any>>
    %373 = tpu.memref_squeeze %372 : memref<1x128xf32, #tpu.memory_space<any>> -> memref<128xf32, #tpu.memory_space<any>>
    %c0_i32_261 = arith.constant 0 : i32
    %374 = tpu.memref_slice %arg8[%c2_i32_257, %c2_i32_258, %c0_i32_261] : memref<8x4x128xf32, #tpu.memory_space<vmem>> -> memref<1x1x128xf32, #tpu.memory_space<vmem>>
    %375 = tpu.memref_squeeze %374 : memref<1x1x128xf32, #tpu.memory_space<vmem>> -> memref<128xf32, #tpu.memory_space<vmem>>
    %376 = tpu.memref_slice %arg9[%c0_i32_259] : memref<1x!tpu.dma_semaphore, #tpu.memory_space<semaphore_mem>> -> memref<1x!tpu.dma_semaphore, #tpu.memory_space<semaphore_mem>>
    %377 = tpu.memref_squeeze %376 : memref<1x!tpu.dma_semaphore, #tpu.memory_space<semaphore_mem>> -> memref<!tpu.dma_semaphore, #tpu.memory_space<semaphore_mem>>
    tpu.wait_dma2 semaphore(%377 : memref<!tpu.dma_semaphore, #tpu.memory_space<semaphore_mem>>) src(%373 : memref<128xf32, #tpu.memory_space<any>>) dst(%375 : memref<128xf32, #tpu.memory_space<vmem>>)
    %c2_i32_262 = arith.constant 2 : i32
    %c3_i32_263 = arith.constant 3 : i32
    %c0_i32_264 = arith.constant 0 : i32
    %c0_i32_265 = arith.constant 0 : i32
    %378 = tpu.memref_slice %arg2[%110, %c0_i32_265] : memref<512x128xf32, #tpu.memory_space<any>> -> memref<1x128xf32, #tpu.memory_space<any>>
    %379 = tpu.memref_squeeze %378 : memref<1x128xf32, #tpu.memory_space<any>> -> memref<128xf32, #tpu.memory_space<any>>
    %c0_i32_266 = arith.constant 0 : i32
    %380 = tpu.memref_slice %arg8[%c2_i32_262, %c3_i32_263, %c0_i32_266] : memref<8x4x128xf32, #tpu.memory_space<vmem>> -> memref<1x1x128xf32, #tpu.memory_space<vmem>>
    %381 = tpu.memref_squeeze %380 : memref<1x1x128xf32, #tpu.memory_space<vmem>> -> memref<128xf32, #tpu.memory_space<vmem>>
    %382 = tpu.memref_slice %arg9[%c0_i32_264] : memref<1x!tpu.dma_semaphore, #tpu.memory_space<semaphore_mem>> -> memref<1x!tpu.dma_semaphore, #tpu.memory_space<semaphore_mem>>
    %383 = tpu.memref_squeeze %382 : memref<1x!tpu.dma_semaphore, #tpu.memory_space<semaphore_mem>> -> memref<!tpu.dma_semaphore, #tpu.memory_space<semaphore_mem>>
    tpu.wait_dma2 semaphore(%383 : memref<!tpu.dma_semaphore, #tpu.memory_space<semaphore_mem>>) src(%379 : memref<128xf32, #tpu.memory_space<any>>) dst(%381 : memref<128xf32, #tpu.memory_space<vmem>>)
    %c3_i32_267 = arith.constant 3 : i32
    %c0_i32_268 = arith.constant 0 : i32
    %c0_i32_269 = arith.constant 0 : i32
    %c0_i32_270 = arith.constant 0 : i32
    %384 = tpu.memref_slice %arg2[%122, %c0_i32_270] : memref<512x128xf32, #tpu.memory_space<any>> -> memref<1x128xf32, #tpu.memory_space<any>>
    %385 = tpu.memref_squeeze %384 : memref<1x128xf32, #tpu.memory_space<any>> -> memref<128xf32, #tpu.memory_space<any>>
    %c0_i32_271 = arith.constant 0 : i32
    %386 = tpu.memref_slice %arg8[%c3_i32_267, %c0_i32_268, %c0_i32_271] : memref<8x4x128xf32, #tpu.memory_space<vmem>> -> memref<1x1x128xf32, #tpu.memory_space<vmem>>
    %387 = tpu.memref_squeeze %386 : memref<1x1x128xf32, #tpu.memory_space<vmem>> -> memref<128xf32, #tpu.memory_space<vmem>>
    %388 = tpu.memref_slice %arg9[%c0_i32_269] : memref<1x!tpu.dma_semaphore, #tpu.memory_space<semaphore_mem>> -> memref<1x!tpu.dma_semaphore, #tpu.memory_space<semaphore_mem>>
    %389 = tpu.memref_squeeze %388 : memref<1x!tpu.dma_semaphore, #tpu.memory_space<semaphore_mem>> -> memref<!tpu.dma_semaphore, #tpu.memory_space<semaphore_mem>>
    tpu.wait_dma2 semaphore(%389 : memref<!tpu.dma_semaphore, #tpu.memory_space<semaphore_mem>>) src(%385 : memref<128xf32, #tpu.memory_space<any>>) dst(%387 : memref<128xf32, #tpu.memory_space<vmem>>)
    %c3_i32_272 = arith.constant 3 : i32
    %c1_i32_273 = arith.constant 1 : i32
    %c0_i32_274 = arith.constant 0 : i32
    %c0_i32_275 = arith.constant 0 : i32
    %390 = tpu.memref_slice %arg2[%131, %c0_i32_275] : memref<512x128xf32, #tpu.memory_space<any>> -> memref<1x128xf32, #tpu.memory_space<any>>
    %391 = tpu.memref_squeeze %390 : memref<1x128xf32, #tpu.memory_space<any>> -> memref<128xf32, #tpu.memory_space<any>>
    %c0_i32_276 = arith.constant 0 : i32
    %392 = tpu.memref_slice %arg8[%c3_i32_272, %c1_i32_273, %c0_i32_276] : memref<8x4x128xf32, #tpu.memory_space<vmem>> -> memref<1x1x128xf32, #tpu.memory_space<vmem>>
    %393 = tpu.memref_squeeze %392 : memref<1x1x128xf32, #tpu.memory_space<vmem>> -> memref<128xf32, #tpu.memory_space<vmem>>
    %394 = tpu.memref_slice %arg9[%c0_i32_274] : memref<1x!tpu.dma_semaphore, #tpu.memory_space<semaphore_mem>> -> memref<1x!tpu.dma_semaphore, #tpu.memory_space<semaphore_mem>>
    %395 = tpu.memref_squeeze %394 : memref<1x!tpu.dma_semaphore, #tpu.memory_space<semaphore_mem>> -> memref<!tpu.dma_semaphore, #tpu.memory_space<semaphore_mem>>
    tpu.wait_dma2 semaphore(%395 : memref<!tpu.dma_semaphore, #tpu.memory_space<semaphore_mem>>) src(%391 : memref<128xf32, #tpu.memory_space<any>>) dst(%393 : memref<128xf32, #tpu.memory_space<vmem>>)
    %c3_i32_277 = arith.constant 3 : i32
    %c2_i32_278 = arith.constant 2 : i32
    %c0_i32_279 = arith.constant 0 : i32
    %c0_i32_280 = arith.constant 0 : i32
    %396 = tpu.memref_slice %arg2[%140, %c0_i32_280] : memref<512x128xf32, #tpu.memory_space<any>> -> memref<1x128xf32, #tpu.memory_space<any>>
    %397 = tpu.memref_squeeze %396 : memref<1x128xf32, #tpu.memory_space<any>> -> memref<128xf32, #tpu.memory_space<any>>
    %c0_i32_281 = arith.constant 0 : i32
    %398 = tpu.memref_slice %arg8[%c3_i32_277, %c2_i32_278, %c0_i32_281] : memref<8x4x128xf32, #tpu.memory_space<vmem>> -> memref<1x1x128xf32, #tpu.memory_space<vmem>>
    %399 = tpu.memref_squeeze %398 : memref<1x1x128xf32, #tpu.memory_space<vmem>> -> memref<128xf32, #tpu.memory_space<vmem>>
    %400 = tpu.memref_slice %arg9[%c0_i32_279] : memref<1x!tpu.dma_semaphore, #tpu.memory_space<semaphore_mem>> -> memref<1x!tpu.dma_semaphore, #tpu.memory_space<semaphore_mem>>
    %401 = tpu.memref_squeeze %400 : memref<1x!tpu.dma_semaphore, #tpu.memory_space<semaphore_mem>> -> memref<!tpu.dma_semaphore, #tpu.memory_space<semaphore_mem>>
    tpu.wait_dma2 semaphore(%401 : memref<!tpu.dma_semaphore, #tpu.memory_space<semaphore_mem>>) src(%397 : memref<128xf32, #tpu.memory_space<any>>) dst(%399 : memref<128xf32, #tpu.memory_space<vmem>>)
    %c3_i32_282 = arith.constant 3 : i32
    %c3_i32_283 = arith.constant 3 : i32
    %c0_i32_284 = arith.constant 0 : i32
    %c0_i32_285 = arith.constant 0 : i32
    %402 = tpu.memref_slice %arg2[%149, %c0_i32_285] : memref<512x128xf32, #tpu.memory_space<any>> -> memref<1x128xf32, #tpu.memory_space<any>>
    %403 = tpu.memref_squeeze %402 : memref<1x128xf32, #tpu.memory_space<any>> -> memref<128xf32, #tpu.memory_space<any>>
    %c0_i32_286 = arith.constant 0 : i32
    %404 = tpu.memref_slice %arg8[%c3_i32_282, %c3_i32_283, %c0_i32_286] : memref<8x4x128xf32, #tpu.memory_space<vmem>> -> memref<1x1x128xf32, #tpu.memory_space<vmem>>
    %405 = tpu.memref_squeeze %404 : memref<1x1x128xf32, #tpu.memory_space<vmem>> -> memref<128xf32, #tpu.memory_space<vmem>>
    %406 = tpu.memref_slice %arg9[%c0_i32_284] : memref<1x!tpu.dma_semaphore, #tpu.memory_space<semaphore_mem>> -> memref<1x!tpu.dma_semaphore, #tpu.memory_space<semaphore_mem>>
    %407 = tpu.memref_squeeze %406 : memref<1x!tpu.dma_semaphore, #tpu.memory_space<semaphore_mem>> -> memref<!tpu.dma_semaphore, #tpu.memory_space<semaphore_mem>>
    tpu.wait_dma2 semaphore(%407 : memref<!tpu.dma_semaphore, #tpu.memory_space<semaphore_mem>>) src(%403 : memref<128xf32, #tpu.memory_space<any>>) dst(%405 : memref<128xf32, #tpu.memory_space<vmem>>)
    %c4_i32_287 = arith.constant 4 : i32
    %c0_i32_288 = arith.constant 0 : i32
    %c0_i32_289 = arith.constant 0 : i32
    %c0_i32_290 = arith.constant 0 : i32
    %408 = tpu.memref_slice %arg2[%161, %c0_i32_290] : memref<512x128xf32, #tpu.memory_space<any>> -> memref<1x128xf32, #tpu.memory_space<any>>
    %409 = tpu.memref_squeeze %408 : memref<1x128xf32, #tpu.memory_space<any>> -> memref<128xf32, #tpu.memory_space<any>>
    %c0_i32_291 = arith.constant 0 : i32
    %410 = tpu.memref_slice %arg8[%c4_i32_287, %c0_i32_288, %c0_i32_291] : memref<8x4x128xf32, #tpu.memory_space<vmem>> -> memref<1x1x128xf32, #tpu.memory_space<vmem>>
    %411 = tpu.memref_squeeze %410 : memref<1x1x128xf32, #tpu.memory_space<vmem>> -> memref<128xf32, #tpu.memory_space<vmem>>
    %412 = tpu.memref_slice %arg9[%c0_i32_289] : memref<1x!tpu.dma_semaphore, #tpu.memory_space<semaphore_mem>> -> memref<1x!tpu.dma_semaphore, #tpu.memory_space<semaphore_mem>>
    %413 = tpu.memref_squeeze %412 : memref<1x!tpu.dma_semaphore, #tpu.memory_space<semaphore_mem>> -> memref<!tpu.dma_semaphore, #tpu.memory_space<semaphore_mem>>
    tpu.wait_dma2 semaphore(%413 : memref<!tpu.dma_semaphore, #tpu.memory_space<semaphore_mem>>) src(%409 : memref<128xf32, #tpu.memory_space<any>>) dst(%411 : memref<128xf32, #tpu.memory_space<vmem>>)
    %c4_i32_292 = arith.constant 4 : i32
    %c1_i32_293 = arith.constant 1 : i32
    %c0_i32_294 = arith.constant 0 : i32
    %c0_i32_295 = arith.constant 0 : i32
    %414 = tpu.memref_slice %arg2[%170, %c0_i32_295] : memref<512x128xf32, #tpu.memory_space<any>> -> memref<1x128xf32, #tpu.memory_space<any>>
    %415 = tpu.memref_squeeze %414 : memref<1x128xf32, #tpu.memory_space<any>> -> memref<128xf32, #tpu.memory_space<any>>
    %c0_i32_296 = arith.constant 0 : i32
    %416 = tpu.memref_slice %arg8[%c4_i32_292, %c1_i32_293, %c0_i32_296] : memref<8x4x128xf32, #tpu.memory_space<vmem>> -> memref<1x1x128xf32, #tpu.memory_space<vmem>>
    %417 = tpu.memref_squeeze %416 : memref<1x1x128xf32, #tpu.memory_space<vmem>> -> memref<128xf32, #tpu.memory_space<vmem>>
    %418 = tpu.memref_slice %arg9[%c0_i32_294] : memref<1x!tpu.dma_semaphore, #tpu.memory_space<semaphore_mem>> -> memref<1x!tpu.dma_semaphore, #tpu.memory_space<semaphore_mem>>
    %419 = tpu.memref_squeeze %418 : memref<1x!tpu.dma_semaphore, #tpu.memory_space<semaphore_mem>> -> memref<!tpu.dma_semaphore, #tpu.memory_space<semaphore_mem>>
    tpu.wait_dma2 semaphore(%419 : memref<!tpu.dma_semaphore, #tpu.memory_space<semaphore_mem>>) src(%415 : memref<128xf32, #tpu.memory_space<any>>) dst(%417 : memref<128xf32, #tpu.memory_space<vmem>>)
    %c4_i32_297 = arith.constant 4 : i32
    %c2_i32_298 = arith.constant 2 : i32
    %c0_i32_299 = arith.constant 0 : i32
    %c0_i32_300 = arith.constant 0 : i32
    %420 = tpu.memref_slice %arg2[%179, %c0_i32_300] : memref<512x128xf32, #tpu.memory_space<any>> -> memref<1x128xf32, #tpu.memory_space<any>>
    %421 = tpu.memref_squeeze %420 : memref<1x128xf32, #tpu.memory_space<any>> -> memref<128xf32, #tpu.memory_space<any>>
    %c0_i32_301 = arith.constant 0 : i32
    %422 = tpu.memref_slice %arg8[%c4_i32_297, %c2_i32_298, %c0_i32_301] : memref<8x4x128xf32, #tpu.memory_space<vmem>> -> memref<1x1x128xf32, #tpu.memory_space<vmem>>
    %423 = tpu.memref_squeeze %422 : memref<1x1x128xf32, #tpu.memory_space<vmem>> -> memref<128xf32, #tpu.memory_space<vmem>>
    %424 = tpu.memref_slice %arg9[%c0_i32_299] : memref<1x!tpu.dma_semaphore, #tpu.memory_space<semaphore_mem>> -> memref<1x!tpu.dma_semaphore, #tpu.memory_space<semaphore_mem>>
    %425 = tpu.memref_squeeze %424 : memref<1x!tpu.dma_semaphore, #tpu.memory_space<semaphore_mem>> -> memref<!tpu.dma_semaphore, #tpu.memory_space<semaphore_mem>>
    tpu.wait_dma2 semaphore(%425 : memref<!tpu.dma_semaphore, #tpu.memory_space<semaphore_mem>>) src(%421 : memref<128xf32, #tpu.memory_space<any>>) dst(%423 : memref<128xf32, #tpu.memory_space<vmem>>)
    %c4_i32_302 = arith.constant 4 : i32
    %c3_i32_303 = arith.constant 3 : i32
    %c0_i32_304 = arith.constant 0 : i32
    %c0_i32_305 = arith.constant 0 : i32
    %426 = tpu.memref_slice %arg2[%188, %c0_i32_305] : memref<512x128xf32, #tpu.memory_space<any>> -> memref<1x128xf32, #tpu.memory_space<any>>
    %427 = tpu.memref_squeeze %426 : memref<1x128xf32, #tpu.memory_space<any>> -> memref<128xf32, #tpu.memory_space<any>>
    %c0_i32_306 = arith.constant 0 : i32
    %428 = tpu.memref_slice %arg8[%c4_i32_302, %c3_i32_303, %c0_i32_306] : memref<8x4x128xf32, #tpu.memory_space<vmem>> -> memref<1x1x128xf32, #tpu.memory_space<vmem>>
    %429 = tpu.memref_squeeze %428 : memref<1x1x128xf32, #tpu.memory_space<vmem>> -> memref<128xf32, #tpu.memory_space<vmem>>
    %430 = tpu.memref_slice %arg9[%c0_i32_304] : memref<1x!tpu.dma_semaphore, #tpu.memory_space<semaphore_mem>> -> memref<1x!tpu.dma_semaphore, #tpu.memory_space<semaphore_mem>>
    %431 = tpu.memref_squeeze %430 : memref<1x!tpu.dma_semaphore, #tpu.memory_space<semaphore_mem>> -> memref<!tpu.dma_semaphore, #tpu.memory_space<semaphore_mem>>
    tpu.wait_dma2 semaphore(%431 : memref<!tpu.dma_semaphore, #tpu.memory_space<semaphore_mem>>) src(%427 : memref<128xf32, #tpu.memory_space<any>>) dst(%429 : memref<128xf32, #tpu.memory_space<vmem>>)
    %c5_i32_307 = arith.constant 5 : i32
    %c0_i32_308 = arith.constant 0 : i32
    %c0_i32_309 = arith.constant 0 : i32
    %c0_i32_310 = arith.constant 0 : i32
    %432 = tpu.memref_slice %arg2[%200, %c0_i32_310] : memref<512x128xf32, #tpu.memory_space<any>> -> memref<1x128xf32, #tpu.memory_space<any>>
    %433 = tpu.memref_squeeze %432 : memref<1x128xf32, #tpu.memory_space<any>> -> memref<128xf32, #tpu.memory_space<any>>
    %c0_i32_311 = arith.constant 0 : i32
    %434 = tpu.memref_slice %arg8[%c5_i32_307, %c0_i32_308, %c0_i32_311] : memref<8x4x128xf32, #tpu.memory_space<vmem>> -> memref<1x1x128xf32, #tpu.memory_space<vmem>>
    %435 = tpu.memref_squeeze %434 : memref<1x1x128xf32, #tpu.memory_space<vmem>> -> memref<128xf32, #tpu.memory_space<vmem>>
    %436 = tpu.memref_slice %arg9[%c0_i32_309] : memref<1x!tpu.dma_semaphore, #tpu.memory_space<semaphore_mem>> -> memref<1x!tpu.dma_semaphore, #tpu.memory_space<semaphore_mem>>
    %437 = tpu.memref_squeeze %436 : memref<1x!tpu.dma_semaphore, #tpu.memory_space<semaphore_mem>> -> memref<!tpu.dma_semaphore, #tpu.memory_space<semaphore_mem>>
    tpu.wait_dma2 semaphore(%437 : memref<!tpu.dma_semaphore, #tpu.memory_space<semaphore_mem>>) src(%433 : memref<128xf32, #tpu.memory_space<any>>) dst(%435 : memref<128xf32, #tpu.memory_space<vmem>>)
    %c5_i32_312 = arith.constant 5 : i32
    %c1_i32_313 = arith.constant 1 : i32
    %c0_i32_314 = arith.constant 0 : i32
    %c0_i32_315 = arith.constant 0 : i32
    %438 = tpu.memref_slice %arg2[%209, %c0_i32_315] : memref<512x128xf32, #tpu.memory_space<any>> -> memref<1x128xf32, #tpu.memory_space<any>>
    %439 = tpu.memref_squeeze %438 : memref<1x128xf32, #tpu.memory_space<any>> -> memref<128xf32, #tpu.memory_space<any>>
    %c0_i32_316 = arith.constant 0 : i32
    %440 = tpu.memref_slice %arg8[%c5_i32_312, %c1_i32_313, %c0_i32_316] : memref<8x4x128xf32, #tpu.memory_space<vmem>> -> memref<1x1x128xf32, #tpu.memory_space<vmem>>
    %441 = tpu.memref_squeeze %440 : memref<1x1x128xf32, #tpu.memory_space<vmem>> -> memref<128xf32, #tpu.memory_space<vmem>>
    %442 = tpu.memref_slice %arg9[%c0_i32_314] : memref<1x!tpu.dma_semaphore, #tpu.memory_space<semaphore_mem>> -> memref<1x!tpu.dma_semaphore, #tpu.memory_space<semaphore_mem>>
    %443 = tpu.memref_squeeze %442 : memref<1x!tpu.dma_semaphore, #tpu.memory_space<semaphore_mem>> -> memref<!tpu.dma_semaphore, #tpu.memory_space<semaphore_mem>>
    tpu.wait_dma2 semaphore(%443 : memref<!tpu.dma_semaphore, #tpu.memory_space<semaphore_mem>>) src(%439 : memref<128xf32, #tpu.memory_space<any>>) dst(%441 : memref<128xf32, #tpu.memory_space<vmem>>)
    %c5_i32_317 = arith.constant 5 : i32
    %c2_i32_318 = arith.constant 2 : i32
    %c0_i32_319 = arith.constant 0 : i32
    %c0_i32_320 = arith.constant 0 : i32
    %444 = tpu.memref_slice %arg2[%218, %c0_i32_320] : memref<512x128xf32, #tpu.memory_space<any>> -> memref<1x128xf32, #tpu.memory_space<any>>
    %445 = tpu.memref_squeeze %444 : memref<1x128xf32, #tpu.memory_space<any>> -> memref<128xf32, #tpu.memory_space<any>>
    %c0_i32_321 = arith.constant 0 : i32
    %446 = tpu.memref_slice %arg8[%c5_i32_317, %c2_i32_318, %c0_i32_321] : memref<8x4x128xf32, #tpu.memory_space<vmem>> -> memref<1x1x128xf32, #tpu.memory_space<vmem>>
    %447 = tpu.memref_squeeze %446 : memref<1x1x128xf32, #tpu.memory_space<vmem>> -> memref<128xf32, #tpu.memory_space<vmem>>
    %448 = tpu.memref_slice %arg9[%c0_i32_319] : memref<1x!tpu.dma_semaphore, #tpu.memory_space<semaphore_mem>> -> memref<1x!tpu.dma_semaphore, #tpu.memory_space<semaphore_mem>>
    %449 = tpu.memref_squeeze %448 : memref<1x!tpu.dma_semaphore, #tpu.memory_space<semaphore_mem>> -> memref<!tpu.dma_semaphore, #tpu.memory_space<semaphore_mem>>
    tpu.wait_dma2 semaphore(%449 : memref<!tpu.dma_semaphore, #tpu.memory_space<semaphore_mem>>) src(%445 : memref<128xf32, #tpu.memory_space<any>>) dst(%447 : memref<128xf32, #tpu.memory_space<vmem>>)
    %c5_i32_322 = arith.constant 5 : i32
    %c3_i32_323 = arith.constant 3 : i32
    %c0_i32_324 = arith.constant 0 : i32
    %c0_i32_325 = arith.constant 0 : i32
    %450 = tpu.memref_slice %arg2[%227, %c0_i32_325] : memref<512x128xf32, #tpu.memory_space<any>> -> memref<1x128xf32, #tpu.memory_space<any>>
    %451 = tpu.memref_squeeze %450 : memref<1x128xf32, #tpu.memory_space<any>> -> memref<128xf32, #tpu.memory_space<any>>
    %c0_i32_326 = arith.constant 0 : i32
    %452 = tpu.memref_slice %arg8[%c5_i32_322, %c3_i32_323, %c0_i32_326] : memref<8x4x128xf32, #tpu.memory_space<vmem>> -> memref<1x1x128xf32, #tpu.memory_space<vmem>>
    %453 = tpu.memref_squeeze %452 : memref<1x1x128xf32, #tpu.memory_space<vmem>> -> memref<128xf32, #tpu.memory_space<vmem>>
    %454 = tpu.memref_slice %arg9[%c0_i32_324] : memref<1x!tpu.dma_semaphore, #tpu.memory_space<semaphore_mem>> -> memref<1x!tpu.dma_semaphore, #tpu.memory_space<semaphore_mem>>
    %455 = tpu.memref_squeeze %454 : memref<1x!tpu.dma_semaphore, #tpu.memory_space<semaphore_mem>> -> memref<!tpu.dma_semaphore, #tpu.memory_space<semaphore_mem>>
    tpu.wait_dma2 semaphore(%455 : memref<!tpu.dma_semaphore, #tpu.memory_space<semaphore_mem>>) src(%451 : memref<128xf32, #tpu.memory_space<any>>) dst(%453 : memref<128xf32, #tpu.memory_space<vmem>>)
    %c6_i32_327 = arith.constant 6 : i32
    %c0_i32_328 = arith.constant 0 : i32
    %c0_i32_329 = arith.constant 0 : i32
    %c0_i32_330 = arith.constant 0 : i32
    %456 = tpu.memref_slice %arg2[%239, %c0_i32_330] : memref<512x128xf32, #tpu.memory_space<any>> -> memref<1x128xf32, #tpu.memory_space<any>>
    %457 = tpu.memref_squeeze %456 : memref<1x128xf32, #tpu.memory_space<any>> -> memref<128xf32, #tpu.memory_space<any>>
    %c0_i32_331 = arith.constant 0 : i32
    %458 = tpu.memref_slice %arg8[%c6_i32_327, %c0_i32_328, %c0_i32_331] : memref<8x4x128xf32, #tpu.memory_space<vmem>> -> memref<1x1x128xf32, #tpu.memory_space<vmem>>
    %459 = tpu.memref_squeeze %458 : memref<1x1x128xf32, #tpu.memory_space<vmem>> -> memref<128xf32, #tpu.memory_space<vmem>>
    %460 = tpu.memref_slice %arg9[%c0_i32_329] : memref<1x!tpu.dma_semaphore, #tpu.memory_space<semaphore_mem>> -> memref<1x!tpu.dma_semaphore, #tpu.memory_space<semaphore_mem>>
    %461 = tpu.memref_squeeze %460 : memref<1x!tpu.dma_semaphore, #tpu.memory_space<semaphore_mem>> -> memref<!tpu.dma_semaphore, #tpu.memory_space<semaphore_mem>>
    tpu.wait_dma2 semaphore(%461 : memref<!tpu.dma_semaphore, #tpu.memory_space<semaphore_mem>>) src(%457 : memref<128xf32, #tpu.memory_space<any>>) dst(%459 : memref<128xf32, #tpu.memory_space<vmem>>)
    %c6_i32_332 = arith.constant 6 : i32
    %c1_i32_333 = arith.constant 1 : i32
    %c0_i32_334 = arith.constant 0 : i32
    %c0_i32_335 = arith.constant 0 : i32
    %462 = tpu.memref_slice %arg2[%248, %c0_i32_335] : memref<512x128xf32, #tpu.memory_space<any>> -> memref<1x128xf32, #tpu.memory_space<any>>
    %463 = tpu.memref_squeeze %462 : memref<1x128xf32, #tpu.memory_space<any>> -> memref<128xf32, #tpu.memory_space<any>>
    %c0_i32_336 = arith.constant 0 : i32
    %464 = tpu.memref_slice %arg8[%c6_i32_332, %c1_i32_333, %c0_i32_336] : memref<8x4x128xf32, #tpu.memory_space<vmem>> -> memref<1x1x128xf32, #tpu.memory_space<vmem>>
    %465 = tpu.memref_squeeze %464 : memref<1x1x128xf32, #tpu.memory_space<vmem>> -> memref<128xf32, #tpu.memory_space<vmem>>
    %466 = tpu.memref_slice %arg9[%c0_i32_334] : memref<1x!tpu.dma_semaphore, #tpu.memory_space<semaphore_mem>> -> memref<1x!tpu.dma_semaphore, #tpu.memory_space<semaphore_mem>>
    %467 = tpu.memref_squeeze %466 : memref<1x!tpu.dma_semaphore, #tpu.memory_space<semaphore_mem>> -> memref<!tpu.dma_semaphore, #tpu.memory_space<semaphore_mem>>
    tpu.wait_dma2 semaphore(%467 : memref<!tpu.dma_semaphore, #tpu.memory_space<semaphore_mem>>) src(%463 : memref<128xf32, #tpu.memory_space<any>>) dst(%465 : memref<128xf32, #tpu.memory_space<vmem>>)
    %c6_i32_337 = arith.constant 6 : i32
    %c2_i32_338 = arith.constant 2 : i32
    %c0_i32_339 = arith.constant 0 : i32
    %c0_i32_340 = arith.constant 0 : i32
    %468 = tpu.memref_slice %arg2[%257, %c0_i32_340] : memref<512x128xf32, #tpu.memory_space<any>> -> memref<1x128xf32, #tpu.memory_space<any>>
    %469 = tpu.memref_squeeze %468 : memref<1x128xf32, #tpu.memory_space<any>> -> memref<128xf32, #tpu.memory_space<any>>
    %c0_i32_341 = arith.constant 0 : i32
    %470 = tpu.memref_slice %arg8[%c6_i32_337, %c2_i32_338, %c0_i32_341] : memref<8x4x128xf32, #tpu.memory_space<vmem>> -> memref<1x1x128xf32, #tpu.memory_space<vmem>>
    %471 = tpu.memref_squeeze %470 : memref<1x1x128xf32, #tpu.memory_space<vmem>> -> memref<128xf32, #tpu.memory_space<vmem>>
    %472 = tpu.memref_slice %arg9[%c0_i32_339] : memref<1x!tpu.dma_semaphore, #tpu.memory_space<semaphore_mem>> -> memref<1x!tpu.dma_semaphore, #tpu.memory_space<semaphore_mem>>
    %473 = tpu.memref_squeeze %472 : memref<1x!tpu.dma_semaphore, #tpu.memory_space<semaphore_mem>> -> memref<!tpu.dma_semaphore, #tpu.memory_space<semaphore_mem>>
    tpu.wait_dma2 semaphore(%473 : memref<!tpu.dma_semaphore, #tpu.memory_space<semaphore_mem>>) src(%469 : memref<128xf32, #tpu.memory_space<any>>) dst(%471 : memref<128xf32, #tpu.memory_space<vmem>>)
    %c6_i32_342 = arith.constant 6 : i32
    %c3_i32_343 = arith.constant 3 : i32
    %c0_i32_344 = arith.constant 0 : i32
    %c0_i32_345 = arith.constant 0 : i32
    %474 = tpu.memref_slice %arg2[%266, %c0_i32_345] : memref<512x128xf32, #tpu.memory_space<any>> -> memref<1x128xf32, #tpu.memory_space<any>>
    %475 = tpu.memref_squeeze %474 : memref<1x128xf32, #tpu.memory_space<any>> -> memref<128xf32, #tpu.memory_space<any>>
    %c0_i32_346 = arith.constant 0 : i32
    %476 = tpu.memref_slice %arg8[%c6_i32_342, %c3_i32_343, %c0_i32_346] : memref<8x4x128xf32, #tpu.memory_space<vmem>> -> memref<1x1x128xf32, #tpu.memory_space<vmem>>
    %477 = tpu.memref_squeeze %476 : memref<1x1x128xf32, #tpu.memory_space<vmem>> -> memref<128xf32, #tpu.memory_space<vmem>>
    %478 = tpu.memref_slice %arg9[%c0_i32_344] : memref<1x!tpu.dma_semaphore, #tpu.memory_space<semaphore_mem>> -> memref<1x!tpu.dma_semaphore, #tpu.memory_space<semaphore_mem>>
    %479 = tpu.memref_squeeze %478 : memref<1x!tpu.dma_semaphore, #tpu.memory_space<semaphore_mem>> -> memref<!tpu.dma_semaphore, #tpu.memory_space<semaphore_mem>>
    tpu.wait_dma2 semaphore(%479 : memref<!tpu.dma_semaphore, #tpu.memory_space<semaphore_mem>>) src(%475 : memref<128xf32, #tpu.memory_space<any>>) dst(%477 : memref<128xf32, #tpu.memory_space<vmem>>)
    %c7_i32_347 = arith.constant 7 : i32
    %c0_i32_348 = arith.constant 0 : i32
    %c0_i32_349 = arith.constant 0 : i32
    %c0_i32_350 = arith.constant 0 : i32
    %480 = tpu.memref_slice %arg2[%278, %c0_i32_350] : memref<512x128xf32, #tpu.memory_space<any>> -> memref<1x128xf32, #tpu.memory_space<any>>
    %481 = tpu.memref_squeeze %480 : memref<1x128xf32, #tpu.memory_space<any>> -> memref<128xf32, #tpu.memory_space<any>>
    %c0_i32_351 = arith.constant 0 : i32
    %482 = tpu.memref_slice %arg8[%c7_i32_347, %c0_i32_348, %c0_i32_351] : memref<8x4x128xf32, #tpu.memory_space<vmem>> -> memref<1x1x128xf32, #tpu.memory_space<vmem>>
    %483 = tpu.memref_squeeze %482 : memref<1x1x128xf32, #tpu.memory_space<vmem>> -> memref<128xf32, #tpu.memory_space<vmem>>
    %484 = tpu.memref_slice %arg9[%c0_i32_349] : memref<1x!tpu.dma_semaphore, #tpu.memory_space<semaphore_mem>> -> memref<1x!tpu.dma_semaphore, #tpu.memory_space<semaphore_mem>>
    %485 = tpu.memref_squeeze %484 : memref<1x!tpu.dma_semaphore, #tpu.memory_space<semaphore_mem>> -> memref<!tpu.dma_semaphore, #tpu.memory_space<semaphore_mem>>
    tpu.wait_dma2 semaphore(%485 : memref<!tpu.dma_semaphore, #tpu.memory_space<semaphore_mem>>) src(%481 : memref<128xf32, #tpu.memory_space<any>>) dst(%483 : memref<128xf32, #tpu.memory_space<vmem>>)
    %c7_i32_352 = arith.constant 7 : i32
    %c1_i32_353 = arith.constant 1 : i32
    %c0_i32_354 = arith.constant 0 : i32
    %c0_i32_355 = arith.constant 0 : i32
    %486 = tpu.memref_slice %arg2[%287, %c0_i32_355] : memref<512x128xf32, #tpu.memory_space<any>> -> memref<1x128xf32, #tpu.memory_space<any>>
    %487 = tpu.memref_squeeze %486 : memref<1x128xf32, #tpu.memory_space<any>> -> memref<128xf32, #tpu.memory_space<any>>
    %c0_i32_356 = arith.constant 0 : i32
    %488 = tpu.memref_slice %arg8[%c7_i32_352, %c1_i32_353, %c0_i32_356] : memref<8x4x128xf32, #tpu.memory_space<vmem>> -> memref<1x1x128xf32, #tpu.memory_space<vmem>>
    %489 = tpu.memref_squeeze %488 : memref<1x1x128xf32, #tpu.memory_space<vmem>> -> memref<128xf32, #tpu.memory_space<vmem>>
    %490 = tpu.memref_slice %arg9[%c0_i32_354] : memref<1x!tpu.dma_semaphore, #tpu.memory_space<semaphore_mem>> -> memref<1x!tpu.dma_semaphore, #tpu.memory_space<semaphore_mem>>
    %491 = tpu.memref_squeeze %490 : memref<1x!tpu.dma_semaphore, #tpu.memory_space<semaphore_mem>> -> memref<!tpu.dma_semaphore, #tpu.memory_space<semaphore_mem>>
    tpu.wait_dma2 semaphore(%491 : memref<!tpu.dma_semaphore, #tpu.memory_space<semaphore_mem>>) src(%487 : memref<128xf32, #tpu.memory_space<any>>) dst(%489 : memref<128xf32, #tpu.memory_space<vmem>>)
    %c7_i32_357 = arith.constant 7 : i32
    %c2_i32_358 = arith.constant 2 : i32
    %c0_i32_359 = arith.constant 0 : i32
    %c0_i32_360 = arith.constant 0 : i32
    %492 = tpu.memref_slice %arg2[%296, %c0_i32_360] : memref<512x128xf32, #tpu.memory_space<any>> -> memref<1x128xf32, #tpu.memory_space<any>>
    %493 = tpu.memref_squeeze %492 : memref<1x128xf32, #tpu.memory_space<any>> -> memref<128xf32, #tpu.memory_space<any>>
    %c0_i32_361 = arith.constant 0 : i32
    %494 = tpu.memref_slice %arg8[%c7_i32_357, %c2_i32_358, %c0_i32_361] : memref<8x4x128xf32, #tpu.memory_space<vmem>> -> memref<1x1x128xf32, #tpu.memory_space<vmem>>
    %495 = tpu.memref_squeeze %494 : memref<1x1x128xf32, #tpu.memory_space<vmem>> -> memref<128xf32, #tpu.memory_space<vmem>>
    %496 = tpu.memref_slice %arg9[%c0_i32_359] : memref<1x!tpu.dma_semaphore, #tpu.memory_space<semaphore_mem>> -> memref<1x!tpu.dma_semaphore, #tpu.memory_space<semaphore_mem>>
    %497 = tpu.memref_squeeze %496 : memref<1x!tpu.dma_semaphore, #tpu.memory_space<semaphore_mem>> -> memref<!tpu.dma_semaphore, #tpu.memory_space<semaphore_mem>>
    tpu.wait_dma2 semaphore(%497 : memref<!tpu.dma_semaphore, #tpu.memory_space<semaphore_mem>>) src(%493 : memref<128xf32, #tpu.memory_space<any>>) dst(%495 : memref<128xf32, #tpu.memory_space<vmem>>)
    %c7_i32_362 = arith.constant 7 : i32
    %c3_i32_363 = arith.constant 3 : i32
    %c0_i32_364 = arith.constant 0 : i32
    %c0_i32_365 = arith.constant 0 : i32
    %498 = tpu.memref_slice %arg2[%305, %c0_i32_365] : memref<512x128xf32, #tpu.memory_space<any>> -> memref<1x128xf32, #tpu.memory_space<any>>
    %499 = tpu.memref_squeeze %498 : memref<1x128xf32, #tpu.memory_space<any>> -> memref<128xf32, #tpu.memory_space<any>>
    %c0_i32_366 = arith.constant 0 : i32
    %500 = tpu.memref_slice %arg8[%c7_i32_362, %c3_i32_363, %c0_i32_366] : memref<8x4x128xf32, #tpu.memory_space<vmem>> -> memref<1x1x128xf32, #tpu.memory_space<vmem>>
    %501 = tpu.memref_squeeze %500 : memref<1x1x128xf32, #tpu.memory_space<vmem>> -> memref<128xf32, #tpu.memory_space<vmem>>
    %502 = tpu.memref_slice %arg9[%c0_i32_364] : memref<1x!tpu.dma_semaphore, #tpu.memory_space<semaphore_mem>> -> memref<1x!tpu.dma_semaphore, #tpu.memory_space<semaphore_mem>>
    %503 = tpu.memref_squeeze %502 : memref<1x!tpu.dma_semaphore, #tpu.memory_space<semaphore_mem>> -> memref<!tpu.dma_semaphore, #tpu.memory_space<semaphore_mem>>
    tpu.wait_dma2 semaphore(%503 : memref<!tpu.dma_semaphore, #tpu.memory_space<semaphore_mem>>) src(%499 : memref<128xf32, #tpu.memory_space<any>>) dst(%501 : memref<128xf32, #tpu.memory_space<vmem>>)
    %c0 = arith.constant 0 : index
    %c0_367 = arith.constant 0 : index
    %c0_368 = arith.constant 0 : index
    %504 = vector.load %arg8[%c0, %c0_367, %c0_368] : memref<8x4x128xf32, #tpu.memory_space<vmem>>, vector<8x4x128xf32>
    %c0_369 = arith.constant 0 : index
    %c0_370 = arith.constant 0 : index
    %c0_371 = arith.constant 0 : index
    %505 = vector.load %arg3[%c0_369, %c0_370, %c0_371] : memref<8x4x1xf32, #tpu.memory_space<vmem>>, vector<8x4x1xf32>
    %506 = vector.broadcast %505 : vector<8x4x1xf32> to vector<8x4x128xf32>
    %507 = arith.mulf %504, %506 : vector<8x4x128xf32>
    %508 = vector.extract_strided_slice %507 {offsets = [0, 0, 0], sizes = [8, 2, 128], strides = [1, 1, 1]} : vector<8x4x128xf32> to vector<8x2x128xf32>
    %cst = arith.constant dense<0.000000e+00> : vector<8x128xf32>
    %509 = vector.multi_reduction <add>, %508, %cst [1] : vector<8x2x128xf32> to vector<8x128xf32>
    %510 = vector.extract_strided_slice %507 {offsets = [0, 2, 0], sizes = [8, 2, 128], strides = [1, 1, 1]} : vector<8x4x128xf32> to vector<8x2x128xf32>
    %cst_372 = arith.constant dense<0.000000e+00> : vector<8x128xf32>
    %511 = vector.multi_reduction <add>, %510, %cst_372 [1] : vector<8x2x128xf32> to vector<8x128xf32>
    %c0_373 = arith.constant 0 : index
    %c0_374 = arith.constant 0 : index
    %512 = vector.load %arg4[%c0_373, %c0_374] : memref<128x128xf32, #tpu.memory_space<vmem>>, vector<128x128xf32>
    %cst_375 = arith.constant dense<0.000000e+00> : vector<8x128xf32>
    %513 = tpu.matmul %509, %512, %cst_375 {dimension_numbers = #tpu.dot_dimension_numbers<[1], [0], [0], [1], [0, 0, 1, 1], [], []>} : vector<8x128xf32>, vector<128x128xf32>, vector<8x128xf32> -> vector<8x128xf32>
    %c0_376 = arith.constant 0 : index
    %c0_377 = arith.constant 0 : index
    %514 = vector.load %arg5[%c0_376, %c0_377] : memref<128x128xf32, #tpu.memory_space<vmem>>, vector<128x128xf32>
    %cst_378 = arith.constant dense<0.000000e+00> : vector<8x128xf32>
    %515 = tpu.matmul %511, %514, %cst_378 {dimension_numbers = #tpu.dot_dimension_numbers<[1], [0], [0], [1], [0, 0, 1, 1], [], []>} : vector<8x128xf32>, vector<128x128xf32>, vector<8x128xf32> -> vector<8x128xf32>
    %516 = arith.addf %513, %515 : vector<8x128xf32>
    %c0_379 = arith.constant 0 : index
    %c0_380 = arith.constant 0 : index
    %517 = vector.load %arg6[%c0_379, %c0_380] : memref<1x128xf32, #tpu.memory_space<vmem>>, vector<1x128xf32>
    %518 = vector.broadcast %517 : vector<1x128xf32> to vector<8x128xf32>
    %519 = arith.addf %516, %518 : vector<8x128xf32>
    %c0_381 = arith.constant 0 : index
    %c0_382 = arith.constant 0 : index
    %520 = vector.load %arg7[%c0_381, %c0_382] : memref<8x128xf32, #tpu.memory_space<vmem>>, vector<8x128xf32>
    tpu.vector_store %arg7[%c0_381, %c0_382], %519 {strides = array<i32>} : memref<8x128xf32, #tpu.memory_space<vmem>>, vector<8x128xf32>,
    return
  }
  func.func @transform_1(%arg0: i32, %arg1: memref<32xi32, #tpu.memory_space<smem>>) -> (i32, i32, i32) {
    %c0_i32 = arith.constant 0 : i32
    %c0_i32_0 = arith.constant 0 : i32
    %c0_i32_1 = arith.constant 0 : i32
    return %arg0, %c0_i32, %c0_i32_0 : i32, i32, i32
  }
  func.func @transform_2(%arg0: i32, %arg1: memref<32xi32, #tpu.memory_space<smem>>) -> (i32, i32) {
    %c0_i32 = arith.constant 0 : i32
    %c0_i32_0 = arith.constant 0 : i32
    %c0_i32_1 = arith.constant 0 : i32
    return %c0_i32, %c0_i32_0 : i32, i32
  }
  func.func @transform_3(%arg0: i32, %arg1: memref<32xi32, #tpu.memory_space<smem>>) -> (i32, i32) {
    %c0_i32 = arith.constant 0 : i32
    %c0_i32_0 = arith.constant 0 : i32
    %c0_i32_1 = arith.constant 0 : i32
    return %c0_i32, %c0_i32_0 : i32, i32
  }
  func.func @transform_4(%arg0: i32, %arg1: memref<32xi32, #tpu.memory_space<smem>>) -> (i32, i32) {
    %c0_i32 = arith.constant 0 : i32
    %c0_i32_0 = arith.constant 0 : i32
    %c0_i32_1 = arith.constant 0 : i32
    return %c0_i32, %c0_i32_0 : i32, i32
  }
  func.func @transform_5(%arg0: i32, %arg1: memref<32xi32, #tpu.memory_space<smem>>) -> (i32, i32) {
    %c0_i32 = arith.constant 0 : i32
    %c0_i32_0 = arith.constant 0 : i32
    return %arg0, %c0_i32 : i32, i32
  }
}

</mosaic_0001>

<llo_original>
// kernel: tpu_custom_call.1
$region0: #{tpu_custom_call.1}
  #allocation0 [shape = 'u32[]', space=smem, size = 0x4, offset = 0x4, fixed_abs, tag = 'smem constant byte address 0x4 - core index']
  #allocation1 [shape = 'u32[144,128]{1,0:T(1,128)}', space=vmem, size = 0x12000, scoped, tag = 'internal scratch']
  #allocation2 [shape = 'f32[8,4,128]{2,1,0:T(4,128)}', space=vmem, size = 0x4000, scoped, tag = 'scratch operand']
  #allocation3 [shape = 's32[1]{0}', space=sflag, size = 0x4, scoped, tag = 'scratch operand']
  #allocation4 [shape = 's32[1]{0}', space=sflag, size = 0x4, scoped, tag = 'scoped memory for tpu_custom_call.1']
  #allocation5 [shape = 'u8[512]{0}', space=smem, size = 0x200, scoped, tag = 'prefetched SMEM operand 0']
  #allocation12 [shape = 's32[]', space=sflag, size = 0x4, offset = 0, fixed_abs, tag = 'sflag constant byte address 0x0 - dummy sync flag']
  #allocation13 [shape = 's32[]', space=sflag, size = 0x4, offset = 0, fixed_abs, tag = 'sflag constant byte address 0x0 - dummy sync flag']
  #allocation14 [shape = 'u32[]', space=smem, size = 0x4, offset = 0x44, fixed_abs, tag = 'smem constant byte address 0x44 - assertion arg 0']
  #allocation15 [shape = 'u32[]', space=smem, size = 0x4, offset = 0x48, fixed_abs, tag = 'smem constant byte address 0x48 - assertion arg 1']
  #allocation16 [shape = 's32[]', space=sflag, size = 0x4, offset = 0, fixed_abs, tag = 'sflag constant byte address 0x0 - dummy sync flag']
  #allocation17 [shape = 's32[]', space=sflag, size = 0x4, offset = 0, fixed_abs, tag = 'sflag constant byte address 0x0 - dummy sync flag']
  #allocation18 [shape = 's32[]', space=sflag, size = 0x4, offset = 0, fixed_abs, tag = 'sflag constant byte address 0x0 - dummy sync flag']
  #allocation19 [shape = 's32[]', space=sflag, size = 0x4, offset = 0, fixed_abs, tag = 'sflag constant byte address 0x0 - dummy sync flag']
  #allocation20 [shape = 's32[]', space=sflag, size = 0x4, offset = 0, fixed_abs, tag = 'sflag constant byte address 0x0 - dummy sync flag']
  #allocation21 [shape = 's32[]', space=sflag, size = 0x4, offset = 0, fixed_abs, tag = 'sflag constant byte address 0x0 - dummy sync flag']
  #allocation22 [shape = 's32[]', space=sflag, size = 0x4, offset = 0, fixed_abs, tag = 'sflag constant byte address 0x0 - dummy sync flag']
  #allocation23 [shape = 's32[]', space=sflag, size = 0x4, offset = 0, fixed_abs, tag = 'sflag constant byte address 0x0 - dummy sync flag']
  #allocation24 [shape = 's32[]', space=sflag, size = 0x4, offset = 0, fixed_abs, tag = 'sflag constant byte address 0x0 - dummy sync flag']
  #allocation25 [shape = 's32[]', space=sflag, size = 0x4, offset = 0, fixed_abs, tag = 'sflag constant byte address 0x0 - dummy sync flag']
  #allocation26 [shape = 's32[]', space=sflag, size = 0x4, offset = 0, fixed_abs, tag = 'sflag constant byte address 0x0 - dummy sync flag']
  #allocation27 [shape = 's32[]', space=sflag, size = 0x4, offset = 0, fixed_abs, tag = 'sflag constant byte address 0x0 - dummy sync flag']
  #allocation28 [shape = 's32[]', space=sflag, size = 0x4, offset = 0, fixed_abs, tag = 'sflag constant byte address 0x0 - dummy sync flag']
  #allocation29 [shape = 's32[]', space=sflag, size = 0x4, offset = 0, fixed_abs, tag = 'sflag constant byte address 0x0 - dummy sync flag']
  #allocation30 [shape = 's32[]', space=sflag, size = 0x4, offset = 0, fixed_abs, tag = 'sflag constant byte address 0x0 - dummy sync flag']
  #allocation31 [shape = 's32[]', space=sflag, size = 0x4, offset = 0, fixed_abs, tag = 'sflag constant byte address 0x0 - dummy sync flag']
  #allocation32 [shape = 's32[]', space=sflag, size = 0x4, offset = 0, fixed_abs, tag = 'sflag constant byte address 0x0 - dummy sync flag']
  #allocation33 [shape = 's32[]', space=sflag, size = 0x4, offset = 0, fixed_abs, tag = 'sflag constant byte address 0x0 - dummy sync flag']
  #allocation34 [shape = 's32[]', space=sflag, size = 0x4, offset = 0, fixed_abs, tag = 'sflag constant byte address 0x0 - dummy sync flag']
  #allocation35 [shape = 's32[]', space=sflag, size = 0x4, offset = 0, fixed_abs, tag = 'sflag constant byte address 0x0 - dummy sync flag']
  #allocation36 [shape = 's32[]', space=sflag, size = 0x4, offset = 0, fixed_abs, tag = 'sflag constant byte address 0x0 - dummy sync flag']
  #allocation37 [shape = 's32[]', space=sflag, size = 0x4, offset = 0, fixed_abs, tag = 'sflag constant byte address 0x0 - dummy sync flag']
  #allocation38 [shape = 's32[]', space=sflag, size = 0x4, offset = 0, fixed_abs, tag = 'sflag constant byte address 0x0 - dummy sync flag']
  #allocation39 [shape = 's32[]', space=sflag, size = 0x4, offset = 0, fixed_abs, tag = 'sflag constant byte address 0x0 - dummy sync flag']
  #allocation40 [shape = 's32[]', space=sflag, size = 0x4, offset = 0, fixed_abs, tag = 'sflag constant byte address 0x0 - dummy sync flag']
  #allocation41 [shape = 's32[]', space=sflag, size = 0x4, offset = 0, fixed_abs, tag = 'sflag constant byte address 0x0 - dummy sync flag']
  #allocation42 [shape = 's32[]', space=sflag, size = 0x4, offset = 0, fixed_abs, tag = 'sflag constant byte address 0x0 - dummy sync flag']
  #allocation43 [shape = 's32[]', space=sflag, size = 0x4, offset = 0, fixed_abs, tag = 'sflag constant byte address 0x0 - dummy sync flag']
  #allocation44 [shape = 's32[]', space=sflag, size = 0x4, offset = 0, fixed_abs, tag = 'sflag constant byte address 0x0 - dummy sync flag']
  #allocation45 [shape = 's32[]', space=sflag, size = 0x4, offset = 0, fixed_abs, tag = 'sflag constant byte address 0x0 - dummy sync flag']
  #allocation46 [shape = 's32[]', space=sflag, size = 0x4, offset = 0, fixed_abs, tag = 'sflag constant byte address 0x0 - dummy sync flag']
  #allocation47 [shape = 's32[]', space=sflag, size = 0x4, offset = 0, fixed_abs, tag = 'sflag constant byte address 0x0 - dummy sync flag']
  #allocation48 [shape = 's32[]', space=sflag, size = 0x4, offset = 0, fixed_abs, tag = 'sflag constant byte address 0x0 - dummy sync flag']
  #allocation49 [shape = 's32[]', space=sflag, size = 0x4, offset = 0, fixed_abs, tag = 'sflag constant byte address 0x0 - dummy sync flag']
  #allocation50 [shape = 's32[]', space=sflag, size = 0x4, offset = 0, fixed_abs, tag = 'sflag constant byte address 0x0 - dummy sync flag']
  #allocation51 [shape = 's32[]', space=sflag, size = 0x4, offset = 0, fixed_abs, tag = 'sflag constant byte address 0x0 - dummy sync flag']
  #allocation52 [shape = 's32[]', space=sflag, size = 0x4, offset = 0, fixed_abs, tag = 'sflag constant byte address 0x0 - dummy sync flag']
  #allocation53 [shape = 's32[]', space=sflag, size = 0x4, offset = 0, fixed_abs, tag = 'sflag constant byte address 0x0 - dummy sync flag']
  #allocation54 [shape = 's32[]', space=sflag, size = 0x4, offset = 0, fixed_abs, tag = 'sflag constant byte address 0x0 - dummy sync flag']
  #allocation55 [shape = 's32[]', space=sflag, size = 0x4, offset = 0, fixed_abs, tag = 'sflag constant byte address 0x0 - dummy sync flag']
  #allocation56 [shape = 's32[]', space=sflag, size = 0x4, offset = 0, fixed_abs, tag = 'sflag constant byte address 0x0 - dummy sync flag']
  #allocation57 [shape = 's32[]', space=sflag, size = 0x4, offset = 0, fixed_abs, tag = 'sflag constant byte address 0x0 - dummy sync flag']
  #allocation58 [shape = 's32[]', space=sflag, size = 0x4, offset = 0, fixed_abs, tag = 'sflag constant byte address 0x0 - dummy sync flag']
  #allocation59 [shape = 's32[]', space=sflag, size = 0x4, offset = 0, fixed_abs, tag = 'sflag constant byte address 0x0 - dummy sync flag']
  #allocation60 [shape = 's32[]', space=sflag, size = 0x4, offset = 0, fixed_abs, tag = 'sflag constant byte address 0x0 - dummy sync flag']
  #allocation61 [shape = 's32[]', space=sflag, size = 0x4, offset = 0, fixed_abs, tag = 'sflag constant byte address 0x0 - dummy sync flag']
  #allocation62 [shape = 's32[]', space=sflag, size = 0x4, offset = 0, fixed_abs, tag = 'sflag constant byte address 0x0 - dummy sync flag']
  #allocation63 [shape = 's32[]', space=sflag, size = 0x4, offset = 0, fixed_abs, tag = 'sflag constant byte address 0x0 - dummy sync flag']
  #allocation64 [shape = 's32[]', space=sflag, size = 0x4, offset = 0, fixed_abs, tag = 'sflag constant byte address 0x0 - dummy sync flag']
  #allocation65 [shape = 's32[]', space=sflag, size = 0x4, offset = 0, fixed_abs, tag = 'sflag constant byte address 0x0 - dummy sync flag']
  #allocation66 [shape = 's32[]', space=sflag, size = 0x4, offset = 0, fixed_abs, tag = 'sflag constant byte address 0x0 - dummy sync flag']
  #allocation67 [shape = 's32[]', space=sflag, size = 0x4, offset = 0, fixed_abs, tag = 'sflag constant byte address 0x0 - dummy sync flag']
  #allocation68 [shape = 's32[]', space=sflag, size = 0x4, offset = 0, fixed_abs, tag = 'sflag constant byte address 0x0 - dummy sync flag']
  #allocation69 [shape = 's32[]', space=sflag, size = 0x4, offset = 0, fixed_abs, tag = 'sflag constant byte address 0x0 - dummy sync flag']
  #allocation70 [shape = 's32[]', space=sflag, size = 0x4, offset = 0, fixed_abs, tag = 'sflag constant byte address 0x0 - dummy sync flag']
  #allocation71 [shape = 's32[]', space=sflag, size = 0x4, offset = 0, fixed_abs, tag = 'sflag constant byte address 0x0 - dummy sync flag']
  #allocation72 [shape = 's32[]', space=sflag, size = 0x4, offset = 0, fixed_abs, tag = 'sflag constant byte address 0x0 - dummy sync flag']
  #allocation73 [shape = 's32[]', space=sflag, size = 0x4, offset = 0, fixed_abs, tag = 'sflag constant byte address 0x0 - dummy sync flag']
  #allocation74 [shape = 's32[]', space=sflag, size = 0x4, offset = 0, fixed_abs, tag = 'sflag constant byte address 0x0 - dummy sync flag']
  #allocation75 [shape = 's32[]', space=sflag, size = 0x4, offset = 0, fixed_abs, tag = 'sflag constant byte address 0x0 - dummy sync flag']
  #allocation76 [shape = 's32[]', space=sflag, size = 0x4, offset = 0, fixed_abs, tag = 'sflag constant byte address 0x0 - dummy sync flag']
  #allocation77 [shape = 's32[]', space=sflag, size = 0x4, offset = 0, fixed_abs, tag = 'sflag constant byte address 0x0 - dummy sync flag']
  %s0 = inlined_call_operand.vmem [shape: s32[32], index: 0, kind: input, shape index: {}]
  %s1 = inlined_call_operand.hbm [shape: f32[512,128], index: 1, kind: input, shape index: {}]
  %s2 = inlined_call_operand.vmem [shape: f32[8,4,1], index: 2, kind: input, shape index: {}]
  %s3 = inlined_call_operand.hbm [shape: f32[128,128], index: 3, kind: input, shape index: {}]
  %s4 = inlined_call_operand.hbm [shape: f32[128,128], index: 4, kind: input, shape index: {}]
  %s5 = inlined_call_operand.vmem [shape: f32[1,128], index: 5, kind: input, shape index: {}]
  %s6 = inlined_call_operand.hbm [shape: f32[8,128], index: 6, kind: output, shape index: {}]
  %s7 = sld [smem:[#allocation0]]
  $region162: #{tpu_custom_call.1} parent=0
    _
  %s9 = ssub.s32 1, %s7
  %s10 = scalar_select 0, %s9, %s7
  %s11 = sshll.u32 %s0, 4
  %s12 = int_to_ptr.vmem [resolvable:$true] %s11
  %14 = dma.vmem_to_smem %s12, 16, [#allocation5], [#allocation4]
  %15 = dma.done [#allocation4], 16
  %16 = sfence
  $region1: #{tpu_custom_call.1} parent=0
    #allocation6 [shape = 'u8[65536]{0}', space=vmem, size = 0x10000, scoped, tag = 'input window, operand 3, single buffered']
    #allocation7 [shape = 's32[1]{0}', space=sflag, size = 0x4, scoped, tag = 'scoped memory for tpu_custom_call.1']
    #allocation8 [shape = 's32[1]{0}', space=sflag, size = 0x4, scoped, tag = 'scoped memory for tpu_custom_call.1']
    #allocation9 [shape = 'u8[65536]{0}', space=vmem, size = 0x10000, scoped, tag = 'input window, operand 4, single buffered']
    #allocation10 [shape = 's32[1]{0}', space=sflag, size = 0x4, scoped, tag = 'scoped memory for tpu_custom_call.1']
    #allocation11 [shape = 'u8[4096]{0}', space=vmem, size = 0x1000, scoped, tag = 'output window, operand 0, single buffered']
    %17 = vsyncpa [#allocation7], 0
    %18 = vsyncpa [#allocation10], 0
    %19 = vsyncpa [#allocation8], 0
    // Predicated region
    $region2: #{tpu_custom_call.1} parent=1 // pred_check
      _
    $region3: #{tpu_custom_call.1} parent=1 // pred_check_branch
      %21 = sbr.rel (0) target = $region5
    $region4: #{tpu_custom_call.1} parent=1 // pred_region
      _
    $region5: #{tpu_custom_call.1} parent=1 // pred_fallthru
      _
    // Predicated region
    $region6: #{tpu_custom_call.1} parent=1 // pred_check
      _
    $region7: #{tpu_custom_call.1} parent=1 // pred_check_branch
      %23 = sbr.rel (0) target = $region9
    $region8: #{tpu_custom_call.1} parent=1 // pred_region
      %s25 = ssub.s32 2048, 2048
      %26 = vsyncadd [#allocation7], %s25
      %s27 = sshll.u32 [#allocation6], 4
      %s28 = int_to_ptr.vmem [resolvable:$true] %s27
      %33 = dma.hbm_to_vmem [thread:$0]  %s3, 2048, %s28, [#allocation7], 128, 128, 8
    $region9: #{tpu_custom_call.1} parent=1 // pred_fallthru
      _
    // Predicated region
    $region10: #{tpu_custom_call.1} parent=1 // pred_check
      _
    $region11: #{tpu_custom_call.1} parent=1 // pred_check_branch
      %35 = sbr.rel (0) target = $region13
    $region12: #{tpu_custom_call.1} parent=1 // pred_region
      %s37 = ssub.s32 2048, 2048
      %38 = vsyncadd [#allocation10], %s37
      %s39 = sshll.u32 [#allocation9], 4
      %s40 = int_to_ptr.vmem [resolvable:$true] %s39
      %45 = dma.hbm_to_vmem [thread:$0]  %s4, 2048, %s40, [#allocation10], 128, 128, 8
    $region13: #{tpu_custom_call.1} parent=1 // pred_fallthru
      _
    // Predicated region
    $region14: #{tpu_custom_call.1} parent=1 // pred_check
      _
    $region15: #{tpu_custom_call.1} parent=1 // pred_check_branch
      %47 = sbr.rel (0) target = $region17
    $region16: #{tpu_custom_call.1} parent=1 // pred_region
      _
    $region17: #{tpu_custom_call.1} parent=1 // pred_fallthru
      _
    // Predicated region
    $region18: #{tpu_custom_call.1} parent=1 // pred_check
      _
    $region19: #{tpu_custom_call.1} parent=1 // pred_check_branch
      %49 = sbr.rel (0) target = $region21
    $region20: #{tpu_custom_call.1} parent=1 // pred_region
      %50 = dma.done [#allocation7], 2048
    $region21: #{tpu_custom_call.1} parent=1 // pred_fallthru
      _
    // Predicated region
    $region22: #{tpu_custom_call.1} parent=1 // pred_check
      _
    $region23: #{tpu_custom_call.1} parent=1 // pred_check_branch
      %52 = sbr.rel (0) target = $region25
    $region24: #{tpu_custom_call.1} parent=1 // pred_region
      %53 = dma.done [#allocation10], 2048
    $region25: #{tpu_custom_call.1} parent=1 // pred_fallthru
      _
    %s54 = smul.u32 0, 32
    %s55 = sld [smem:[#allocation5 + %s54]]
    %s56 = smul.addr %s55, 16
    %s57 = scalar_lea.hbm %s1, %s56
    // Predicated region
    $region26: #{tpu_custom_call.1} parent=1 // pred_check
      _
    $region27: #{tpu_custom_call.1} parent=1 // pred_check_branch
      %59 = sbr.rel target = $region29
    $region28: #{tpu_custom_call.1} parent=1 // pred_region
      %60 = sst [smem:[#allocation14]] [#allocation13]
      %61 = sst [smem:[#allocation15]] [#allocation12]
    $region29: #{tpu_custom_call.1} parent=1 // pred_fallthru
      _
    %63 = shalt.err (0)
    %s65 = sshll.u32 [#allocation2], 4
    %s66 = int_to_ptr.vmem [resolvable:$true] %s65
    %68 = dma.hbm_to_vmem [thread:$0]  %s57, 16, %s66, [#allocation3]
    %s69 = sadd.s32 %s54, 1
    %s70 = sld [smem:[#allocation5 + %s69]]
    %s71 = smul.addr %s70, 16
    %s72 = scalar_lea.hbm %s1, %s71
    %s73 = scalar_lea.vmem [#allocation2], 1
    // Predicated region
    $region30: #{tpu_custom_call.1} parent=1 // pred_check
      _
    $region31: #{tpu_custom_call.1} parent=1 // pred_check_branch
      %75 = sbr.rel target = $region33
    $region32: #{tpu_custom_call.1} parent=1 // pred_region
      %76 = sst [smem:[#allocation14]] [#allocation17]
      %77 = sst [smem:[#allocation15]] [#allocation16]
    $region33: #{tpu_custom_call.1} parent=1 // pred_fallthru
      _
    %79 = shalt.err (0)
    %s81 = sshll.u32 %s73, 4
    %s82 = int_to_ptr.vmem [resolvable:$true] %s81
    %84 = dma.hbm_to_vmem [thread:$0]  %s72, 16, %s82, [#allocation3]
    %s85 = sadd.s32 %s54, 2
    %s86 = sld [smem:[#allocation5 + %s85]]
    %s87 = smul.addr %s86, 16
    %s88 = scalar_lea.hbm %s1, %s87
    %s89 = scalar_lea.vmem [#allocation2], 2
    // Predicated region
    $region34: #{tpu_custom_call.1} parent=1 // pred_check
      _
    $region35: #{tpu_custom_call.1} parent=1 // pred_check_branch
      %91 = sbr.rel target = $region37
    $region36: #{tpu_custom_call.1} parent=1 // pred_region
      %92 = sst [smem:[#allocation14]] [#allocation19]
      %93 = sst [smem:[#allocation15]] [#allocation18]
    $region37: #{tpu_custom_call.1} parent=1 // pred_fallthru
      _
    %95 = shalt.err (0)
    %s97 = sshll.u32 %s89, 4
    %s98 = int_to_ptr.vmem [resolvable:$true] %s97
    %100 = dma.hbm_to_vmem [thread:$0]  %s88, 16, %s98, [#allocation3]
    %s101 = sadd.s32 %s54, 3
    %s102 = sld [smem:[#allocation5 + %s101]]
    %s103 = smul.addr %s102, 16
    %s104 = scalar_lea.hbm %s1, %s103
    %s105 = scalar_lea.vmem [#allocation2], 3
    // Predicated region
    $region38: #{tpu_custom_call.1} parent=1 // pred_check
      _
    $region39: #{tpu_custom_call.1} parent=1 // pred_check_branch
      %107 = sbr.rel target = $region41
    $region40: #{tpu_custom_call.1} parent=1 // pred_region
      %108 = sst [smem:[#allocation14]] [#allocation21]
      %109 = sst [smem:[#allocation15]] [#allocation20]
    $region41: #{tpu_custom_call.1} parent=1 // pred_fallthru
      _
    %111 = shalt.err (0)
    %s113 = sshll.u32 %s105, 4
    %s114 = int_to_ptr.vmem [resolvable:$true] %s113
    %116 = dma.hbm_to_vmem [thread:$0]  %s104, 16, %s114, [#allocation3]
    %s117 = smul.u32 0, 8
    %s118 = sadd.s32 %s117, 1
    %s119 = smul.u32 %s118, 4
    %s120 = sld [smem:[#allocation5 + %s119]]
    %s121 = smul.addr %s120, 16
    %s122 = scalar_lea.hbm %s1, %s121
    %s123 = scalar_lea.vmem [#allocation2], 4
    // Predicated region
    $region42: #{tpu_custom_call.1} parent=1 // pred_check
      _
    $region43: #{tpu_custom_call.1} parent=1 // pred_check_branch
      %125 = sbr.rel target = $region45
    $region44: #{tpu_custom_call.1} parent=1 // pred_region
      %126 = sst [smem:[#allocation14]] [#allocation23]
      %127 = sst [smem:[#allocation15]] [#allocation22]
    $region45: #{tpu_custom_call.1} parent=1 // pred_fallthru
      _
    %129 = shalt.err (0)
    %s131 = sshll.u32 %s123, 4
    %s132 = int_to_ptr.vmem [resolvable:$true] %s131
    %134 = dma.hbm_to_vmem [thread:$0]  %s122, 16, %s132, [#allocation3]
    %s135 = sadd.s32 %s119, 1
    %s136 = sld [smem:[#allocation5 + %s135]]
    %s137 = smul.addr %s136, 16
    %s138 = scalar_lea.hbm %s1, %s137
    %s139 = scalar_lea.vmem [#allocation2], 5
    // Predicated region
    $region46: #{tpu_custom_call.1} parent=1 // pred_check
      _
    $region47: #{tpu_custom_call.1} parent=1 // pred_check_branch
      %141 = sbr.rel target = $region49
    $region48: #{tpu_custom_call.1} parent=1 // pred_region
      %142 = sst [smem:[#allocation14]] [#allocation25]
      %143 = sst [smem:[#allocation15]] [#allocation24]
    $region49: #{tpu_custom_call.1} parent=1 // pred_fallthru
      _
    %145 = shalt.err (0)
    %s147 = sshll.u32 %s139, 4
    %s148 = int_to_ptr.vmem [resolvable:$true] %s147
    %150 = dma.hbm_to_vmem [thread:$0]  %s138, 16, %s148, [#allocation3]
    %s151 = sadd.s32 %s119, 2
    %s152 = sld [smem:[#allocation5 + %s151]]
    %s153 = smul.addr %s152, 16
    %s154 = scalar_lea.hbm %s1, %s153
    %s155 = scalar_lea.vmem [#allocation2], 6
    // Predicated region
    $region50: #{tpu_custom_call.1} parent=1 // pred_check
      _
    $region51: #{tpu_custom_call.1} parent=1 // pred_check_branch
      %157 = sbr.rel target = $region53
    $region52: #{tpu_custom_call.1} parent=1 // pred_region
      %158 = sst [smem:[#allocation14]] [#allocation27]
      %159 = sst [smem:[#allocation15]] [#allocation26]
    $region53: #{tpu_custom_call.1} parent=1 // pred_fallthru
      _
    %161 = shalt.err (0)
    %s163 = sshll.u32 %s155, 4
    %s164 = int_to_ptr.vmem [resolvable:$true] %s163
    %166 = dma.hbm_to_vmem [thread:$0]  %s154, 16, %s164, [#allocation3]
    %s167 = sadd.s32 %s119, 3
    %s168 = sld [smem:[#allocation5 + %s167]]
    %s169 = smul.addr %s168, 16
    %s170 = scalar_lea.hbm %s1, %s169
    %s171 = scalar_lea.vmem [#allocation2], 7
    // Predicated region
    $region54: #{tpu_custom_call.1} parent=1 // pred_check
      _
    $region55: #{tpu_custom_call.1} parent=1 // pred_check_branch
      %173 = sbr.rel target = $region57
    $region56: #{tpu_custom_call.1} parent=1 // pred_region
      %174 = sst [smem:[#allocation14]] [#allocation29]
      %175 = sst [smem:[#allocation15]] [#allocation28]
    $region57: #{tpu_custom_call.1} parent=1 // pred_fallthru
      _
    %177 = shalt.err (0)
    %s179 = sshll.u32 %s171, 4
    %s180 = int_to_ptr.vmem [resolvable:$true] %s179
    %182 = dma.hbm_to_vmem [thread:$0]  %s170, 16, %s180, [#allocation3]
    %s183 = sadd.s32 %s117, 2
    %s184 = smul.u32 %s183, 4
    %s185 = sld [smem:[#allocation5 + %s184]]
    %s186 = smul.addr %s185, 16
    %s187 = scalar_lea.hbm %s1, %s186
    %s188 = scalar_lea.vmem [#allocation2], 8
    // Predicated region
    $region58: #{tpu_custom_call.1} parent=1 // pred_check
      _
    $region59: #{tpu_custom_call.1} parent=1 // pred_check_branch
      %190 = sbr.rel target = $region61
    $region60: #{tpu_custom_call.1} parent=1 // pred_region
      %191 = sst [smem:[#allocation14]] [#allocation31]
      %192 = sst [smem:[#allocation15]] [#allocation30]
    $region61: #{tpu_custom_call.1} parent=1 // pred_fallthru
      _
    %194 = shalt.err (0)
    %s196 = sshll.u32 %s188, 4
    %s197 = int_to_ptr.vmem [resolvable:$true] %s196
    %199 = dma.hbm_to_vmem [thread:$0]  %s187, 16, %s197, [#allocation3]
    %s200 = sadd.s32 %s184, 1
    %s201 = sld [smem:[#allocation5 + %s200]]
    %s202 = smul.addr %s201, 16
    %s203 = scalar_lea.hbm %s1, %s202
    %s204 = scalar_lea.vmem [#allocation2], 9
    // Predicated region
    $region62: #{tpu_custom_call.1} parent=1 // pred_check
      _
    $region63: #{tpu_custom_call.1} parent=1 // pred_check_branch
      %206 = sbr.rel target = $region65
    $region64: #{tpu_custom_call.1} parent=1 // pred_region
      %207 = sst [smem:[#allocation14]] [#allocation33]
      %208 = sst [smem:[#allocation15]] [#allocation32]
    $region65: #{tpu_custom_call.1} parent=1 // pred_fallthru
      _
    %210 = shalt.err (0)
    %s212 = sshll.u32 %s204, 4
    %s213 = int_to_ptr.vmem [resolvable:$true] %s212
    %215 = dma.hbm_to_vmem [thread:$0]  %s203, 16, %s213, [#allocation3]
    %s216 = sadd.s32 %s184, 2
    %s217 = sld [smem:[#allocation5 + %s216]]
    %s218 = smul.addr %s217, 16
    %s219 = scalar_lea.hbm %s1, %s218
    %s220 = scalar_lea.vmem [#allocation2], 10
    // Predicated region
    $region66: #{tpu_custom_call.1} parent=1 // pred_check
      _
    $region67: #{tpu_custom_call.1} parent=1 // pred_check_branch
      %222 = sbr.rel target = $region69
    $region68: #{tpu_custom_call.1} parent=1 // pred_region
      %223 = sst [smem:[#allocation14]] [#allocation35]
      %224 = sst [smem:[#allocation15]] [#allocation34]
    $region69: #{tpu_custom_call.1} parent=1 // pred_fallthru
      _
    %226 = shalt.err (0)
    %s228 = sshll.u32 %s220, 4
    %s229 = int_to_ptr.vmem [resolvable:$true] %s228
    %231 = dma.hbm_to_vmem [thread:$0]  %s219, 16, %s229, [#allocation3]
    %s232 = sadd.s32 %s184, 3
    %s233 = sld [smem:[#allocation5 + %s232]]
    %s234 = smul.addr %s233, 16
    %s235 = scalar_lea.hbm %s1, %s234
    %s236 = scalar_lea.vmem [#allocation2], 11
    // Predicated region
    $region70: #{tpu_custom_call.1} parent=1 // pred_check
      _
    $region71: #{tpu_custom_call.1} parent=1 // pred_check_branch
      %238 = sbr.rel target = $region73
    $region72: #{tpu_custom_call.1} parent=1 // pred_region
      %239 = sst [smem:[#allocation14]] [#allocation37]
      %240 = sst [smem:[#allocation15]] [#allocation36]
    $region73: #{tpu_custom_call.1} parent=1 // pred_fallthru
      _
    %242 = shalt.err (0)
    %s244 = sshll.u32 %s236, 4
    %s245 = int_to_ptr.vmem [resolvable:$true] %s244
    %247 = dma.hbm_to_vmem [thread:$0]  %s235, 16, %s245, [#allocation3]
    %s248 = sadd.s32 %s117, 3
    %s249 = smul.u32 %s248, 4
    %s250 = sld [smem:[#allocation5 + %s249]]
    %s251 = smul.addr %s250, 16
    %s252 = scalar_lea.hbm %s1, %s251
    %s253 = scalar_lea.vmem [#allocation2], 12
    // Predicated region
    $region74: #{tpu_custom_call.1} parent=1 // pred_check
      _
    $region75: #{tpu_custom_call.1} parent=1 // pred_check_branch
      %255 = sbr.rel target = $region77
    $region76: #{tpu_custom_call.1} parent=1 // pred_region
      %256 = sst [smem:[#allocation14]] [#allocation39]
      %257 = sst [smem:[#allocation15]] [#allocation38]
    $region77: #{tpu_custom_call.1} parent=1 // pred_fallthru
      _
    %259 = shalt.err (0)
    %s261 = sshll.u32 %s253, 4
    %s262 = int_to_ptr.vmem [resolvable:$true] %s261
    %264 = dma.hbm_to_vmem [thread:$0]  %s252, 16, %s262, [#allocation3]
    %s265 = sadd.s32 %s249, 1
    %s266 = sld [smem:[#allocation5 + %s265]]
    %s267 = smul.addr %s266, 16
    %s268 = scalar_lea.hbm %s1, %s267
    %s269 = scalar_lea.vmem [#allocation2], 13
    // Predicated region
    $region78: #{tpu_custom_call.1} parent=1 // pred_check
      _
    $region79: #{tpu_custom_call.1} parent=1 // pred_check_branch
      %271 = sbr.rel target = $region81
    $region80: #{tpu_custom_call.1} parent=1 // pred_region
      %272 = sst [smem:[#allocation14]] [#allocation41]
      %273 = sst [smem:[#allocation15]] [#allocation40]
    $region81: #{tpu_custom_call.1} parent=1 // pred_fallthru
      _
    %275 = shalt.err (0)
    %s277 = sshll.u32 %s269, 4
    %s278 = int_to_ptr.vmem [resolvable:$true] %s277
    %280 = dma.hbm_to_vmem [thread:$0]  %s268, 16, %s278, [#allocation3]
    %s281 = sadd.s32 %s249, 2
    %s282 = sld [smem:[#allocation5 + %s281]]
    %s283 = smul.addr %s282, 16
    %s284 = scalar_lea.hbm %s1, %s283
    %s285 = scalar_lea.vmem [#allocation2], 14
    // Predicated region
    $region82: #{tpu_custom_call.1} parent=1 // pred_check
      _
    $region83: #{tpu_custom_call.1} parent=1 // pred_check_branch
      %287 = sbr.rel target = $region85
    $region84: #{tpu_custom_call.1} parent=1 // pred_region
      %288 = sst [smem:[#allocation14]] [#allocation43]
      %289 = sst [smem:[#allocation15]] [#allocation42]
    $region85: #{tpu_custom_call.1} parent=1 // pred_fallthru
      _
    %291 = shalt.err (0)
    %s293 = sshll.u32 %s285, 4
    %s294 = int_to_ptr.vmem [resolvable:$true] %s293
    %296 = dma.hbm_to_vmem [thread:$0]  %s284, 16, %s294, [#allocation3]
    %s297 = sadd.s32 %s249, 3
    %s298 = sld [smem:[#allocation5 + %s297]]
    %s299 = smul.addr %s298, 16
    %s300 = scalar_lea.hbm %s1, %s299
    %s301 = scalar_lea.vmem [#allocation2], 15
    // Predicated region
    $region86: #{tpu_custom_call.1} parent=1 // pred_check
      _
    $region87: #{tpu_custom_call.1} parent=1 // pred_check_branch
      %303 = sbr.rel target = $region89
    $region88: #{tpu_custom_call.1} parent=1 // pred_region
      %304 = sst [smem:[#allocation14]] [#allocation45]
      %305 = sst [smem:[#allocation15]] [#allocation44]
    $region89: #{tpu_custom_call.1} parent=1 // pred_fallthru
      _
    %307 = shalt.err (0)
    %s309 = sshll.u32 %s301, 4
    %s310 = int_to_ptr.vmem [resolvable:$true] %s309
    %312 = dma.hbm_to_vmem [thread:$0]  %s300, 16, %s310, [#allocation3]
    %s313 = sadd.s32 %s117, 4
    %s314 = smul.u32 %s313, 4
    %s315 = sld [smem:[#allocation5 + %s314]]
    %s316 = smul.addr %s315, 16
    %s317 = scalar_lea.hbm %s1, %s316
    %s318 = scalar_lea.vmem [#allocation2], 16
    // Predicated region
    $region90: #{tpu_custom_call.1} parent=1 // pred_check
      _
    $region91: #{tpu_custom_call.1} parent=1 // pred_check_branch
      %320 = sbr.rel target = $region93
    $region92: #{tpu_custom_call.1} parent=1 // pred_region
      %321 = sst [smem:[#allocation14]] [#allocation47]
      %322 = sst [smem:[#allocation15]] [#allocation46]
    $region93: #{tpu_custom_call.1} parent=1 // pred_fallthru
      _
    %324 = shalt.err (0)
    %s326 = sshll.u32 %s318, 4
    %s327 = int_to_ptr.vmem [resolvable:$true] %s326
    %329 = dma.hbm_to_vmem [thread:$0]  %s317, 16, %s327, [#allocation3]
    %s330 = sadd.s32 %s314, 1
    %s331 = sld [smem:[#allocation5 + %s330]]
    %s332 = smul.addr %s331, 16
    %s333 = scalar_lea.hbm %s1, %s332
    %s334 = scalar_lea.vmem [#allocation2], 17
    // Predicated region
    $region94: #{tpu_custom_call.1} parent=1 // pred_check
      _
    $region95: #{tpu_custom_call.1} parent=1 // pred_check_branch
      %336 = sbr.rel target = $region97
    $region96: #{tpu_custom_call.1} parent=1 // pred_region
      %337 = sst [smem:[#allocation14]] [#allocation49]
      %338 = sst [smem:[#allocation15]] [#allocation48]
    $region97: #{tpu_custom_call.1} parent=1 // pred_fallthru
      _
    %340 = shalt.err (0)
    %s342 = sshll.u32 %s334, 4
    %s343 = int_to_ptr.vmem [resolvable:$true] %s342
    %345 = dma.hbm_to_vmem [thread:$0]  %s333, 16, %s343, [#allocation3]
    %s346 = sadd.s32 %s314, 2
    %s347 = sld [smem:[#allocation5 + %s346]]
    %s348 = smul.addr %s347, 16
    %s349 = scalar_lea.hbm %s1, %s348
    %s350 = scalar_lea.vmem [#allocation2], 18
    // Predicated region
    $region98: #{tpu_custom_call.1} parent=1 // pred_check
      _
    $region99: #{tpu_custom_call.1} parent=1 // pred_check_branch
      %352 = sbr.rel target = $region101
    $region100: #{tpu_custom_call.1} parent=1 // pred_region
      %353 = sst [smem:[#allocation14]] [#allocation51]
      %354 = sst [smem:[#allocation15]] [#allocation50]
    $region101: #{tpu_custom_call.1} parent=1 // pred_fallthru
      _
    %356 = shalt.err (0)
    %s358 = sshll.u32 %s350, 4
    %s359 = int_to_ptr.vmem [resolvable:$true] %s358
    %361 = dma.hbm_to_vmem [thread:$0]  %s349, 16, %s359, [#allocation3]
    %s362 = sadd.s32 %s314, 3
    %s363 = sld [smem:[#allocation5 + %s362]]
    %s364 = smul.addr %s363, 16
    %s365 = scalar_lea.hbm %s1, %s364
    %s366 = scalar_lea.vmem [#allocation2], 19
    // Predicated region
    $region102: #{tpu_custom_call.1} parent=1 // pred_check
      _
    $region103: #{tpu_custom_call.1} parent=1 // pred_check_branch
      %368 = sbr.rel target = $region105
    $region104: #{tpu_custom_call.1} parent=1 // pred_region
      %369 = sst [smem:[#allocation14]] [#allocation53]
      %370 = sst [smem:[#allocation15]] [#allocation52]
    $region105: #{tpu_custom_call.1} parent=1 // pred_fallthru
      _
    %372 = shalt.err (0)
    %s374 = sshll.u32 %s366, 4
    %s375 = int_to_ptr.vmem [resolvable:$true] %s374
    %377 = dma.hbm_to_vmem [thread:$0]  %s365, 16, %s375, [#allocation3]
    %s378 = sadd.s32 %s117, 5
    %s379 = smul.u32 %s378, 4
    %s380 = sld [smem:[#allocation5 + %s379]]
    %s381 = smul.addr %s380, 16
    %s382 = scalar_lea.hbm %s1, %s381
    %s383 = scalar_lea.vmem [#allocation2], 20
    // Predicated region
    $region106: #{tpu_custom_call.1} parent=1 // pred_check
      _
    $region107: #{tpu_custom_call.1} parent=1 // pred_check_branch
      %385 = sbr.rel target = $region109
    $region108: #{tpu_custom_call.1} parent=1 // pred_region
      %386 = sst [smem:[#allocation14]] [#allocation55]
      %387 = sst [smem:[#allocation15]] [#allocation54]
    $region109: #{tpu_custom_call.1} parent=1 // pred_fallthru
      _
    %389 = shalt.err (0)
    %s391 = sshll.u32 %s383, 4
    %s392 = int_to_ptr.vmem [resolvable:$true] %s391
    %394 = dma.hbm_to_vmem [thread:$0]  %s382, 16, %s392, [#allocation3]
    %s395 = sadd.s32 %s379, 1
    %s396 = sld [smem:[#allocation5 + %s395]]
    %s397 = smul.addr %s396, 16
    %s398 = scalar_lea.hbm %s1, %s397
    %s399 = scalar_lea.vmem [#allocation2], 21
    // Predicated region
    $region110: #{tpu_custom_call.1} parent=1 // pred_check
      _
    $region111: #{tpu_custom_call.1} parent=1 // pred_check_branch
      %401 = sbr.rel target = $region113
    $region112: #{tpu_custom_call.1} parent=1 // pred_region
      %402 = sst [smem:[#allocation14]] [#allocation57]
      %403 = sst [smem:[#allocation15]] [#allocation56]
    $region113: #{tpu_custom_call.1} parent=1 // pred_fallthru
      _
    %405 = shalt.err (0)
    %s407 = sshll.u32 %s399, 4
    %s408 = int_to_ptr.vmem [resolvable:$true] %s407
    %410 = dma.hbm_to_vmem [thread:$0]  %s398, 16, %s408, [#allocation3]
    %s411 = sadd.s32 %s379, 2
    %s412 = sld [smem:[#allocation5 + %s411]]
    %s413 = smul.addr %s412, 16
    %s414 = scalar_lea.hbm %s1, %s413
    %s415 = scalar_lea.vmem [#allocation2], 22
    // Predicated region
    $region114: #{tpu_custom_call.1} parent=1 // pred_check
      _
    $region115: #{tpu_custom_call.1} parent=1 // pred_check_branch
      %417 = sbr.rel target = $region117
    $region116: #{tpu_custom_call.1} parent=1 // pred_region
      %418 = sst [smem:[#allocation14]] [#allocation59]
      %419 = sst [smem:[#allocation15]] [#allocation58]
    $region117: #{tpu_custom_call.1} parent=1 // pred_fallthru
      _
    %421 = shalt.err (0)
    %s423 = sshll.u32 %s415, 4
    %s424 = int_to_ptr.vmem [resolvable:$true] %s423
    %426 = dma.hbm_to_vmem [thread:$0]  %s414, 16, %s424, [#allocation3]
    %s427 = sadd.s32 %s379, 3
    %s428 = sld [smem:[#allocation5 + %s427]]
    %s429 = smul.addr %s428, 16
    %s430 = scalar_lea.hbm %s1, %s429
    %s431 = scalar_lea.vmem [#allocation2], 23
    // Predicated region
    $region118: #{tpu_custom_call.1} parent=1 // pred_check
      _
    $region119: #{tpu_custom_call.1} parent=1 // pred_check_branch
      %433 = sbr.rel target = $region121
    $region120: #{tpu_custom_call.1} parent=1 // pred_region
      %434 = sst [smem:[#allocation14]] [#allocation61]
      %435 = sst [smem:[#allocation15]] [#allocation60]
    $region121: #{tpu_custom_call.1} parent=1 // pred_fallthru
      _
    %437 = shalt.err (0)
    %s439 = sshll.u32 %s431, 4
    %s440 = int_to_ptr.vmem [resolvable:$true] %s439
    %442 = dma.hbm_to_vmem [thread:$0]  %s430, 16, %s440, [#allocation3]
    %s443 = sadd.s32 %s117, 6
    %s444 = smul.u32 %s443, 4
    %s445 = sld [smem:[#allocation5 + %s444]]
    %s446 = smul.addr %s445, 16
    %s447 = scalar_lea.hbm %s1, %s446
    %s448 = scalar_lea.vmem [#allocation2], 24
    // Predicated region
    $region122: #{tpu_custom_call.1} parent=1 // pred_check
      _
    $region123: #{tpu_custom_call.1} parent=1 // pred_check_branch
      %450 = sbr.rel target = $region125
    $region124: #{tpu_custom_call.1} parent=1 // pred_region
      %451 = sst [smem:[#allocation14]] [#allocation63]
      %452 = sst [smem:[#allocation15]] [#allocation62]
    $region125: #{tpu_custom_call.1} parent=1 // pred_fallthru
      _
    %454 = shalt.err (0)
    %s456 = sshll.u32 %s448, 4
    %s457 = int_to_ptr.vmem [resolvable:$true] %s456
    %459 = dma.hbm_to_vmem [thread:$0]  %s447, 16, %s457, [#allocation3]
    %s460 = sadd.s32 %s444, 1
    %s461 = sld [smem:[#allocation5 + %s460]]
    %s462 = smul.addr %s461, 16
    %s463 = scalar_lea.hbm %s1, %s462
    %s464 = scalar_lea.vmem [#allocation2], 25
    // Predicated region
    $region126: #{tpu_custom_call.1} parent=1 // pred_check
      _
    $region127: #{tpu_custom_call.1} parent=1 // pred_check_branch
      %466 = sbr.rel target = $region129
    $region128: #{tpu_custom_call.1} parent=1 // pred_region
      %467 = sst [smem:[#allocation14]] [#allocation65]
      %468 = sst [smem:[#allocation15]] [#allocation64]
    $region129: #{tpu_custom_call.1} parent=1 // pred_fallthru
      _
    %470 = shalt.err (0)
    %s472 = sshll.u32 %s464, 4
    %s473 = int_to_ptr.vmem [resolvable:$true] %s472
    %475 = dma.hbm_to_vmem [thread:$0]  %s463, 16, %s473, [#allocation3]
    %s476 = sadd.s32 %s444, 2
    %s477 = sld [smem:[#allocation5 + %s476]]
    %s478 = smul.addr %s477, 16
    %s479 = scalar_lea.hbm %s1, %s478
    %s480 = scalar_lea.vmem [#allocation2], 26
    // Predicated region
    $region130: #{tpu_custom_call.1} parent=1 // pred_check
      _
    $region131: #{tpu_custom_call.1} parent=1 // pred_check_branch
      %482 = sbr.rel target = $region133
    $region132: #{tpu_custom_call.1} parent=1 // pred_region
      %483 = sst [smem:[#allocation14]] [#allocation67]
      %484 = sst [smem:[#allocation15]] [#allocation66]
    $region133: #{tpu_custom_call.1} parent=1 // pred_fallthru
      _
    %486 = shalt.err (0)
    %s488 = sshll.u32 %s480, 4
    %s489 = int_to_ptr.vmem [resolvable:$true] %s488
    %491 = dma.hbm_to_vmem [thread:$0]  %s479, 16, %s489, [#allocation3]
    %s492 = sadd.s32 %s444, 3
    %s493 = sld [smem:[#allocation5 + %s492]]
    %s494 = smul.addr %s493, 16
    %s495 = scalar_lea.hbm %s1, %s494
    %s496 = scalar_lea.vmem [#allocation2], 27
    // Predicated region
    $region134: #{tpu_custom_call.1} parent=1 // pred_check
      _
    $region135: #{tpu_custom_call.1} parent=1 // pred_check_branch
      %498 = sbr.rel target = $region137
    $region136: #{tpu_custom_call.1} parent=1 // pred_region
      %499 = sst [smem:[#allocation14]] [#allocation69]
      %500 = sst [smem:[#allocation15]] [#allocation68]
    $region137: #{tpu_custom_call.1} parent=1 // pred_fallthru
      _
    %502 = shalt.err (0)
    %s504 = sshll.u32 %s496, 4
    %s505 = int_to_ptr.vmem [resolvable:$true] %s504
    %507 = dma.hbm_to_vmem [thread:$0]  %s495, 16, %s505, [#allocation3]
    %s508 = sadd.s32 %s117, 7
    %s509 = smul.u32 %s508, 4
    %s510 = sld [smem:[#allocation5 + %s509]]
    %s511 = smul.addr %s510, 16
    %s512 = scalar_lea.hbm %s1, %s511
    %s513 = scalar_lea.vmem [#allocation2], 28
    // Predicated region
    $region138: #{tpu_custom_call.1} parent=1 // pred_check
      _
    $region139: #{tpu_custom_call.1} parent=1 // pred_check_branch
      %515 = sbr.rel target = $region141
    $region140: #{tpu_custom_call.1} parent=1 // pred_region
      %516 = sst [smem:[#allocation14]] [#allocation71]
      %517 = sst [smem:[#allocation15]] [#allocation70]
    $region141: #{tpu_custom_call.1} parent=1 // pred_fallthru
      _
    %519 = shalt.err (0)
    %s521 = sshll.u32 %s513, 4
    %s522 = int_to_ptr.vmem [resolvable:$true] %s521
    %524 = dma.hbm_to_vmem [thread:$0]  %s512, 16, %s522, [#allocation3]
    %s525 = sadd.s32 %s509, 1
    %s526 = sld [smem:[#allocation5 + %s525]]
    %s527 = smul.addr %s526, 16
    %s528 = scalar_lea.hbm %s1, %s527
    %s529 = scalar_lea.vmem [#allocation2], 29
    // Predicated region
    $region142: #{tpu_custom_call.1} parent=1 // pred_check
      _
    $region143: #{tpu_custom_call.1} parent=1 // pred_check_branch
      %531 = sbr.rel target = $region145
    $region144: #{tpu_custom_call.1} parent=1 // pred_region
      %532 = sst [smem:[#allocation14]] [#allocation73]
      %533 = sst [smem:[#allocation15]] [#allocation72]
    $region145: #{tpu_custom_call.1} parent=1 // pred_fallthru
      _
    %535 = shalt.err (0)
    %s537 = sshll.u32 %s529, 4
    %s538 = int_to_ptr.vmem [resolvable:$true] %s537
    %540 = dma.hbm_to_vmem [thread:$0]  %s528, 16, %s538, [#allocation3]
    %s541 = sadd.s32 %s509, 2
    %s542 = sld [smem:[#allocation5 + %s541]]
    %s543 = smul.addr %s542, 16
    %s544 = scalar_lea.hbm %s1, %s543
    %s545 = scalar_lea.vmem [#allocation2], 30
    // Predicated region
    $region146: #{tpu_custom_call.1} parent=1 // pred_check
      _
    $region147: #{tpu_custom_call.1} parent=1 // pred_check_branch
      %547 = sbr.rel target = $region149
    $region148: #{tpu_custom_call.1} parent=1 // pred_region
      %548 = sst [smem:[#allocation14]] [#allocation75]
      %549 = sst [smem:[#allocation15]] [#allocation74]
    $region149: #{tpu_custom_call.1} parent=1 // pred_fallthru
      _
    %551 = shalt.err (0)
    %s553 = sshll.u32 %s545, 4
    %s554 = int_to_ptr.vmem [resolvable:$true] %s553
    %556 = dma.hbm_to_vmem [thread:$0]  %s544, 16, %s554, [#allocation3]
    %s557 = sadd.s32 %s509, 3
    %s558 = sld [smem:[#allocation5 + %s557]]
    %s559 = smul.addr %s558, 16
    %s560 = scalar_lea.hbm %s1, %s559
    %s561 = scalar_lea.vmem [#allocation2], 31
    // Predicated region
    $region150: #{tpu_custom_call.1} parent=1 // pred_check
      _
    $region151: #{tpu_custom_call.1} parent=1 // pred_check_branch
      %563 = sbr.rel target = $region153
    $region152: #{tpu_custom_call.1} parent=1 // pred_region
      %564 = sst [smem:[#allocation14]] [#allocation77]
      %565 = sst [smem:[#allocation15]] [#allocation76]
    $region153: #{tpu_custom_call.1} parent=1 // pred_fallthru
      _
    %567 = shalt.err (0)
    %s569 = sshll.u32 %s561, 4
    %s570 = int_to_ptr.vmem [resolvable:$true] %s569
    %572 = dma.hbm_to_vmem [thread:$0]  %s560, 16, %s570, [#allocation3]
    %574 = dma.done [#allocation3], 16
    %576 = dma.done [#allocation3], 16
    %578 = dma.done [#allocation3], 16
    %580 = dma.done [#allocation3], 16
    %582 = dma.done [#allocation3], 16
    %584 = dma.done [#allocation3], 16
    %586 = dma.done [#allocation3], 16
    %588 = dma.done [#allocation3], 16
    %590 = dma.done [#allocation3], 16
    %592 = dma.done [#allocation3], 16
    %594 = dma.done [#allocation3], 16
    %596 = dma.done [#allocation3], 16
    %598 = dma.done [#allocation3], 16
    %600 = dma.done [#allocation3], 16
    %602 = dma.done [#allocation3], 16
    %604 = dma.done [#allocation3], 16
    %606 = dma.done [#allocation3], 16
    %608 = dma.done [#allocation3], 16
    %610 = dma.done [#allocation3], 16
    %612 = dma.done [#allocation3], 16
    %614 = dma.done [#allocation3], 16
    %616 = dma.done [#allocation3], 16
    %618 = dma.done [#allocation3], 16
    %620 = dma.done [#allocation3], 16
    %622 = dma.done [#allocation3], 16
    %624 = dma.done [#allocation3], 16
    %626 = dma.done [#allocation3], 16
    %628 = dma.done [#allocation3], 16
    %630 = dma.done [#allocation3], 16
    %632 = dma.done [#allocation3], 16
    %634 = dma.done [#allocation3], 16
    %636 = dma.done [#allocation3], 16
    %v637 = vld [vmem:[#allocation2] sm:$0xf]
    %v638 = vld [vmem:[#allocation2 + $0x4] sm:$0xf]
    %v639 = vld [vmem:[#allocation2 + $0x8] sm:$0xf]
    %v640 = vld [vmem:[#allocation2 + $0xc] sm:$0xf]
    %v641 = vld [vmem:[#allocation2 + $0x10] sm:$0xf]
    %v642 = vld [vmem:[#allocation2 + $0x14] sm:$0xf]
    %v643 = vld [vmem:[#allocation2 + $0x18] sm:$0xf]
    %v644 = vld [vmem:[#allocation2 + $0x1c] sm:$0xf]
    %v645 = vld [vmem:[%s2] sm:$0xf]
    %v646 = vld [vmem:[%s2 + $0x4] sm:$0xf]
    %v647 = vld [vmem:[%s2 + $0x8] sm:$0xf]
    %v648 = vld [vmem:[%s2 + $0xc] sm:$0xf]
    %v649 = vld [vmem:[%s2 + $0x10] sm:$0xf]
    %v650 = vld [vmem:[%s2 + $0x14] sm:$0xf]
    %v651 = vld [vmem:[%s2 + $0x18] sm:$0xf]
    %v652 = vld [vmem:[%s2 + $0x1c] sm:$0xf]
    %654 = vset.pattern.permute.xlu0 0
    %655 = vperm.xlu0 %654, %v645
    %v656 = vpop.permute.xlu0 %655
    %659 = vset.pattern.permute.xlu0 0
    %660 = vperm.xlu0 %659, %v646
    %v661 = vpop.permute.xlu0 %660
    %664 = vset.pattern.permute.xlu0 0
    %665 = vperm.xlu0 %664, %v647
    %v666 = vpop.permute.xlu0 %665
    %669 = vset.pattern.permute.xlu0 0
    %670 = vperm.xlu0 %669, %v648
    %v671 = vpop.permute.xlu0 %670
    %674 = vset.pattern.permute.xlu0 0
    %675 = vperm.xlu0 %674, %v649
    %v676 = vpop.permute.xlu0 %675
    %679 = vset.pattern.permute.xlu0 0
    %680 = vperm.xlu0 %679, %v650
    %v681 = vpop.permute.xlu0 %680
    %684 = vset.pattern.permute.xlu0 0
    %685 = vperm.xlu0 %684, %v651
    %v686 = vpop.permute.xlu0 %685
    %689 = vset.pattern.permute.xlu0 0
    %690 = vperm.xlu0 %689, %v652
    %v691 = vpop.permute.xlu0 %690
    %v693 = vmul.f32 %v637, %v656
    %v694 = vmul.f32 %v638, %v661
    %v695 = vmul.f32 %v639, %v666
    %v696 = vmul.f32 %v640, %v671
    %v697 = vmul.f32 %v641, %v676
    %v698 = vmul.f32 %v642, %v681
    %v699 = vmul.f32 %v643, %v686
    %v700 = vmul.f32 %v644, %v691
    %vm701 = vcmask 1041408
    %v702 = vsel %vm701, %v693, 0.0
    %v703 = vrot.slane %v702, 4
    %v704 = vadd.f32 %v702, %v703
    %v705 = vrot.slane %v704, 2
    %v706 = vadd.f32 %v704, %v705
    %v707 = vrot.slane %v706, 1
    %v708 = vadd.f32 %v706, %v707
    %v709 = vsel %vm701, %v694, 0.0
    %v710 = vrot.slane %v709, 4
    %v711 = vadd.f32 %v709, %v710
    %v712 = vrot.slane %v711, 2
    %v713 = vadd.f32 %v711, %v712
    %v714 = vrot.slane %v713, 1
    %v715 = vadd.f32 %v713, %v714
    %v716 = vsel %vm701, %v695, 0.0
    %v717 = vrot.slane %v716, 4
    %v718 = vadd.f32 %v716, %v717
    %v719 = vrot.slane %v718, 2
    %v720 = vadd.f32 %v718, %v719
    %v721 = vrot.slane %v720, 1
    %v722 = vadd.f32 %v720, %v721
    %v723 = vsel %vm701, %v696, 0.0
    %v724 = vrot.slane %v723, 4
    %v725 = vadd.f32 %v723, %v724
    %v726 = vrot.slane %v725, 2
    %v727 = vadd.f32 %v725, %v726
    %v728 = vrot.slane %v727, 1
    %v729 = vadd.f32 %v727, %v728
    %v730 = vsel %vm701, %v697, 0.0
    %v731 = vrot.slane %v730, 4
    %v732 = vadd.f32 %v730, %v731
    %v733 = vrot.slane %v732, 2
    %v734 = vadd.f32 %v732, %v733
    %v735 = vrot.slane %v734, 1
    %v736 = vadd.f32 %v734, %v735
    %v737 = vsel %vm701, %v698, 0.0
    %v738 = vrot.slane %v737, 4
    %v739 = vadd.f32 %v737, %v738
    %v740 = vrot.slane %v739, 2
    %v741 = vadd.f32 %v739, %v740
    %v742 = vrot.slane %v741, 1
    %v743 = vadd.f32 %v741, %v742
    %v744 = vsel %vm701, %v699, 0.0
    %v745 = vrot.slane %v744, 4
    %v746 = vadd.f32 %v744, %v745
    %v747 = vrot.slane %v746, 2
    %v748 = vadd.f32 %v746, %v747
    %v749 = vrot.slane %v748, 1
    %v750 = vadd.f32 %v748, %v749
    %v751 = vsel %vm701, %v700, 0.0
    %v752 = vrot.slane %v751, 4
    %v753 = vadd.f32 %v751, %v752
    %v754 = vrot.slane %v753, 2
    %v755 = vadd.f32 %v753, %v754
    %v756 = vrot.slane %v755, 1
    %v757 = vadd.f32 %v755, %v756
    %v766 = vrot.slane %v693, 2
    %v767 = vrot.slane %v694, 2
    %v768 = vrot.slane %v695, 2
    %v769 = vrot.slane %v696, 2
    %v770 = vrot.slane %v697, 2
    %v771 = vrot.slane %v698, 2
    %v772 = vrot.slane %v699, 2
    %v773 = vrot.slane %v700, 2
    %v782 = vsel %vm701, %v766, 0.0
    %v783 = vrot.slane %v782, 4
    %v784 = vadd.f32 %v782, %v783
    %v785 = vrot.slane %v784, 2
    %v786 = vadd.f32 %v784, %v785
    %v787 = vrot.slane %v786, 1
    %v788 = vadd.f32 %v786, %v787
    %v789 = vsel %vm701, %v767, 0.0
    %v790 = vrot.slane %v789, 4
    %v791 = vadd.f32 %v789, %v790
    %v792 = vrot.slane %v791, 2
    %v793 = vadd.f32 %v791, %v792
    %v794 = vrot.slane %v793, 1
    %v795 = vadd.f32 %v793, %v794
    %v796 = vsel %vm701, %v768, 0.0
    %v797 = vrot.slane %v796, 4
    %v798 = vadd.f32 %v796, %v797
    %v799 = vrot.slane %v798, 2
    %v800 = vadd.f32 %v798, %v799
    %v801 = vrot.slane %v800, 1
    %v802 = vadd.f32 %v800, %v801
    %v803 = vsel %vm701, %v769, 0.0
    %v804 = vrot.slane %v803, 4
    %v805 = vadd.f32 %v803, %v804
    %v806 = vrot.slane %v805, 2
    %v807 = vadd.f32 %v805, %v806
    %v808 = vrot.slane %v807, 1
    %v809 = vadd.f32 %v807, %v808
    %v810 = vsel %vm701, %v770, 0.0
    %v811 = vrot.slane %v810, 4
    %v812 = vadd.f32 %v810, %v811
    %v813 = vrot.slane %v812, 2
    %v814 = vadd.f32 %v812, %v813
    %v815 = vrot.slane %v814, 1
    %v816 = vadd.f32 %v814, %v815
    %v817 = vsel %vm701, %v771, 0.0
    %v818 = vrot.slane %v817, 4
    %v819 = vadd.f32 %v817, %v818
    %v820 = vrot.slane %v819, 2
    %v821 = vadd.f32 %v819, %v820
    %v822 = vrot.slane %v821, 1
    %v823 = vadd.f32 %v821, %v822
    %v824 = vsel %vm701, %v772, 0.0
    %v825 = vrot.slane %v824, 4
    %v826 = vadd.f32 %v824, %v825
    %v827 = vrot.slane %v826, 2
    %v828 = vadd.f32 %v826, %v827
    %v829 = vrot.slane %v828, 1
    %v830 = vadd.f32 %v828, %v829
    %v831 = vsel %vm701, %v773, 0.0
    %v832 = vrot.slane %v831, 4
    %v833 = vadd.f32 %v831, %v832
    %v834 = vrot.slane %v833, 2
    %v835 = vadd.f32 %v833, %v834
    %v836 = vrot.slane %v835, 1
    %v837 = vadd.f32 %v835, %v836
    %v838 = vld [vmem:[#allocation6] sm:$0xff]
    %v839 = vld [vmem:[#allocation6 + $0x8] sm:$0xff]
    %v840 = vld [vmem:[#allocation6 + $0x10] sm:$0xff]
    %v841 = vld [vmem:[#allocation6 + $0x18] sm:$0xff]
    %v842 = vld [vmem:[#allocation6 + $0x20] sm:$0xff]
    %v843 = vld [vmem:[#allocation6 + $0x28] sm:$0xff]
    %v844 = vld [vmem:[#allocation6 + $0x30] sm:$0xff]
    %v845 = vld [vmem:[#allocation6 + $0x38] sm:$0xff]
    %v846 = vld [vmem:[#allocation6 + $0x40] sm:$0xff]
    %v847 = vld [vmem:[#allocation6 + $0x48] sm:$0xff]
    %v848 = vld [vmem:[#allocation6 + $0x50] sm:$0xff]
    %v849 = vld [vmem:[#allocation6 + $0x58] sm:$0xff]
    %v850 = vld [vmem:[#allocation6 + $0x60] sm:$0xff]
    %v851 = vld [vmem:[#allocation6 + $0x68] sm:$0xff]
    %v852 = vld [vmem:[#allocation6 + $0x70] sm:$0xff]
    %v853 = vld [vmem:[#allocation6 + $0x78] sm:$0xff]
    %v854 = vld [vmem:[#allocation9] sm:$0xff]
    %v855 = vld [vmem:[#allocation9 + $0x8] sm:$0xff]
    %v856 = vld [vmem:[#allocation9 + $0x10] sm:$0xff]
    %v857 = vld [vmem:[#allocation9 + $0x18] sm:$0xff]
    %v858 = vld [vmem:[#allocation9 + $0x20] sm:$0xff]
    %v859 = vld [vmem:[#allocation9 + $0x28] sm:$0xff]
    %v860 = vld [vmem:[#allocation9 + $0x30] sm:$0xff]
    %v861 = vld [vmem:[#allocation9 + $0x38] sm:$0xff]
    %v862 = vld [vmem:[#allocation9 + $0x40] sm:$0xff]
    %v863 = vld [vmem:[#allocation9 + $0x48] sm:$0xff]
    %v864 = vld [vmem:[#allocation9 + $0x50] sm:$0xff]
    %v865 = vld [vmem:[#allocation9 + $0x58] sm:$0xff]
    %v866 = vld [vmem:[#allocation9 + $0x60] sm:$0xff]
    %v867 = vld [vmem:[#allocation9 + $0x68] sm:$0xff]
    %v868 = vld [vmem:[#allocation9 + $0x70] sm:$0xff]
    %v869 = vld [vmem:[#allocation9 + $0x78] sm:$0xff]
    %vm878 = vcmask 1041409
    %v879 = vsel %vm878, %v795, %v788
    %vm880 = vcmask 1042434
    %v881 = vsel %vm880, %v802, %v879
    %vm882 = vcmask 1043459
    %v883 = vsel %vm882, %v809, %v881
    %vm884 = vcmask 1044484
    %v885 = vsel %vm884, %v816, %v883
    %vm886 = vcmask 1045509
    %v887 = vsel %vm886, %v823, %v885
    %vm888 = vcmask 1046534
    %v889 = vsel %vm888, %v830, %v887
    %vm890 = vcmask 1047559
    %v891 = vsel %vm890, %v837, %v889
    %893 = vmatprep.subr.mxu0 0.0
    %894 = vmatpush1.msra.mxu0 %v854
    %895 = vmatprep.subr.mxu0 0.0
    %896 = vmatpush1.msra.mxu0 %v855
    %897 = vmatprep.subr.mxu0 0.0
    %898 = vmatpush1.msra.mxu0 %v856
    %899 = vmatprep.subr.mxu0 0.0
    %900 = vmatpush1.msra.mxu0 %v857
    %901 = vmatprep.subr.mxu0 0.0
    %902 = vmatpush1.msra.mxu0 %v858
    %903 = vmatprep.subr.mxu0 0.0
    %904 = vmatpush1.msra.mxu0 %v859
    %905 = vmatprep.subr.mxu0 0.0
    %906 = vmatpush1.msra.mxu0 %v860
    %907 = vmatprep.subr.mxu0 0.0
    %908 = vmatpush1.msra.mxu0 %v861
    %909 = vmatprep.subr.mxu0 0.0
    %910 = vmatpush1.msra.mxu0 %v862
    %911 = vmatprep.subr.mxu0 0.0
    %912 = vmatpush1.msra.mxu0 %v863
    %913 = vmatprep.subr.mxu0 0.0
    %914 = vmatpush1.msra.mxu0 %v864
    %915 = vmatprep.subr.mxu0 0.0
    %916 = vmatpush1.msra.mxu0 %v865
    %917 = vmatprep.subr.mxu0 0.0
    %918 = vmatpush1.msra.mxu0 %v866
    %919 = vmatprep.subr.mxu0 0.0
    %920 = vmatpush1.msra.mxu0 %v867
    %921 = vmatprep.subr.mxu0 0.0
    %922 = vmatpush1.msra.mxu0 %v868
    %923 = vmatprep.subr.mxu0 0.0
    %924 = vmatpush1.msra.mxu0 %v869
    %925 = vmatprep.subr.mxu0 0.0
    %926 = vmatpush1.msra.mxu0 0.0
    %927 = vmatprep.subr.mxu0 0.0
    %928 = vmatpush1.msra.mxu0 0.0
    %929 = vmatprep.subr.mxu0 0.0
    %930 = vmatpush1.msra.mxu0 0.0
    %931 = vmatprep.subr.mxu0 0.0
    %932 = vmatpush1.msra.mxu0 0.0
    %933 = vmatprep.subr.mxu0 0.0
    %934 = vmatpush1.msra.mxu0 0.0
    %935 = vmatprep.subr.mxu0 0.0
    %936 = vmatpush1.msra.mxu0 0.0
    %937 = vmatprep.subr.mxu0 0.0
    %938 = vmatpush1.msra.mxu0 0.0
    %939 = vmatprep.subr.mxu0 0.0
    %940 = vmatpush1.msra.mxu0 0.0
    %941 = vmatprep.subr.mxu0 0.0
    %942 = vmatpush1.msra.mxu0 0.0
    %943 = vmatprep.subr.mxu0 0.0
    %944 = vmatpush1.msra.mxu0 0.0
    %945 = vmatprep.subr.mxu0 0.0
    %946 = vmatpush1.msra.mxu0 0.0
    %947 = vmatprep.subr.mxu0 0.0
    %948 = vmatpush1.msra.mxu0 0.0
    %949 = vmatprep.subr.mxu0 0.0
    %950 = vmatpush1.msra.mxu0 0.0
    %951 = vmatprep.subr.mxu0 0.0
    %952 = vmatpush1.msra.mxu0 0.0
    %953 = vmatprep.subr.mxu0 0.0
    %954 = vmatpush1.msra.mxu0 0.0
    %955 = vmatprep.subr.mxu0 0.0
    %956 = vmatpush1.msra.mxu0 0.0
    %957 = vmatprep.mubr.f32.mxu0 0.0
    %958 = vmatmul.mubr.f32.gmra.mrb[0].mxu0 %v891
    %v959 = vpop.f32.mrb[0].mxu0
    %v960 = vadd.f32 0.0, %v959
    %v961 = vpop.f32.mrb[0].mxu0
    %962 = vdwg.mxu0
    %v971 = vsel %vm878, %v715, %v708
    %v972 = vsel %vm880, %v722, %v971
    %v973 = vsel %vm882, %v729, %v972
    %v974 = vsel %vm884, %v736, %v973
    %v975 = vsel %vm886, %v743, %v974
    %v976 = vsel %vm888, %v750, %v975
    %v977 = vsel %vm890, %v757, %v976
    %979 = vmatprep.subr.mxu0 0.0
    %980 = vmatpush1.msra.mxu0 %v838
    %981 = vmatprep.subr.mxu0 0.0
    %982 = vmatpush1.msra.mxu0 %v839
    %983 = vmatprep.subr.mxu0 0.0
    %984 = vmatpush1.msra.mxu0 %v840
    %985 = vmatprep.subr.mxu0 0.0
    %986 = vmatpush1.msra.mxu0 %v841
    %987 = vmatprep.subr.mxu0 0.0
    %988 = vmatpush1.msra.mxu0 %v842
    %989 = vmatprep.subr.mxu0 0.0
    %990 = vmatpush1.msra.mxu0 %v843
    %991 = vmatprep.subr.mxu0 0.0
    %992 = vmatpush1.msra.mxu0 %v844
    %993 = vmatprep.subr.mxu0 0.0
    %994 = vmatpush1.msra.mxu0 %v845
    %995 = vmatprep.subr.mxu0 0.0
    %996 = vmatpush1.msra.mxu0 %v846
    %997 = vmatprep.subr.mxu0 0.0
    %998 = vmatpush1.msra.mxu0 %v847
    %999 = vmatprep.subr.mxu0 0.0
    %1000 = vmatpush1.msra.mxu0 %v848
    %1001 = vmatprep.subr.mxu0 0.0
    %1002 = vmatpush1.msra.mxu0 %v849
    %1003 = vmatprep.subr.mxu0 0.0
    %1004 = vmatpush1.msra.mxu0 %v850
    %1005 = vmatprep.subr.mxu0 0.0
    %1006 = vmatpush1.msra.mxu0 %v851
    %1007 = vmatprep.subr.mxu0 0.0
    %1008 = vmatpush1.msra.mxu0 %v852
    %1009 = vmatprep.subr.mxu0 0.0
    %1010 = vmatpush1.msra.mxu0 %v853
    %1011 = vmatprep.subr.mxu0 0.0
    %1012 = vmatpush1.msra.mxu0 0.0
    %1013 = vmatprep.subr.mxu0 0.0
    %1014 = vmatpush1.msra.mxu0 0.0
    %1015 = vmatprep.subr.mxu0 0.0
    %1016 = vmatpush1.msra.mxu0 0.0
    %1017 = vmatprep.subr.mxu0 0.0
    %1018 = vmatpush1.msra.mxu0 0.0
    %1019 = vmatprep.subr.mxu0 0.0
    %1020 = vmatpush1.msra.mxu0 0.0
    %1021 = vmatprep.subr.mxu0 0.0
    %1022 = vmatpush1.msra.mxu0 0.0
    %1023 = vmatprep.subr.mxu0 0.0
    %1024 = vmatpush1.msra.mxu0 0.0
    %1025 = vmatprep.subr.mxu0 0.0
    %1026 = vmatpush1.msra.mxu0 0.0
    %1027 = vmatprep.subr.mxu0 0.0
    %1028 = vmatpush1.msra.mxu0 0.0
    %1029 = vmatprep.subr.mxu0 0.0
    %1030 = vmatpush1.msra.mxu0 0.0
    %1031 = vmatprep.subr.mxu0 0.0
    %1032 = vmatpush1.msra.mxu0 0.0
    %1033 = vmatprep.subr.mxu0 0.0
    %1034 = vmatpush1.msra.mxu0 0.0
    %1035 = vmatprep.subr.mxu0 0.0
    %1036 = vmatpush1.msra.mxu0 0.0
    %1037 = vmatprep.subr.mxu0 0.0
    %1038 = vmatpush1.msra.mxu0 0.0
    %1039 = vmatprep.subr.mxu0 0.0
    %1040 = vmatpush1.msra.mxu0 0.0
    %1041 = vmatprep.subr.mxu0 0.0
    %1042 = vmatpush1.msra.mxu0 0.0
    %1043 = vmatprep.mubr.f32.mxu0 0.0
    %1044 = vmatmul.mubr.f32.gmra.mrb[0].mxu0 %v977
    %v1045 = vpop.f32.mrb[0].mxu0
    %v1046 = vadd.f32 %v960, %v1045
    %v1047 = vpop.f32.mrb[0].mxu0
    %1048 = vdwg.mxu0
    %v1049 = vld [vmem:[%s5] sm:$0x1]
    %v1051 = vlaneseq
    %v1052 = vshrl.u32 %v1051, 7
    %v1053 = vsub.s32 0, %v1052
    %v1054 = vrot.slane %v1049, %v1053
    %v1056 = vadd.f32 %v1046, %v1054
    %1057 = vst [vmem:[#allocation11] sm:$0xff] %v1056
    // Predicated region
    $region154: #{tpu_custom_call.1} parent=1 // pred_check
      _
    $region155: #{tpu_custom_call.1} parent=1 // pred_check_branch
      %1059 = sbr.rel (0) target = $region157
    $region156: #{tpu_custom_call.1} parent=1 // pred_region
      %s1061 = ssub.s32 128, 128
      %1062 = vsyncadd [#allocation8], %s1061
      %s1064 = sshll.u32 [#allocation11], 4
      %s1065 = int_to_ptr.vmem [resolvable:$true] %s1064
      %1067 = dma.vmem_to_hbm [thread:$0]  %s1065, 128, %s6, [#allocation8]
    $region157: #{tpu_custom_call.1} parent=1 // pred_fallthru
      _
    // Predicated region
    $region158: #{tpu_custom_call.1} parent=1 // pred_check
      _
    $region159: #{tpu_custom_call.1} parent=1 // pred_check_branch
      %1069 = sbr.rel (0) target = $region161
    $region160: #{tpu_custom_call.1} parent=1 // pred_region
      %1070 = dma.done [#allocation8], 128
    $region161: #{tpu_custom_call.1} parent=1 // pred_fallthru
      _
    %1071 = vsyncpa [#allocation7], 1
    %1072 = vsyncpa [#allocation10], 1
    %1073 = vsyncpa [#allocation8], 1
  %1074 = vsyncmov [#allocation3]
  %s1075 = vpop.sfrf %1074
  %p1076 = scmp.eq.s32.totalorder %s1075, 0
  %p1077 = pneg %p1076
  %1079 = shalt.err (%p1077)

</llo_original>
